<compile_context>
chip_gen: v6e
topology: v6e:2x2x1
jax: 0.10.0
libtpu: 0.0.40
codegen_flags: <defaults>
</compile_context>

<pallas_src>
import math
from functools import partial

import jax
import jax.numpy as jnp
from jax.experimental import pallas as pl
from jax.experimental.pallas import tpu as pltpu


# ---------------------------------------------------------------------------
# Helpers
# ---------------------------------------------------------------------------
def _round_up(x, m):
    return ((x + m - 1) // m) * m


def _vmem_capacity_bytes(default=64 * 1024 * 1024):
    """Physical VMEM of the local TPU (64 MiB fallback is v7x-safe)."""
    try:
        fn = getattr(pltpu, "get_tpu_info", None)
        if fn is not None:
            cap = getattr(fn(), "vmem_capacity_bytes", None)
            if cap:
                return int(cap)
    except Exception:
        pass
    return default


def _pick_seq_tile(S, B, E, F, budget_bytes):
    """Largest seq tile whose estimated VMEM footprint fits `budget_bytes`.

    Prefers >= 2 grid steps on the parallel (seq-tile) axis so both v7x
    TensorCores get work; falls back to a single tile when S is too small.
    """
    Bp = max(_round_up(B, 8), 8)        # sublane padding of the attended axis
    Lp = max(_round_up(B, 128), 128)    # lane padding of the score minor axis
    # Double-buffered per-layer weight set: bf16 matrices + f32 biases / LN.
    # TODO(synk): when this alone exceeds the budget (very large E/F on v7x),
    # chunk w1/w2 along F with an extra "arbitrary" grid axis / emit_pipeline.
    w_bytes = 2 * (2 * (4 * E * E + 2 * E * F) + 4 * (F + 10 * E))

    def vmem_need(ts):
        acts = 2 * 2 * ts * Bp * E * 4              # x-in + y-out blocks, 2-buffered
        T = ts * B
        inter = (T * 3 * E * 6                      # qkv (f32 + bf16 copy)
                 + T * F * 6                        # FFN activation (f32 + bf16)
                 + 5 * T * E * 4                    # x2 / attn / h1 / h2 f32 temps
                 + 3 * ts * Bp * Lp * 4)            # per-head score / prob tiles
        return w_bytes + acts + inter

    divisors = [c for c in (2048, 1024, 512, 256, 128, 64, 32, 16, 8, 4, 2, 1)
                if c <= S and S % c == 0]
    for ts in divisors:                             # prefer >= 2 parallel steps
        if S // ts >= 2 and vmem_need(ts) <= budget_bytes:
            return ts
    for ts in divisors:
        if vmem_need(ts) <= budget_bytes:
            return ts
    return divisors[-1]


def _layer_norm(x, w, b, eps=1e-5):
    mu = jnp.mean(x, axis=-1, keepdims=True)
    xc = x - mu
    var = jnp.mean(xc * xc, axis=-1, keepdims=True)
    return xc * jax.lax.rsqrt(var + eps) * w + b


# ---------------------------------------------------------------------------
# Encoder stack kernel: grid = (seq_tiles, num_layers)
# ---------------------------------------------------------------------------
def _encoder_stack_kernel(num_heads,
                          x_ref,
                          wqkv_ref, bqkv_ref, wo_ref, bo_ref,
                          ln1w_ref, ln1b_ref,
                          w1_ref, b1_ref, w2_ref, b2_ref,
                          ln2w_ref, ln2b_ref,
                          y_ref):
    """All encoder layers for one seq tile in a single pallas_call.

    Activation tile layout is (N, L, E): N = model seq positions (independent),
    L = original batch axis (the axis attention attends over, batch_first=False
    quirk of the reference).  The output block index is constant along the
    layer axis, so `y_ref` stays resident in VMEM across layers; per-layer
    weights are streamed (double-buffered) by the BlockSpec pipeline.
    """
    layer = pl.program_id(1)

    # First layer of this seq tile: seed the resident activation buffer.
    @pl.when(layer == 0)
    def _():
        y_ref[...] = x_ref[...]

    N, L, E = y_ref.shape
    H = num_heads
    D = E // H
    T = N * L

    x = y_ref[...]                      # previous layer output (f32), (N, L, E)
    x2 = x.reshape(T, E)

    # ---- fused QKV projection on the MXU (1/sqrt(D) pre-folded into Q) ----
    qkv = (jnp.dot(x2.astype(jnp.bfloat16), wqkv_ref[0],
                   preferred_element_type=jnp.float32) + bqkv_ref[0]
           ).astype(jnp.bfloat16)                       # (T, 3E) bf16

    # ---- multi-head attention over the L axis, heads statically unrolled ----
    # Per-head lane slices + leading-batch einsums: no cross-sublane q/k/v
    # transposes; head merge is a single lane-concatenate.
    head_outs = []
    for h in range(H):
        q = qkv[:, h * D:(h + 1) * D].reshape(N, L, D)
        k = qkv[:, E + h * D:E + (h + 1) * D].reshape(N, L, D)
        v = qkv[:, 2 * E + h * D:2 * E + (h + 1) * D].reshape(N, L, D)
        s = jnp.einsum('nld,nmd->nlm', q, k,
                       preferred_element_type=jnp.float32)      # (N, L, L) f32
        m = jnp.max(s, axis=-1, keepdims=True)
        e = jnp.exp(s - m)
        inv = pl.reciprocal(jnp.sum(e, axis=-1, keepdims=True), approx=True)
        p = (e * inv).astype(jnp.bfloat16)                       # softmax over keys
        o = jnp.einsum('nlm,nmd->nld', p, v,
                       preferred_element_type=jnp.float32)       # (N, L, D) f32
        head_outs.append(o)

    attn = jnp.concatenate(head_outs, axis=-1).reshape(T, E)     # (T, E) f32
    attn = (jnp.dot(attn.astype(jnp.bfloat16), wo_ref[0],
                    preferred_element_type=jnp.float32) + bo_ref[0])

    # ---- residual + LayerNorm 1 (post-norm) ----
    h1 = _layer_norm(x2 + attn, ln1w_ref[0], ln1b_ref[0])

    # ---- feed-forward (Linear -> ReLU -> Linear) ----
    f = (jnp.dot(h1.astype(jnp.bfloat16), w1_ref[0],
                 preferred_element_type=jnp.float32) + b1_ref[0])
    f = jnp.maximum(f, 0.0).astype(jnp.bfloat16)
    f = (jnp.dot(f, w2_ref[0],
                 preferred_element_type=jnp.float32) + b2_ref[0])

    # ---- residual + LayerNorm 2 ----
    h2 = _layer_norm(h1 + f, ln2w_ref[0], ln2b_ref[0])

    y_ref[...] = h2.reshape(N, L, E)


def encoder_stack(x, lw, num_heads, *, vmem_budget, vmem_limit):
    """x: (S, B, E) f32 activations (seq-major).  lw: dict of per-layer weights."""
    S, B, E = x.shape
    nl = lw["wqkv"].shape[0]
    F = lw["w1"].shape[2]
    ts = _pick_seq_tile(S, B, E, F, vmem_budget)

    def wspec(shape):
        # one layer's worth per grid step, streamed + double-buffered
        return pl.BlockSpec((1,) + shape, lambda s, l: (l, 0, 0))

    act_spec = pl.BlockSpec((ts, B, E), lambda s, l: (s, 0, 0))

    in_specs = [
        act_spec,                                # x: one seq tile, reused over layers
        wspec((E, 3 * E)), wspec((1, 3 * E)),    # fused QKV
        wspec((E, E)), wspec((1, E)),            # attn out proj
        wspec((1, E)), wspec((1, E)),            # LN1
        wspec((E, F)), wspec((1, F)),            # FFN 1
        wspec((F, E)), wspec((1, E)),            # FFN 2
        wspec((1, E)), wspec((1, E)),            # LN2
    ]

    return pl.pallas_call(
        partial(_encoder_stack_kernel, num_heads),
        out_shape=jax.ShapeDtypeStruct((S, B, E), jnp.float32),
        grid=(S // ts, nl),
        in_specs=in_specs,
        out_specs=act_spec,                      # constant along layer axis -> resident
        compiler_params=pltpu.CompilerParams(
            dimension_semantics=("parallel", "arbitrary"),
            vmem_limit_bytes=vmem_limit,
        ),
    )(x, lw["wqkv"], lw["bqkv"], lw["wo"], lw["bo"],
      lw["ln1w"], lw["ln1b"],
      lw["w1"], lw["b1"], lw["w2"], lw["b2"],
      lw["ln2w"], lw["ln2b"])


# ---------------------------------------------------------------------------
# Output (vocab) projection: tiled over rows and vocab columns
# ---------------------------------------------------------------------------
def _out_proj_kernel(x_ref, w_ref, b_ref, o_ref):
    o_ref[...] = (jnp.dot(x_ref[...].astype(jnp.bfloat16), w_ref[...],
                          preferred_element_type=jnp.float32) + b_ref[...])


def output_linear(x2, w_pad, b_pad, v_orig, *, vmem_limit,
                  tm_target=256, tn_target=512):
    """x2: (M, E) f32; w_pad: (E, Vp) bf16 (pre-padded); b_pad: (1, Vp) f32."""
    M, E = x2.shape
    Vp = w_pad.shape[1]

    # Lane-dense vocab tile: largest multiple of 128 <= tn_target dividing Vp.
    tn = 128
    for c in range((tn_target // 128) * 128, 127, -128):
        if Vp % c == 0:
            tn = c
            break
    tm = min(tm_target, _round_up(M, 8))
    Mp = _round_up(M, tm)
    if Mp != M:
        x2 = jnp.pad(x2, ((0, Mp - M), (0, 0)))

    n_row, n_col = Mp // tm, Vp // tn
    if tn >= tm:
        # vocab tiles outer, row tiles inner: (E, tn) weight slab stays resident
        # per outer step; the smaller activation operand is the one re-streamed.
        grid = (n_col, n_row)
        x_spec = pl.BlockSpec((tm, E), lambda j, i: (i, 0))
        w_spec = pl.BlockSpec((E, tn), lambda j, i: (0, j))
        b_spec = pl.BlockSpec((1, tn), lambda j, i: (0, j))
        o_spec = pl.BlockSpec((tm, tn), lambda j, i: (i, j))
    else:
        grid = (n_row, n_col)
        x_spec = pl.BlockSpec((tm, E), lambda i, j: (i, 0))
        w_spec = pl.BlockSpec((E, tn), lambda i, j: (0, j))
        b_spec = pl.BlockSpec((1, tn), lambda i, j: (0, j))
        o_spec = pl.BlockSpec((tm, tn), lambda i, j: (i, j))

    out = pl.pallas_call(
        _out_proj_kernel,
        out_shape=jax.ShapeDtypeStruct((Mp, Vp), jnp.float32),
        grid=grid,
        in_specs=[x_spec, w_spec, b_spec],
        out_specs=o_spec,
        compiler_params=pltpu.CompilerParams(
            dimension_semantics=("parallel", "parallel"),
            vmem_limit_bytes=vmem_limit,
        ),
    )(x2, w_pad, b_pad)
    return out[:M, :v_orig]


# ---------------------------------------------------------------------------
# One-time parameter preparation (scale folding, bf16 casts, vocab padding)
# ---------------------------------------------------------------------------
def prepare_params(params, num_heads):
    E = params["tok_emb"].shape[1]
    D = E // num_heads
    scale = 1.0 / math.sqrt(D)

    lw = params["layers"]
    # Fold 1/sqrt(D) into the Q columns of the fused QKV projection (and bias).
    qscale = jnp.concatenate([jnp.full((E,), scale, jnp.float32),
                              jnp.ones((2 * E,), jnp.float32)])
    layers = {
        "wqkv": (lw["wqkv"] * qscale[None, None, :]).astype(jnp.bfloat16),
        "bqkv": lw["bqkv"] * qscale[None, None, :],
        "wo":   lw["wo"].astype(jnp.bfloat16), "bo": lw["bo"],
        "ln1w": lw["ln1w"], "ln1b": lw["ln1b"],
        "w1":   lw["w1"].astype(jnp.bfloat16), "b1": lw["b1"],
        "w2":   lw["w2"].astype(jnp.bfloat16), "b2": lw["b2"],
        "ln2w": lw["ln2w"], "ln2b": lw["ln2b"],
    }

    V = params["out_w"].shape[1]
    Vp = _round_up(V, 128)
    out_w = jnp.pad(params["out_w"], ((0, 0), (0, Vp - V))).astype(jnp.bfloat16)
    out_b = jnp.pad(params["out_b"], ((0, 0), (0, Vp - V)))

    return {"tok_emb": params["tok_emb"], "pos_enc": params["pos_enc"],
            "layers": layers, "out_w": out_w, "out_b": out_b, "vocab": V}


# ---------------------------------------------------------------------------
# Full forward pass
# ---------------------------------------------------------------------------
def transformer_forward(tokens, prepared, num_heads):
    B, S = tokens.shape
    cap = _vmem_capacity_bytes()
    vmem_limit = int(cap * 0.85)
    vmem_budget = int(cap * 0.70)

    # Glue (host-side JAX): embedding gather + positional-encoding add, built
    # directly in seq-major (S, B, E) layout (attention runs over the batch
    # axis, matching the reference's batch_first=False quirk).
    # TODO(synk): the gather could be done in-kernel with scalar-prefetch +
    # pl.Element row indexing; kept in plain JAX here.
    emb = prepared["tok_emb"][tokens.T]                          # (S, B, E)
    h = (emb + prepared["pos_enc"][0, :S, :][:, None, :]).astype(jnp.float32)

    h = encoder_stack(h, prepared["layers"], num_heads,
                      vmem_budget=vmem_budget, vmem_limit=vmem_limit)  # (S, B, E)

    E = h.shape[-1]
    h = h.transpose(1, 0, 2).reshape(B * S, E)                   # back to token-major
    logits = output_linear(h, prepared["out_w"], prepared["out_b"],
                           prepared["vocab"], vmem_limit=vmem_limit)
    return logits.reshape(B, S, -1)


# ---------------------------------------------------------------------------
# Deterministic parameter initialization (synthetic; matches module shapes)
# ---------------------------------------------------------------------------
def init_params(key, vocab, E, num_layers, F, max_len):
    keys = jax.random.split(key, 5)

    def nrm(k, shape, scale=0.02):
        return (scale * jax.random.normal(k, shape)).astype(jnp.float32)

    lk = jax.random.split(keys[4], 6)
    layers = {
        "wqkv": nrm(lk[0], (num_layers, E, 3 * E)),   # fused [Wq|Wk|Wv], (in, out)
        "bqkv": nrm(lk[1], (num_layers, 1, 3 * E)),
        "wo":   nrm(lk[2], (num_layers, E, E)),
        "bo":   nrm(lk[3], (num_layers, 1, E)),
        "ln1w": jnp.ones((num_layers, 1, E), jnp.float32),
        "ln1b": jnp.zeros((num_layers, 1, E), jnp.float32),
        "w1":   nrm(lk[4], (num_layers, E, F)),
        "b1":   jnp.zeros((num_layers, 1, F), jnp.float32),
        "w2":   nrm(lk[5], (num_layers, F, E)),
        "b2":   jnp.zeros((num_layers, 1, E), jnp.float32),
        "ln2w": jnp.ones((num_layers, 1, E), jnp.float32),
        "ln2b": jnp.zeros((num_layers, 1, E), jnp.float32),
    }
    return {
        "tok_emb": nrm(keys[0], (vocab, E), 1.0),     # nn.Embedding ~ N(0, 1)
        # PyTorch inits positional_encoding to zeros; randomized for a non-trivial test.
        "pos_enc": nrm(keys[1], (1, max_len, E)),
        "out_w": nrm(keys[2], (E, vocab)),            # (in, out) layout
        "out_b": nrm(keys[3], (1, vocab)),
        "layers": layers,
    }


# ---------------------------------------------------------------------------
if __name__ == "__main__":
    vocab_size, embed_size, num_heads = 64, 32, 4
    num_layers, ff_hidden_size, max_seq_len = 2, 64, 16
    batch, seq = 2, 8

    key = jax.random.PRNGKey(0)
    k_params, k_tokens = jax.random.split(key)

    params = init_params(k_params, vocab_size, embed_size, num_layers,
                         ff_hidden_size, max_seq_len)
    prepared = prepare_params(params, num_heads)
    tokens = jax.random.randint(k_tokens, (batch, seq), 0, vocab_size,
                                dtype=jnp.int32)

    logits = transformer_forward(tokens, prepared, num_heads)
    jax.block_until_ready(logits)

    assert logits.shape == (batch, seq, vocab_size), logits.shape
    assert bool(jnp.all(jnp.isfinite(logits)))
    print("KERNEL_OK")
</pallas_src>

<mosaic_0001>
module attributes {stable_mosaic.version = 11 : i64} {
  func.func @_encoder_stack_kernel(%arg0: i32, %arg1: i32, %arg2: memref<4x2x32xf32, #tpu.memory_space<vmem>>, %arg3: memref<1x32x96xbf16, #tpu.memory_space<vmem>>, %arg4: memref<1x1x96xf32, #tpu.memory_space<vmem>>, %arg5: memref<1x32x32xbf16, #tpu.memory_space<vmem>>, %arg6: memref<1x1x32xf32, #tpu.memory_space<vmem>>, %arg7: memref<1x1x32xf32, #tpu.memory_space<vmem>>, %arg8: memref<1x1x32xf32, #tpu.memory_space<vmem>>, %arg9: memref<1x32x64xbf16, #tpu.memory_space<vmem>>, %arg10: memref<1x1x64xf32, #tpu.memory_space<vmem>>, %arg11: memref<1x64x32xbf16, #tpu.memory_space<vmem>>, %arg12: memref<1x1x32xf32, #tpu.memory_space<vmem>>, %arg13: memref<1x1x32xf32, #tpu.memory_space<vmem>>, %arg14: memref<1x1x32xf32, #tpu.memory_space<vmem>>, %arg15: memref<4x2x32xf32, #tpu.memory_space<vmem>>) attributes {dimension_semantics = [#tpu.dimension_semantics<parallel>, #tpu.dimension_semantics<arbitrary>], iteration_bounds = array<i64: 2, 2>, scalar_prefetch = 0 : i64, scratch_operands = 0 : i64, tpu.core_type = #tpu.core_type<tc>, window_params = [{transform_indices = @transform_0, window_bounds = array<i64: 4, 2, 32>}, {transform_indices = @transform_1, window_bounds = array<i64: 1, 32, 96>}, {transform_indices = @transform_2, window_bounds = array<i64: 1, 1, 96>}, {transform_indices = @transform_3, window_bounds = array<i64: 1, 32, 32>}, {transform_indices = @transform_4, window_bounds = array<i64: 1, 1, 32>}, {transform_indices = @transform_5, window_bounds = array<i64: 1, 1, 32>}, {transform_indices = @transform_6, window_bounds = array<i64: 1, 1, 32>}, {transform_indices = @transform_7, window_bounds = array<i64: 1, 32, 64>}, {transform_indices = @transform_8, window_bounds = array<i64: 1, 1, 64>}, {transform_indices = @transform_9, window_bounds = array<i64: 1, 64, 32>}, {transform_indices = @transform_10, window_bounds = array<i64: 1, 1, 32>}, {transform_indices = @transform_11, window_bounds = array<i64: 1, 1, 32>}, {transform_indices = @transform_12, window_bounds = array<i64: 1, 1, 32>}, {transform_indices = @transform_13, window_bounds = array<i64: 4, 2, 32>}]} {
    %c0_i32 = arith.constant 0 : i32
    %0 = arith.cmpi eq, %arg1, %c0_i32 : i32
    %1 = arith.extui %0 : i1 to i32
    %c0_i32_0 = arith.constant 0 : i32
    %2 = arith.cmpi ne, %1, %c0_i32_0 : i32
    scf.if %2 {
      %c0_72 = arith.constant 0 : index
      %c0_73 = arith.constant 0 : index
      %c0_74 = arith.constant 0 : index
      %170 = vector.load %arg2[%c0_72, %c0_73, %c0_74] : memref<4x2x32xf32, #tpu.memory_space<vmem>>, vector<4x2x32xf32>
      %c0_75 = arith.constant 0 : index
      %c0_76 = arith.constant 0 : index
      %c0_77 = arith.constant 0 : index
      %171 = vector.load %arg15[%c0_75, %c0_76, %c0_77] : memref<4x2x32xf32, #tpu.memory_space<vmem>>, vector<4x2x32xf32>
      tpu.vector_store %arg15[%c0_75, %c0_76, %c0_77], %170 {strides = array<i32>} : memref<4x2x32xf32, #tpu.memory_space<vmem>>, vector<4x2x32xf32>,
    } else {
    }
    %c0 = arith.constant 0 : index
    %c0_1 = arith.constant 0 : index
    %c0_2 = arith.constant 0 : index
    %3 = vector.load %arg15[%c0, %c0_1, %c0_2] : memref<4x2x32xf32, #tpu.memory_space<vmem>>, vector<4x2x32xf32>
    %4 = vector.shape_cast %3 : vector<4x2x32xf32> to vector<8x32xf32>
    %5 = arith.truncf %4 : vector<8x32xf32> to vector<8x32xbf16>
    %c0_3 = arith.constant 0 : index
    %c0_4 = arith.constant 0 : index
    %c0_5 = arith.constant 0 : index
    %6 = vector.load %arg3[%c0_3, %c0_4, %c0_5] : memref<1x32x96xbf16, #tpu.memory_space<vmem>>, vector<1x32x96xbf16>
    %7 = vector.shape_cast %6 : vector<1x32x96xbf16> to vector<32x96xbf16>
    %cst = arith.constant dense<0.000000e+00> : vector<8x96xf32>
    %8 = tpu.matmul %5, %7, %cst {dimension_numbers = #tpu.dot_dimension_numbers<[1], [0], [0], [1], [0, 0, 1, 1], [], []>} : vector<8x32xbf16>, vector<32x96xbf16>, vector<8x96xf32> -> vector<8x96xf32>
    %c0_6 = arith.constant 0 : index
    %c0_7 = arith.constant 0 : index
    %c0_8 = arith.constant 0 : index
    %9 = vector.load %arg4[%c0_6, %c0_7, %c0_8] : memref<1x1x96xf32, #tpu.memory_space<vmem>>, vector<1x1x96xf32>
    %10 = vector.shape_cast %9 : vector<1x1x96xf32> to vector<1x96xf32>
    %11 = vector.broadcast %10 : vector<1x96xf32> to vector<8x96xf32>
    %12 = arith.addf %8, %11 : vector<8x96xf32>
    %13 = arith.truncf %12 : vector<8x96xf32> to vector<8x96xbf16>
    %14 = vector.extract_strided_slice %13 {offsets = [0, 0], sizes = [8, 8], strides = [1, 1]} : vector<8x96xbf16> to vector<8x8xbf16>
    %15 = vector.shape_cast %14 : vector<8x8xbf16> to vector<4x2x8xbf16>
    %16 = vector.extract_strided_slice %13 {offsets = [0, 32], sizes = [8, 8], strides = [1, 1]} : vector<8x96xbf16> to vector<8x8xbf16>
    %17 = vector.shape_cast %16 : vector<8x8xbf16> to vector<4x2x8xbf16>
    %18 = vector.extract_strided_slice %13 {offsets = [0, 64], sizes = [8, 8], strides = [1, 1]} : vector<8x96xbf16> to vector<8x8xbf16>
    %19 = vector.shape_cast %18 : vector<8x8xbf16> to vector<4x2x8xbf16>
    "tpu.trace_start"() <{level = 10 : i32, message = "nld,nmd->nlm"}> : () -> ()
    %cst_9 = arith.constant dense<0.000000e+00> : vector<4x2x2xf32>
    %20 = tpu.matmul %15, %17, %cst_9 {dimension_numbers = #tpu.dot_dimension_numbers<[2], [2], [1], [1], [0, 0, 0, 1, 1, 1], [0], [0]>} : vector<4x2x8xbf16>, vector<4x2x8xbf16>, vector<4x2x2xf32> -> vector<4x2x2xf32>
    "tpu.trace_stop"() : () -> ()
    %cst_10 = arith.constant dense<0xFF800000> : vector<4x2xf32>
    %21 = vector.multi_reduction <maximumf>, %20, %cst_10 [2] : vector<4x2x2xf32> to vector<4x2xf32>
    %22 = vector.shape_cast %21 : vector<4x2xf32> to vector<4x2x1xf32>
    %23 = vector.broadcast %22 : vector<4x2x1xf32> to vector<4x2x2xf32>
    %24 = arith.subf %20, %23 : vector<4x2x2xf32>
    %25 = math.exp %24 : vector<4x2x2xf32>
    %cst_11 = arith.constant dense<0.000000e+00> : vector<4x2xf32>
    %26 = vector.multi_reduction <add>, %25, %cst_11 [2] : vector<4x2x2xf32> to vector<4x2xf32>
    %27 = vector.shape_cast %26 : vector<4x2xf32> to vector<4x2x1xf32>
    %28 = tpu.reciprocal %27 {approx = true} : vector<4x2x1xf32> -> vector<4x2x1xf32>
    %29 = vector.broadcast %28 : vector<4x2x1xf32> to vector<4x2x2xf32>
    %30 = arith.mulf %25, %29 : vector<4x2x2xf32>
    %31 = arith.truncf %30 : vector<4x2x2xf32> to vector<4x2x2xbf16>
    "tpu.trace_start"() <{level = 10 : i32, message = "nlm,nmd->nld"}> : () -> ()
    %cst_12 = arith.constant dense<0.000000e+00> : vector<4x2x8xf32>
    %32 = tpu.matmul %31, %19, %cst_12 {dimension_numbers = #tpu.dot_dimension_numbers<[2], [1], [1], [2], [0, 0, 0, 1, 1, 2], [0], [0]>} : vector<4x2x2xbf16>, vector<4x2x8xbf16>, vector<4x2x8xf32> -> vector<4x2x8xf32>
    "tpu.trace_stop"() : () -> ()
    %33 = vector.extract_strided_slice %13 {offsets = [0, 8], sizes = [8, 8], strides = [1, 1]} : vector<8x96xbf16> to vector<8x8xbf16>
    %34 = vector.shape_cast %33 : vector<8x8xbf16> to vector<4x2x8xbf16>
    %35 = vector.extract_strided_slice %13 {offsets = [0, 40], sizes = [8, 8], strides = [1, 1]} : vector<8x96xbf16> to vector<8x8xbf16>
    %36 = vector.shape_cast %35 : vector<8x8xbf16> to vector<4x2x8xbf16>
    %37 = vector.extract_strided_slice %13 {offsets = [0, 72], sizes = [8, 8], strides = [1, 1]} : vector<8x96xbf16> to vector<8x8xbf16>
    %38 = vector.shape_cast %37 : vector<8x8xbf16> to vector<4x2x8xbf16>
    "tpu.trace_start"() <{level = 10 : i32, message = "nld,nmd->nlm"}> : () -> ()
    %cst_13 = arith.constant dense<0.000000e+00> : vector<4x2x2xf32>
    %39 = tpu.matmul %34, %36, %cst_13 {dimension_numbers = #tpu.dot_dimension_numbers<[2], [2], [1], [1], [0, 0, 0, 1, 1, 1], [0], [0]>} : vector<4x2x8xbf16>, vector<4x2x8xbf16>, vector<4x2x2xf32> -> vector<4x2x2xf32>
    "tpu.trace_stop"() : () -> ()
    %cst_14 = arith.constant dense<0xFF800000> : vector<4x2xf32>
    %40 = vector.multi_reduction <maximumf>, %39, %cst_14 [2] : vector<4x2x2xf32> to vector<4x2xf32>
    %41 = vector.shape_cast %40 : vector<4x2xf32> to vector<4x2x1xf32>
    %42 = vector.broadcast %41 : vector<4x2x1xf32> to vector<4x2x2xf32>
    %43 = arith.subf %39, %42 : vector<4x2x2xf32>
    %44 = math.exp %43 : vector<4x2x2xf32>
    %cst_15 = arith.constant dense<0.000000e+00> : vector<4x2xf32>
    %45 = vector.multi_reduction <add>, %44, %cst_15 [2] : vector<4x2x2xf32> to vector<4x2xf32>
    %46 = vector.shape_cast %45 : vector<4x2xf32> to vector<4x2x1xf32>
    %47 = tpu.reciprocal %46 {approx = true} : vector<4x2x1xf32> -> vector<4x2x1xf32>
    %48 = vector.broadcast %47 : vector<4x2x1xf32> to vector<4x2x2xf32>
    %49 = arith.mulf %44, %48 : vector<4x2x2xf32>
    %50 = arith.truncf %49 : vector<4x2x2xf32> to vector<4x2x2xbf16>
    "tpu.trace_start"() <{level = 10 : i32, message = "nlm,nmd->nld"}> : () -> ()
    %cst_16 = arith.constant dense<0.000000e+00> : vector<4x2x8xf32>
    %51 = tpu.matmul %50, %38, %cst_16 {dimension_numbers = #tpu.dot_dimension_numbers<[2], [1], [1], [2], [0, 0, 0, 1, 1, 2], [0], [0]>} : vector<4x2x2xbf16>, vector<4x2x8xbf16>, vector<4x2x8xf32> -> vector<4x2x8xf32>
    "tpu.trace_stop"() : () -> ()
    %52 = vector.extract_strided_slice %13 {offsets = [0, 16], sizes = [8, 8], strides = [1, 1]} : vector<8x96xbf16> to vector<8x8xbf16>
    %53 = vector.shape_cast %52 : vector<8x8xbf16> to vector<4x2x8xbf16>
    %54 = vector.extract_strided_slice %13 {offsets = [0, 48], sizes = [8, 8], strides = [1, 1]} : vector<8x96xbf16> to vector<8x8xbf16>
    %55 = vector.shape_cast %54 : vector<8x8xbf16> to vector<4x2x8xbf16>
    %56 = vector.extract_strided_slice %13 {offsets = [0, 80], sizes = [8, 8], strides = [1, 1]} : vector<8x96xbf16> to vector<8x8xbf16>
    %57 = vector.shape_cast %56 : vector<8x8xbf16> to vector<4x2x8xbf16>
    "tpu.trace_start"() <{level = 10 : i32, message = "nld,nmd->nlm"}> : () -> ()
    %cst_17 = arith.constant dense<0.000000e+00> : vector<4x2x2xf32>
    %58 = tpu.matmul %53, %55, %cst_17 {dimension_numbers = #tpu.dot_dimension_numbers<[2], [2], [1], [1], [0, 0, 0, 1, 1, 1], [0], [0]>} : vector<4x2x8xbf16>, vector<4x2x8xbf16>, vector<4x2x2xf32> -> vector<4x2x2xf32>
    "tpu.trace_stop"() : () -> ()
    %cst_18 = arith.constant dense<0xFF800000> : vector<4x2xf32>
    %59 = vector.multi_reduction <maximumf>, %58, %cst_18 [2] : vector<4x2x2xf32> to vector<4x2xf32>
    %60 = vector.shape_cast %59 : vector<4x2xf32> to vector<4x2x1xf32>
    %61 = vector.broadcast %60 : vector<4x2x1xf32> to vector<4x2x2xf32>
    %62 = arith.subf %58, %61 : vector<4x2x2xf32>
    %63 = math.exp %62 : vector<4x2x2xf32>
    %cst_19 = arith.constant dense<0.000000e+00> : vector<4x2xf32>
    %64 = vector.multi_reduction <add>, %63, %cst_19 [2] : vector<4x2x2xf32> to vector<4x2xf32>
    %65 = vector.shape_cast %64 : vector<4x2xf32> to vector<4x2x1xf32>
    %66 = tpu.reciprocal %65 {approx = true} : vector<4x2x1xf32> -> vector<4x2x1xf32>
    %67 = vector.broadcast %66 : vector<4x2x1xf32> to vector<4x2x2xf32>
    %68 = arith.mulf %63, %67 : vector<4x2x2xf32>
    %69 = arith.truncf %68 : vector<4x2x2xf32> to vector<4x2x2xbf16>
    "tpu.trace_start"() <{level = 10 : i32, message = "nlm,nmd->nld"}> : () -> ()
    %cst_20 = arith.constant dense<0.000000e+00> : vector<4x2x8xf32>
    %70 = tpu.matmul %69, %57, %cst_20 {dimension_numbers = #tpu.dot_dimension_numbers<[2], [1], [1], [2], [0, 0, 0, 1, 1, 2], [0], [0]>} : vector<4x2x2xbf16>, vector<4x2x8xbf16>, vector<4x2x8xf32> -> vector<4x2x8xf32>
    "tpu.trace_stop"() : () -> ()
    %71 = vector.extract_strided_slice %13 {offsets = [0, 24], sizes = [8, 8], strides = [1, 1]} : vector<8x96xbf16> to vector<8x8xbf16>
    %72 = vector.shape_cast %71 : vector<8x8xbf16> to vector<4x2x8xbf16>
    %73 = vector.extract_strided_slice %13 {offsets = [0, 56], sizes = [8, 8], strides = [1, 1]} : vector<8x96xbf16> to vector<8x8xbf16>
    %74 = vector.shape_cast %73 : vector<8x8xbf16> to vector<4x2x8xbf16>
    %75 = vector.extract_strided_slice %13 {offsets = [0, 88], sizes = [8, 8], strides = [1, 1]} : vector<8x96xbf16> to vector<8x8xbf16>
    %76 = vector.shape_cast %75 : vector<8x8xbf16> to vector<4x2x8xbf16>
    "tpu.trace_start"() <{level = 10 : i32, message = "nld,nmd->nlm"}> : () -> ()
    %cst_21 = arith.constant dense<0.000000e+00> : vector<4x2x2xf32>
    %77 = tpu.matmul %72, %74, %cst_21 {dimension_numbers = #tpu.dot_dimension_numbers<[2], [2], [1], [1], [0, 0, 0, 1, 1, 1], [0], [0]>} : vector<4x2x8xbf16>, vector<4x2x8xbf16>, vector<4x2x2xf32> -> vector<4x2x2xf32>
    "tpu.trace_stop"() : () -> ()
    %cst_22 = arith.constant dense<0xFF800000> : vector<4x2xf32>
    %78 = vector.multi_reduction <maximumf>, %77, %cst_22 [2] : vector<4x2x2xf32> to vector<4x2xf32>
    %79 = vector.shape_cast %78 : vector<4x2xf32> to vector<4x2x1xf32>
    %80 = vector.broadcast %79 : vector<4x2x1xf32> to vector<4x2x2xf32>
    %81 = arith.subf %77, %80 : vector<4x2x2xf32>
    %82 = math.exp %81 : vector<4x2x2xf32>
    %cst_23 = arith.constant dense<0.000000e+00> : vector<4x2xf32>
    %83 = vector.multi_reduction <add>, %82, %cst_23 [2] : vector<4x2x2xf32> to vector<4x2xf32>
    %84 = vector.shape_cast %83 : vector<4x2xf32> to vector<4x2x1xf32>
    %85 = tpu.reciprocal %84 {approx = true} : vector<4x2x1xf32> -> vector<4x2x1xf32>
    %86 = vector.broadcast %85 : vector<4x2x1xf32> to vector<4x2x2xf32>
    %87 = arith.mulf %82, %86 : vector<4x2x2xf32>
    %88 = arith.truncf %87 : vector<4x2x2xf32> to vector<4x2x2xbf16>
    "tpu.trace_start"() <{level = 10 : i32, message = "nlm,nmd->nld"}> : () -> ()
    %cst_24 = arith.constant dense<0.000000e+00> : vector<4x2x8xf32>
    %89 = tpu.matmul %88, %76, %cst_24 {dimension_numbers = #tpu.dot_dimension_numbers<[2], [1], [1], [2], [0, 0, 0, 1, 1, 2], [0], [0]>} : vector<4x2x2xbf16>, vector<4x2x8xbf16>, vector<4x2x8xf32> -> vector<4x2x8xf32>
    "tpu.trace_stop"() : () -> ()
    %90 = tpu.concatenate %32, %51, %70, %89 in 2 : vector<4x2x8xf32>, vector<4x2x8xf32>, vector<4x2x8xf32>, vector<4x2x8xf32> -> vector<4x2x32xf32>
    %91 = vector.shape_cast %90 : vector<4x2x32xf32> to vector<8x32xf32>
    %92 = arith.truncf %91 : vector<8x32xf32> to vector<8x32xbf16>
    %c0_25 = arith.constant 0 : index
    %c0_26 = arith.constant 0 : index
    %c0_27 = arith.constant 0 : index
    %93 = vector.load %arg5[%c0_25, %c0_26, %c0_27] : memref<1x32x32xbf16, #tpu.memory_space<vmem>>, vector<1x32x32xbf16>
    %94 = vector.shape_cast %93 : vector<1x32x32xbf16> to vector<32x32xbf16>
    %cst_28 = arith.constant dense<0.000000e+00> : vector<8x32xf32>
    %95 = tpu.matmul %92, %94, %cst_28 {dimension_numbers = #tpu.dot_dimension_numbers<[1], [0], [0], [1], [0, 0, 1, 1], [], []>} : vector<8x32xbf16>, vector<32x32xbf16>, vector<8x32xf32> -> vector<8x32xf32>
    %c0_29 = arith.constant 0 : index
    %c0_30 = arith.constant 0 : index
    %c0_31 = arith.constant 0 : index
    %96 = vector.load %arg6[%c0_29, %c0_30, %c0_31] : memref<1x1x32xf32, #tpu.memory_space<vmem>>, vector<1x1x32xf32>
    %97 = vector.shape_cast %96 : vector<1x1x32xf32> to vector<1x32xf32>
    %98 = vector.broadcast %97 : vector<1x32xf32> to vector<8x32xf32>
    %99 = arith.addf %95, %98 : vector<8x32xf32>
    %100 = arith.addf %4, %99 : vector<8x32xf32>
    %c0_32 = arith.constant 0 : index
    %c0_33 = arith.constant 0 : index
    %c0_34 = arith.constant 0 : index
    %101 = vector.load %arg7[%c0_32, %c0_33, %c0_34] : memref<1x1x32xf32, #tpu.memory_space<vmem>>, vector<1x1x32xf32>
    %102 = vector.shape_cast %101 : vector<1x1x32xf32> to vector<1x32xf32>
    %c0_35 = arith.constant 0 : index
    %c0_36 = arith.constant 0 : index
    %c0_37 = arith.constant 0 : index
    %103 = vector.load %arg8[%c0_35, %c0_36, %c0_37] : memref<1x1x32xf32, #tpu.memory_space<vmem>>, vector<1x1x32xf32>
    %104 = vector.shape_cast %103 : vector<1x1x32xf32> to vector<1x32xf32>
    %cst_38 = arith.constant dense<0.000000e+00> : vector<8xf32>
    %105 = vector.multi_reduction <add>, %100, %cst_38 [1] : vector<8x32xf32> to vector<8xf32>
    %106 = vector.shape_cast %105 : vector<8xf32> to vector<8x1xf32>
    %cst_39 = arith.constant 3.200000e+01 : f32
    %107 = vector.broadcast %cst_39 : f32 to vector<8x1xf32>
    %108 = arith.divf %106, %107 : vector<8x1xf32>
    %109 = vector.broadcast %108 : vector<8x1xf32> to vector<8x32xf32>
    %110 = arith.subf %100, %109 : vector<8x32xf32>
    %111 = arith.mulf %110, %110 : vector<8x32xf32>
    %cst_40 = arith.constant dense<0.000000e+00> : vector<8xf32>
    %112 = vector.multi_reduction <add>, %111, %cst_40 [1] : vector<8x32xf32> to vector<8xf32>
    %113 = vector.shape_cast %112 : vector<8xf32> to vector<8x1xf32>
    %cst_41 = arith.constant 3.200000e+01 : f32
    %114 = vector.broadcast %cst_41 : f32 to vector<8x1xf32>
    %115 = arith.divf %113, %114 : vector<8x1xf32>
    %cst_42 = arith.constant 9.99999974E-6 : f32
    %116 = vector.broadcast %cst_42 : f32 to vector<8x1xf32>
    %117 = arith.addf %115, %116 : vector<8x1xf32>
    %118 = math.rsqrt %117 : vector<8x1xf32>
    %119 = vector.broadcast %118 : vector<8x1xf32> to vector<8x32xf32>
    %120 = arith.mulf %110, %119 : vector<8x32xf32>
    %121 = vector.broadcast %102 : vector<1x32xf32> to vector<8x32xf32>
    %122 = arith.mulf %120, %121 : vector<8x32xf32>
    %123 = vector.broadcast %104 : vector<1x32xf32> to vector<8x32xf32>
    %124 = arith.addf %122, %123 : vector<8x32xf32>
    %125 = arith.truncf %124 : vector<8x32xf32> to vector<8x32xbf16>
    %c0_43 = arith.constant 0 : index
    %c0_44 = arith.constant 0 : index
    %c0_45 = arith.constant 0 : index
    %126 = vector.load %arg9[%c0_43, %c0_44, %c0_45] : memref<1x32x64xbf16, #tpu.memory_space<vmem>>, vector<1x32x64xbf16>
    %127 = vector.shape_cast %126 : vector<1x32x64xbf16> to vector<32x64xbf16>
    %cst_46 = arith.constant dense<0.000000e+00> : vector<8x64xf32>
    %128 = tpu.matmul %125, %127, %cst_46 {dimension_numbers = #tpu.dot_dimension_numbers<[1], [0], [0], [1], [0, 0, 1, 1], [], []>} : vector<8x32xbf16>, vector<32x64xbf16>, vector<8x64xf32> -> vector<8x64xf32>
    %c0_47 = arith.constant 0 : index
    %c0_48 = arith.constant 0 : index
    %c0_49 = arith.constant 0 : index
    %129 = vector.load %arg10[%c0_47, %c0_48, %c0_49] : memref<1x1x64xf32, #tpu.memory_space<vmem>>, vector<1x1x64xf32>
    %130 = vector.shape_cast %129 : vector<1x1x64xf32> to vector<1x64xf32>
    %131 = vector.broadcast %130 : vector<1x64xf32> to vector<8x64xf32>
    %132 = arith.addf %128, %131 : vector<8x64xf32>
    %cst_50 = arith.constant 0.000000e+00 : f32
    %133 = vector.broadcast %cst_50 : f32 to vector<8x64xf32>
    %134 = arith.maximumf %132, %133 : vector<8x64xf32>
    %135 = arith.truncf %134 : vector<8x64xf32> to vector<8x64xbf16>
    %c0_51 = arith.constant 0 : index
    %c0_52 = arith.constant 0 : index
    %c0_53 = arith.constant 0 : index
    %136 = vector.load %arg11[%c0_51, %c0_52, %c0_53] : memref<1x64x32xbf16, #tpu.memory_space<vmem>>, vector<1x64x32xbf16>
    %137 = vector.shape_cast %136 : vector<1x64x32xbf16> to vector<64x32xbf16>
    %cst_54 = arith.constant dense<0.000000e+00> : vector<8x32xf32>
    %138 = tpu.matmul %135, %137, %cst_54 {dimension_numbers = #tpu.dot_dimension_numbers<[1], [0], [0], [1], [0, 0, 1, 1], [], []>} : vector<8x64xbf16>, vector<64x32xbf16>, vector<8x32xf32> -> vector<8x32xf32>
    %c0_55 = arith.constant 0 : index
    %c0_56 = arith.constant 0 : index
    %c0_57 = arith.constant 0 : index
    %139 = vector.load %arg12[%c0_55, %c0_56, %c0_57] : memref<1x1x32xf32, #tpu.memory_space<vmem>>, vector<1x1x32xf32>
    %140 = vector.shape_cast %139 : vector<1x1x32xf32> to vector<1x32xf32>
    %141 = vector.broadcast %140 : vector<1x32xf32> to vector<8x32xf32>
    %142 = arith.addf %138, %141 : vector<8x32xf32>
    %143 = arith.addf %124, %142 : vector<8x32xf32>
    %c0_58 = arith.constant 0 : index
    %c0_59 = arith.constant 0 : index
    %c0_60 = arith.constant 0 : index
    %144 = vector.load %arg13[%c0_58, %c0_59, %c0_60] : memref<1x1x32xf32, #tpu.memory_space<vmem>>, vector<1x1x32xf32>
    %145 = vector.shape_cast %144 : vector<1x1x32xf32> to vector<1x32xf32>
    %c0_61 = arith.constant 0 : index
    %c0_62 = arith.constant 0 : index
    %c0_63 = arith.constant 0 : index
    %146 = vector.load %arg14[%c0_61, %c0_62, %c0_63] : memref<1x1x32xf32, #tpu.memory_space<vmem>>, vector<1x1x32xf32>
    %147 = vector.shape_cast %146 : vector<1x1x32xf32> to vector<1x32xf32>
    %cst_64 = arith.constant dense<0.000000e+00> : vector<8xf32>
    %148 = vector.multi_reduction <add>, %143, %cst_64 [1] : vector<8x32xf32> to vector<8xf32>
    %149 = vector.shape_cast %148 : vector<8xf32> to vector<8x1xf32>
    %cst_65 = arith.constant 3.200000e+01 : f32
    %150 = vector.broadcast %cst_65 : f32 to vector<8x1xf32>
    %151 = arith.divf %149, %150 : vector<8x1xf32>
    %152 = vector.broadcast %151 : vector<8x1xf32> to vector<8x32xf32>
    %153 = arith.subf %143, %152 : vector<8x32xf32>
    %154 = arith.mulf %153, %153 : vector<8x32xf32>
    %cst_66 = arith.constant dense<0.000000e+00> : vector<8xf32>
    %155 = vector.multi_reduction <add>, %154, %cst_66 [1] : vector<8x32xf32> to vector<8xf32>
    %156 = vector.shape_cast %155 : vector<8xf32> to vector<8x1xf32>
    %cst_67 = arith.constant 3.200000e+01 : f32
    %157 = vector.broadcast %cst_67 : f32 to vector<8x1xf32>
    %158 = arith.divf %156, %157 : vector<8x1xf32>
    %cst_68 = arith.constant 9.99999974E-6 : f32
    %159 = vector.broadcast %cst_68 : f32 to vector<8x1xf32>
    %160 = arith.addf %158, %159 : vector<8x1xf32>
    %161 = math.rsqrt %160 : vector<8x1xf32>
    %162 = vector.broadcast %161 : vector<8x1xf32> to vector<8x32xf32>
    %163 = arith.mulf %153, %162 : vector<8x32xf32>
    %164 = vector.broadcast %145 : vector<1x32xf32> to vector<8x32xf32>
    %165 = arith.mulf %163, %164 : vector<8x32xf32>
    %166 = vector.broadcast %147 : vector<1x32xf32> to vector<8x32xf32>
    %167 = arith.addf %165, %166 : vector<8x32xf32>
    %168 = vector.shape_cast %167 : vector<8x32xf32> to vector<4x2x32xf32>
    %c0_69 = arith.constant 0 : index
    %c0_70 = arith.constant 0 : index
    %c0_71 = arith.constant 0 : index
    %169 = vector.load %arg15[%c0_69, %c0_70, %c0_71] : memref<4x2x32xf32, #tpu.memory_space<vmem>>, vector<4x2x32xf32>
    tpu.vector_store %arg15[%c0_69, %c0_70, %c0_71], %168 {strides = array<i32>} : memref<4x2x32xf32, #tpu.memory_space<vmem>>, vector<4x2x32xf32>,
    return
  }
  func.func @transform_0(%arg0: i32, %arg1: i32) -> (i32, i32, i32) {
    %c0_i32 = arith.constant 0 : i32
    %c0_i32_0 = arith.constant 0 : i32
    %c0_i32_1 = arith.constant 0 : i32
    return %arg0, %c0_i32, %c0_i32_0 : i32, i32, i32
  }
  func.func @transform_1(%arg0: i32, %arg1: i32) -> (i32, i32, i32) {
    %c0_i32 = arith.constant 0 : i32
    %c0_i32_0 = arith.constant 0 : i32
    %c0_i32_1 = arith.constant 0 : i32
    return %arg1, %c0_i32, %c0_i32_0 : i32, i32, i32
  }
  func.func @transform_2(%arg0: i32, %arg1: i32) -> (i32, i32, i32) {
    %c0_i32 = arith.constant 0 : i32
    %c0_i32_0 = arith.constant 0 : i32
    %c0_i32_1 = arith.constant 0 : i32
    return %arg1, %c0_i32, %c0_i32_0 : i32, i32, i32
  }
  func.func @transform_3(%arg0: i32, %arg1: i32) -> (i32, i32, i32) {
    %c0_i32 = arith.constant 0 : i32
    %c0_i32_0 = arith.constant 0 : i32
    %c0_i32_1 = arith.constant 0 : i32
    return %arg1, %c0_i32, %c0_i32_0 : i32, i32, i32
  }
  func.func @transform_4(%arg0: i32, %arg1: i32) -> (i32, i32, i32) {
    %c0_i32 = arith.constant 0 : i32
    %c0_i32_0 = arith.constant 0 : i32
    %c0_i32_1 = arith.constant 0 : i32
    return %arg1, %c0_i32, %c0_i32_0 : i32, i32, i32
  }
  func.func @transform_5(%arg0: i32, %arg1: i32) -> (i32, i32, i32) {
    %c0_i32 = arith.constant 0 : i32
    %c0_i32_0 = arith.constant 0 : i32
    %c0_i32_1 = arith.constant 0 : i32
    return %arg1, %c0_i32, %c0_i32_0 : i32, i32, i32
  }
  func.func @transform_6(%arg0: i32, %arg1: i32) -> (i32, i32, i32) {
    %c0_i32 = arith.constant 0 : i32
    %c0_i32_0 = arith.constant 0 : i32
    %c0_i32_1 = arith.constant 0 : i32
    return %arg1, %c0_i32, %c0_i32_0 : i32, i32, i32
  }
  func.func @transform_7(%arg0: i32, %arg1: i32) -> (i32, i32, i32) {
    %c0_i32 = arith.constant 0 : i32
    %c0_i32_0 = arith.constant 0 : i32
    %c0_i32_1 = arith.constant 0 : i32
    return %arg1, %c0_i32, %c0_i32_0 : i32, i32, i32
  }
  func.func @transform_8(%arg0: i32, %arg1: i32) -> (i32, i32, i32) {
    %c0_i32 = arith.constant 0 : i32
    %c0_i32_0 = arith.constant 0 : i32
    %c0_i32_1 = arith.constant 0 : i32
    return %arg1, %c0_i32, %c0_i32_0 : i32, i32, i32
  }
  func.func @transform_9(%arg0: i32, %arg1: i32) -> (i32, i32, i32) {
    %c0_i32 = arith.constant 0 : i32
    %c0_i32_0 = arith.constant 0 : i32
    %c0_i32_1 = arith.constant 0 : i32
    return %arg1, %c0_i32, %c0_i32_0 : i32, i32, i32
  }
  func.func @transform_10(%arg0: i32, %arg1: i32) -> (i32, i32, i32) {
    %c0_i32 = arith.constant 0 : i32
    %c0_i32_0 = arith.constant 0 : i32
    %c0_i32_1 = arith.constant 0 : i32
    return %arg1, %c0_i32, %c0_i32_0 : i32, i32, i32
  }
  func.func @transform_11(%arg0: i32, %arg1: i32) -> (i32, i32, i32) {
    %c0_i32 = arith.constant 0 : i32
    %c0_i32_0 = arith.constant 0 : i32
    %c0_i32_1 = arith.constant 0 : i32
    return %arg1, %c0_i32, %c0_i32_0 : i32, i32, i32
  }
  func.func @transform_12(%arg0: i32, %arg1: i32) -> (i32, i32, i32) {
    %c0_i32 = arith.constant 0 : i32
    %c0_i32_0 = arith.constant 0 : i32
    %c0_i32_1 = arith.constant 0 : i32
    return %arg1, %c0_i32, %c0_i32_0 : i32, i32, i32
  }
  func.func @transform_13(%arg0: i32, %arg1: i32) -> (i32, i32, i32) {
    %c0_i32 = arith.constant 0 : i32
    %c0_i32_0 = arith.constant 0 : i32
    %c0_i32_1 = arith.constant 0 : i32
    return %arg0, %c0_i32, %c0_i32_0 : i32, i32, i32
  }
}

</mosaic_0001>

<llo_original>
// kernel: tpu_custom_call.1
$region0: #{tpu_custom_call.1}
  #allocation0 [shape = 'u32[]', space=smem, size = 0x4, offset = 0x4, fixed_abs, tag = 'smem constant byte address 0x4 - core index']
  #allocation1 [shape = 'u32[144,128]{1,0:T(1,128)}', space=vmem, size = 0x12000, scoped, tag = 'internal scratch']
  %s0 = inlined_call_operand.hbm [shape: f32[8,2,32], index: 0, kind: input, shape index: {}]
  %s1 = inlined_call_operand.vmem [shape: bf16[2,32,96], index: 1, kind: input, shape index: {}]
  %s2 = inlined_call_operand.vmem [shape: f32[2,1,96], index: 2, kind: input, shape index: {}]
  %s3 = inlined_call_operand.vmem [shape: bf16[2,32,32], index: 3, kind: input, shape index: {}]
  %s4 = inlined_call_operand.vmem [shape: f32[2,1,32], index: 4, kind: input, shape index: {}]
  %s5 = inlined_call_operand.vmem [shape: f32[2,1,32], index: 5, kind: input, shape index: {}]
  %s6 = inlined_call_operand.vmem [shape: f32[2,1,32], index: 6, kind: input, shape index: {}]
  %s7 = inlined_call_operand.vmem [shape: bf16[2,32,64], index: 7, kind: input, shape index: {}]
  %s8 = inlined_call_operand.vmem [shape: f32[2,1,64], index: 8, kind: input, shape index: {}]
  %s9 = inlined_call_operand.vmem [shape: bf16[2,64,32], index: 9, kind: input, shape index: {}]
  %s10 = inlined_call_operand.vmem [shape: f32[2,1,32], index: 10, kind: input, shape index: {}]
  %s11 = inlined_call_operand.vmem [shape: f32[2,1,32], index: 11, kind: input, shape index: {}]
  %s12 = inlined_call_operand.vmem [shape: f32[2,1,32], index: 12, kind: input, shape index: {}]
  %s13 = inlined_call_operand.hbm [shape: f32[8,2,32], index: 13, kind: output, shape index: {}]
  %s14 = sld [smem:[#allocation0]]
  $region93: #{tpu_custom_call.1} parent=0
    _
  %s16 = ssub.s32 1, %s14
  %s17 = scalar_select 0, %s16, %s14
  $region1: #{tpu_custom_call.1} parent=0
    #allocation2 [shape = 'u8[8192]{0}', space=vmem, size = 0x2000, scoped, tag = 'input window, operand 0']
    #allocation3 [shape = 's32[2]{0}', space=sflag, size = 0x8, scoped, tag = 'scoped memory for tpu_custom_call.1']
    #allocation4 [shape = 's32[2]{0}', space=sflag, size = 0x8, scoped, tag = 'scoped memory for tpu_custom_call.1']
    #allocation5 [shape = 'u8[8192]{0}', space=vmem, size = 0x2000, scoped, tag = 'output window, operand 0']
    %18 = vsyncpa [#allocation3], 0
    %s19 = scalar_lea.sflag [#allocation3], 1
    %20 = vsyncpa %s19, 0
    %21 = vsyncpa [#allocation4], 0
    %s22 = scalar_lea.sflag [#allocation4], 1
    %23 = vsyncpa %s22, 0
    loop: start=0, step=1, limit=6
    $region2: #{tpu_custom_call.1} parent=1 // loop_pre_header
      _
    $region3: #{tpu_custom_call.1} parent=1 // loop_header
      %s25 = sphi 0, %s29
      %p26 = scmp.ge.s32.totalorder %s25, 6
      %s32 = sphi 0, %s44
      %s33 = sphi 0, %s40
      %s34 = sphi 0, %s32
      %s35 = sphi 0, %s33
      %s36 = sphi 0, %s34
      %s37 = sphi 0, %s35
      %s47 = sphi 0, %s49
      %s50 = sphi 0, %s47
      %s51 = sphi 0, %s50
      %s67 = sphi 0, %s51
      %s73 = sphi 0, %s75
      %s76 = sphi 0, %s73
      %s77 = sphi 0, %s76
      %s93 = sphi 0, %s77
      %s99 = sphi 0, %s101
      %s102 = sphi 0, %s99
      %s103 = sphi 0, %s102
      %s119 = sphi 0, %s103
      %s125 = sphi 0, %s127
      %s128 = sphi 0, %s125
      %s129 = sphi 0, %s128
      %s145 = sphi 0, %s129
      %s151 = sphi 0, %s153
      %s154 = sphi 0, %s151
      %s155 = sphi 0, %s154
      %s171 = sphi 0, %s155
      %s177 = sphi 0, %s179
      %s180 = sphi 0, %s177
      %s181 = sphi 0, %s180
      %s197 = sphi 0, %s181
      %s203 = sphi 0, %s205
      %s206 = sphi 0, %s203
      %s207 = sphi 0, %s206
      %s223 = sphi 0, %s207
      %s229 = sphi 0, %s231
      %s232 = sphi 0, %s229
      %s233 = sphi 0, %s232
      %s249 = sphi 0, %s233
      %s255 = sphi 0, %s257
      %s258 = sphi 0, %s255
      %s259 = sphi 0, %s258
      %s275 = sphi 0, %s259
      %s281 = sphi 0, %s283
      %s284 = sphi 0, %s281
      %s285 = sphi 0, %s284
      %s301 = sphi 0, %s285
      %s307 = sphi 0, %s309
      %s310 = sphi 0, %s307
      %s311 = sphi 0, %s310
      %s327 = sphi 0, %s311
      %s333 = sphi 0, %s335
      %s336 = sphi 0, %s333
      %s337 = sphi 0, %s336
      %s353 = sphi 0, %s337
      %s359 = sphi 0, %s361
      %s362 = sphi 0, %s359
      %s363 = sphi 0, %s362
      %s379 = sphi 0, %s363
      %s385 = sphi 0, %s387
      %s388 = sphi 0, %s385
      %s389 = sphi 0, %s388
      %s405 = sphi 0, %s389
    $region4: #{tpu_custom_call.1} parent=1 // loop_header_branch
      %28 = sbr.rel (%p26) target = $region8
    $region5: #{tpu_custom_call.1} parent=1 // loop_body
      %s30 = ssub.s32 %s25, 1
      %s31 = ssub.s32 %s25, 2
      %s38 = sadd.s32 1, %s33
      %p39 = scmp.ge.s32.totalorder %s38, 2
      %s40 = scalar_select %p39, 0, %s38
      %s41 = sadd.s32 1, %s32
      %s42 = scalar_select %p39, %s41, %s32
      %p43 = scmp.ge.s32.totalorder %s42, 2
      %s44 = scalar_select %p43, 0, %s42
      %s45 = ssub.s32 %s32, %s44
      %p46 = scmp.eq.s32.totalorder %s45, 0
      %s48 = sadd.s32 %s47, 1
      %s49 = scalar_select %p46, %s47, %s48
      %p52 = pneg %p46
      %p53 = scmp.eq.s32.totalorder %s25, 3
      %p54 = por %p52, %p53
      %p55 = scmp.ne.s32.totalorder %s47, %s50
      %p56 = scmp.eq.s32.totalorder %s25, 0
      %p57 = por %p55, %p56
      %p58 = scmp.ne.s32.totalorder %s47, %s50
      %p59 = scmp.eq.s32.totalorder %s30, 3
      %p60 = por %p58, %p59
      %p61 = scmp.ne.s32.totalorder %s50, %s51
      %p62 = scmp.eq.s32.totalorder %s30, 0
      %p63 = por %p61, %p62
      %p64 = scmp.ne.s32.totalorder %s50, %s51
      %p65 = scmp.eq.s32.totalorder %s31, 3
      %p66 = por %p64, %p65
      %p68 = scmp.ne.s32.totalorder %s51, %s67
      %p69 = scmp.eq.s32.totalorder %s31, 0
      %p70 = por %p68, %p69
      %s71 = ssub.s32 %s33, %s40
      %p72 = scmp.eq.s32.totalorder %s71, 0
      %s74 = sadd.s32 %s73, 1
      %s75 = scalar_select %p72, %s73, %s74
      %p78 = pneg %p72
      %p79 = scmp.eq.s32.totalorder %s25, 3
      %p80 = por %p78, %p79
      %p81 = scmp.ne.s32.totalorder %s73, %s76
      %p82 = scmp.eq.s32.totalorder %s25, 0
      %p83 = por %p81, %p82
      %p84 = scmp.ne.s32.totalorder %s73, %s76
      %p85 = scmp.eq.s32.totalorder %s30, 3
      %p86 = por %p84, %p85
      %p87 = scmp.ne.s32.totalorder %s76, %s77
      %p88 = scmp.eq.s32.totalorder %s30, 0
      %p89 = por %p87, %p88
      %p90 = scmp.ne.s32.totalorder %s76, %s77
      %p91 = scmp.eq.s32.totalorder %s31, 3
      %p92 = por %p90, %p91
      %p94 = scmp.ne.s32.totalorder %s77, %s93
      %p95 = scmp.eq.s32.totalorder %s31, 0
      %p96 = por %p94, %p95
      %s97 = ssub.s32 %s33, %s40
      %p98 = scmp.eq.s32.totalorder %s97, 0
      %s100 = sadd.s32 %s99, 1
      %s101 = scalar_select %p98, %s99, %s100
      %p104 = pneg %p98
      %p105 = scmp.eq.s32.totalorder %s25, 3
      %p106 = por %p104, %p105
      %p107 = scmp.ne.s32.totalorder %s99, %s102
      %p108 = scmp.eq.s32.totalorder %s25, 0
      %p109 = por %p107, %p108
      %p110 = scmp.ne.s32.totalorder %s99, %s102
      %p111 = scmp.eq.s32.totalorder %s30, 3
      %p112 = por %p110, %p111
      %p113 = scmp.ne.s32.totalorder %s102, %s103
      %p114 = scmp.eq.s32.totalorder %s30, 0
      %p115 = por %p113, %p114
      %p116 = scmp.ne.s32.totalorder %s102, %s103
      %p117 = scmp.eq.s32.totalorder %s31, 3
      %p118 = por %p116, %p117
      %p120 = scmp.ne.s32.totalorder %s103, %s119
      %p121 = scmp.eq.s32.totalorder %s31, 0
      %p122 = por %p120, %p121
      %s123 = ssub.s32 %s33, %s40
      %p124 = scmp.eq.s32.totalorder %s123, 0
      %s126 = sadd.s32 %s125, 1
      %s127 = scalar_select %p124, %s125, %s126
      %p130 = pneg %p124
      %p131 = scmp.eq.s32.totalorder %s25, 3
      %p132 = por %p130, %p131
      %p133 = scmp.ne.s32.totalorder %s125, %s128
      %p134 = scmp.eq.s32.totalorder %s25, 0
      %p135 = por %p133, %p134
      %p136 = scmp.ne.s32.totalorder %s125, %s128
      %p137 = scmp.eq.s32.totalorder %s30, 3
      %p138 = por %p136, %p137
      %p139 = scmp.ne.s32.totalorder %s128, %s129
      %p140 = scmp.eq.s32.totalorder %s30, 0
      %p141 = por %p139, %p140
      %p142 = scmp.ne.s32.totalorder %s128, %s129
      %p143 = scmp.eq.s32.totalorder %s31, 3
      %p144 = por %p142, %p143
      %p146 = scmp.ne.s32.totalorder %s129, %s145
      %p147 = scmp.eq.s32.totalorder %s31, 0
      %p148 = por %p146, %p147
      %s149 = ssub.s32 %s33, %s40
      %p150 = scmp.eq.s32.totalorder %s149, 0
      %s152 = sadd.s32 %s151, 1
      %s153 = scalar_select %p150, %s151, %s152
      %p156 = pneg %p150
      %p157 = scmp.eq.s32.totalorder %s25, 3
      %p158 = por %p156, %p157
      %p159 = scmp.ne.s32.totalorder %s151, %s154
      %p160 = scmp.eq.s32.totalorder %s25, 0
      %p161 = por %p159, %p160
      %p162 = scmp.ne.s32.totalorder %s151, %s154
      %p163 = scmp.eq.s32.totalorder %s30, 3
      %p164 = por %p162, %p163
      %p165 = scmp.ne.s32.totalorder %s154, %s155
      %p166 = scmp.eq.s32.totalorder %s30, 0
      %p167 = por %p165, %p166
      %p168 = scmp.ne.s32.totalorder %s154, %s155
      %p169 = scmp.eq.s32.totalorder %s31, 3
      %p170 = por %p168, %p169
      %p172 = scmp.ne.s32.totalorder %s155, %s171
      %p173 = scmp.eq.s32.totalorder %s31, 0
      %p174 = por %p172, %p173
      %s175 = ssub.s32 %s33, %s40
      %p176 = scmp.eq.s32.totalorder %s175, 0
      %s178 = sadd.s32 %s177, 1
      %s179 = scalar_select %p176, %s177, %s178
      %p182 = pneg %p176
      %p183 = scmp.eq.s32.totalorder %s25, 3
      %p184 = por %p182, %p183
      %p185 = scmp.ne.s32.totalorder %s177, %s180
      %p186 = scmp.eq.s32.totalorder %s25, 0
      %p187 = por %p185, %p186
      %p188 = scmp.ne.s32.totalorder %s177, %s180
      %p189 = scmp.eq.s32.totalorder %s30, 3
      %p190 = por %p188, %p189
      %p191 = scmp.ne.s32.totalorder %s180, %s181
      %p192 = scmp.eq.s32.totalorder %s30, 0
      %p193 = por %p191, %p192
      %p194 = scmp.ne.s32.totalorder %s180, %s181
      %p195 = scmp.eq.s32.totalorder %s31, 3
      %p196 = por %p194, %p195
      %p198 = scmp.ne.s32.totalorder %s181, %s197
      %p199 = scmp.eq.s32.totalorder %s31, 0
      %p200 = por %p198, %p199
      %s201 = ssub.s32 %s33, %s40
      %p202 = scmp.eq.s32.totalorder %s201, 0
      %s204 = sadd.s32 %s203, 1
      %s205 = scalar_select %p202, %s203, %s204
      %p208 = pneg %p202
      %p209 = scmp.eq.s32.totalorder %s25, 3
      %p210 = por %p208, %p209
      %p211 = scmp.ne.s32.totalorder %s203, %s206
      %p212 = scmp.eq.s32.totalorder %s25, 0
      %p213 = por %p211, %p212
      %p214 = scmp.ne.s32.totalorder %s203, %s206
      %p215 = scmp.eq.s32.totalorder %s30, 3
      %p216 = por %p214, %p215
      %p217 = scmp.ne.s32.totalorder %s206, %s207
      %p218 = scmp.eq.s32.totalorder %s30, 0
      %p219 = por %p217, %p218
      %p220 = scmp.ne.s32.totalorder %s206, %s207
      %p221 = scmp.eq.s32.totalorder %s31, 3
      %p222 = por %p220, %p221
      %p224 = scmp.ne.s32.totalorder %s207, %s223
      %p225 = scmp.eq.s32.totalorder %s31, 0
      %p226 = por %p224, %p225
      %s227 = ssub.s32 %s33, %s40
      %p228 = scmp.eq.s32.totalorder %s227, 0
      %s230 = sadd.s32 %s229, 1
      %s231 = scalar_select %p228, %s229, %s230
      %p234 = pneg %p228
      %p235 = scmp.eq.s32.totalorder %s25, 3
      %p236 = por %p234, %p235
      %p237 = scmp.ne.s32.totalorder %s229, %s232
      %p238 = scmp.eq.s32.totalorder %s25, 0
      %p239 = por %p237, %p238
      %p240 = scmp.ne.s32.totalorder %s229, %s232
      %p241 = scmp.eq.s32.totalorder %s30, 3
      %p242 = por %p240, %p241
      %p243 = scmp.ne.s32.totalorder %s232, %s233
      %p244 = scmp.eq.s32.totalorder %s30, 0
      %p245 = por %p243, %p244
      %p246 = scmp.ne.s32.totalorder %s232, %s233
      %p247 = scmp.eq.s32.totalorder %s31, 3
      %p248 = por %p246, %p247
      %p250 = scmp.ne.s32.totalorder %s233, %s249
      %p251 = scmp.eq.s32.totalorder %s31, 0
      %p252 = por %p250, %p251
      %s253 = ssub.s32 %s33, %s40
      %p254 = scmp.eq.s32.totalorder %s253, 0
      %s256 = sadd.s32 %s255, 1
      %s257 = scalar_select %p254, %s255, %s256
      %p260 = pneg %p254
      %p261 = scmp.eq.s32.totalorder %s25, 3
      %p262 = por %p260, %p261
      %p263 = scmp.ne.s32.totalorder %s255, %s258
      %p264 = scmp.eq.s32.totalorder %s25, 0
      %p265 = por %p263, %p264
      %p266 = scmp.ne.s32.totalorder %s255, %s258
      %p267 = scmp.eq.s32.totalorder %s30, 3
      %p268 = por %p266, %p267
      %p269 = scmp.ne.s32.totalorder %s258, %s259
      %p270 = scmp.eq.s32.totalorder %s30, 0
      %p271 = por %p269, %p270
      %p272 = scmp.ne.s32.totalorder %s258, %s259
      %p273 = scmp.eq.s32.totalorder %s31, 3
      %p274 = por %p272, %p273
      %p276 = scmp.ne.s32.totalorder %s259, %s275
      %p277 = scmp.eq.s32.totalorder %s31, 0
      %p278 = por %p276, %p277
      %s279 = ssub.s32 %s33, %s40
      %p280 = scmp.eq.s32.totalorder %s279, 0
      %s282 = sadd.s32 %s281, 1
      %s283 = scalar_select %p280, %s281, %s282
      %p286 = pneg %p280
      %p287 = scmp.eq.s32.totalorder %s25, 3
      %p288 = por %p286, %p287
      %p289 = scmp.ne.s32.totalorder %s281, %s284
      %p290 = scmp.eq.s32.totalorder %s25, 0
      %p291 = por %p289, %p290
      %p292 = scmp.ne.s32.totalorder %s281, %s284
      %p293 = scmp.eq.s32.totalorder %s30, 3
      %p294 = por %p292, %p293
      %p295 = scmp.ne.s32.totalorder %s284, %s285
      %p296 = scmp.eq.s32.totalorder %s30, 0
      %p297 = por %p295, %p296
      %p298 = scmp.ne.s32.totalorder %s284, %s285
      %p299 = scmp.eq.s32.totalorder %s31, 3
      %p300 = por %p298, %p299
      %p302 = scmp.ne.s32.totalorder %s285, %s301
      %p303 = scmp.eq.s32.totalorder %s31, 0
      %p304 = por %p302, %p303
      %s305 = ssub.s32 %s33, %s40
      %p306 = scmp.eq.s32.totalorder %s305, 0
      %s308 = sadd.s32 %s307, 1
      %s309 = scalar_select %p306, %s307, %s308
      %p312 = pneg %p306
      %p313 = scmp.eq.s32.totalorder %s25, 3
      %p314 = por %p312, %p313
      %p315 = scmp.ne.s32.totalorder %s307, %s310
      %p316 = scmp.eq.s32.totalorder %s25, 0
      %p317 = por %p315, %p316
      %p318 = scmp.ne.s32.totalorder %s307, %s310
      %p319 = scmp.eq.s32.totalorder %s30, 3
      %p320 = por %p318, %p319
      %p321 = scmp.ne.s32.totalorder %s310, %s311
      %p322 = scmp.eq.s32.totalorder %s30, 0
      %p323 = por %p321, %p322
      %p324 = scmp.ne.s32.totalorder %s310, %s311
      %p325 = scmp.eq.s32.totalorder %s31, 3
      %p326 = por %p324, %p325
      %p328 = scmp.ne.s32.totalorder %s311, %s327
      %p329 = scmp.eq.s32.totalorder %s31, 0
      %p330 = por %p328, %p329
      %s331 = ssub.s32 %s33, %s40
      %p332 = scmp.eq.s32.totalorder %s331, 0
      %s334 = sadd.s32 %s333, 1
      %s335 = scalar_select %p332, %s333, %s334
      %p338 = pneg %p332
      %p339 = scmp.eq.s32.totalorder %s25, 3
      %p340 = por %p338, %p339
      %p341 = scmp.ne.s32.totalorder %s333, %s336
      %p342 = scmp.eq.s32.totalorder %s25, 0
      %p343 = por %p341, %p342
      %p344 = scmp.ne.s32.totalorder %s333, %s336
      %p345 = scmp.eq.s32.totalorder %s30, 3
      %p346 = por %p344, %p345
      %p347 = scmp.ne.s32.totalorder %s336, %s337
      %p348 = scmp.eq.s32.totalorder %s30, 0
      %p349 = por %p347, %p348
      %p350 = scmp.ne.s32.totalorder %s336, %s337
      %p351 = scmp.eq.s32.totalorder %s31, 3
      %p352 = por %p350, %p351
      %p354 = scmp.ne.s32.totalorder %s337, %s353
      %p355 = scmp.eq.s32.totalorder %s31, 0
      %p356 = por %p354, %p355
      %s357 = ssub.s32 %s33, %s40
      %p358 = scmp.eq.s32.totalorder %s357, 0
      %s360 = sadd.s32 %s359, 1
      %s361 = scalar_select %p358, %s359, %s360
      %p364 = pneg %p358
      %p365 = scmp.eq.s32.totalorder %s25, 3
      %p366 = por %p364, %p365
      %p367 = scmp.ne.s32.totalorder %s359, %s362
      %p368 = scmp.eq.s32.totalorder %s25, 0
      %p369 = por %p367, %p368
      %p370 = scmp.ne.s32.totalorder %s359, %s362
      %p371 = scmp.eq.s32.totalorder %s30, 3
      %p372 = por %p370, %p371
      %p373 = scmp.ne.s32.totalorder %s362, %s363
      %p374 = scmp.eq.s32.totalorder %s30, 0
      %p375 = por %p373, %p374
      %p376 = scmp.ne.s32.totalorder %s362, %s363
      %p377 = scmp.eq.s32.totalorder %s31, 3
      %p378 = por %p376, %p377
      %p380 = scmp.ne.s32.totalorder %s363, %s379
      %p381 = scmp.eq.s32.totalorder %s31, 0
      %p382 = por %p380, %p381
      %s383 = ssub.s32 %s32, %s44
      %p384 = scmp.eq.s32.totalorder %s383, 0
      %s386 = sadd.s32 %s385, 1
      %s387 = scalar_select %p384, %s385, %s386
      %p390 = pneg %p384
      %p391 = scmp.eq.s32.totalorder %s25, 3
      %p392 = por %p390, %p391
      %p393 = scmp.ne.s32.totalorder %s385, %s388
      %p394 = scmp.eq.s32.totalorder %s25, 0
      %p395 = por %p393, %p394
      %p396 = scmp.ne.s32.totalorder %s385, %s388
      %p397 = scmp.eq.s32.totalorder %s30, 3
      %p398 = por %p396, %p397
      %p399 = scmp.ne.s32.totalorder %s388, %s389
      %p400 = scmp.eq.s32.totalorder %s30, 0
      %p401 = por %p399, %p400
      %p402 = scmp.ne.s32.totalorder %s388, %s389
      %p403 = scmp.eq.s32.totalorder %s31, 3
      %p404 = por %p402, %p403
      %p406 = scmp.ne.s32.totalorder %s389, %s405
      %p407 = scmp.eq.s32.totalorder %s31, 0
      %p408 = por %p406, %p407
      %p409 = scmp.le.s32.totalorder 1, %s25
      %p410 = scmp.lt.s32.totalorder %s25, 5
      %p411 = pnand %p409, %p410
      %p412 = pneg %p411
      // Predicated region
      $region9: #{tpu_custom_call.1} parent=5 // pred_check
        _
      $region10: #{tpu_custom_call.1} parent=5 // pred_check_branch
        %414 = sbr.rel (%p411) target = $region12
      $region11: #{tpu_custom_call.1} parent=5 // pred_region
        %s415 = ssub.s32 %s25, 1
      $region12: #{tpu_custom_call.1} parent=5 // pred_fallthru
        _
      %p416 = scmp.lt.s32.totalorder %s25, 4
      // Predicated region
      $region13: #{tpu_custom_call.1} parent=5 // pred_check
        %p417 = pneg %p416
      $region14: #{tpu_custom_call.1} parent=5 // pred_check_branch
        %419 = sbr.rel (%p417) target = $region16
      $region15: #{tpu_custom_call.1} parent=5 // pred_region
        // Predicated region
        $region17: #{tpu_custom_call.1} parent=15 // pred_check
          %p420 = pneg %p57
        $region18: #{tpu_custom_call.1} parent=15 // pred_check_branch
          %422 = sbr.rel (%p420) target = $region20
        $region19: #{tpu_custom_call.1} parent=15 // pred_region
          %s423 = sand.u32 %s47, 1
          %s424 = scalar_lea.sflag [#allocation3], %s423
          %s425 = sand.u32 %s47, 1
          %s426 = smul.addr %s425, 8
          %s427 = scalar_lea.vmem [#allocation2], %s426
          %s428 = smul.u32 4, %s32
          %s430 = ssub.s32 128, 128
          %431 = vsyncadd %s424, %s430
          %s432 = smul.addr %s428, 32
          %s433 = scalar_lea.hbm %s0, %s432
          %s434 = sshll.u32 %s427, 4
          %s435 = int_to_ptr.vmem [resolvable:$true] %s434
          %440 = dma.hbm_to_vmem [thread:$0]  %s433, 128, %s435, %s424, 32, 32, 2
        $region20: #{tpu_custom_call.1} parent=15 // pred_fallthru
          _
        // Predicated region
        $region21: #{tpu_custom_call.1} parent=15 // pred_check
          %p441 = pneg %p83
        $region22: #{tpu_custom_call.1} parent=15 // pred_check_branch
          %443 = sbr.rel (%p441) target = $region24
        $region23: #{tpu_custom_call.1} parent=15 // pred_region
          %p444 = scmp.lt.s32.totalorder %s33, 1
          %s445 = scalar_select %p444, %s33, 1
          %s446 = smul.addr %s445, 4
          %s447 = smul.addr %s446, 4
          %s448 = scalar_lea.vmem %s1, %s447
        $region24: #{tpu_custom_call.1} parent=15 // pred_fallthru
          _
        // Predicated region
        $region25: #{tpu_custom_call.1} parent=15 // pred_check
          %p449 = pneg %p109
        $region26: #{tpu_custom_call.1} parent=15 // pred_check_branch
          %451 = sbr.rel (%p449) target = $region28
        $region27: #{tpu_custom_call.1} parent=15 // pred_region
          %p452 = scmp.lt.s32.totalorder %s33, 1
          %s453 = scalar_select %p452, %s33, 1
          %s454 = scalar_lea.vmem %s2, %s453
        $region28: #{tpu_custom_call.1} parent=15 // pred_fallthru
          _
        // Predicated region
        $region29: #{tpu_custom_call.1} parent=15 // pred_check
          %p455 = pneg %p135
        $region30: #{tpu_custom_call.1} parent=15 // pred_check_branch
          %457 = sbr.rel (%p455) target = $region32
        $region31: #{tpu_custom_call.1} parent=15 // pred_region
          %p458 = scmp.lt.s32.totalorder %s33, 1
          %s459 = scalar_select %p458, %s33, 1
          %s460 = smul.addr %s459, 4
          %s461 = smul.addr %s460, 4
          %s462 = scalar_lea.vmem %s3, %s461
        $region32: #{tpu_custom_call.1} parent=15 // pred_fallthru
          _
        // Predicated region
        $region33: #{tpu_custom_call.1} parent=15 // pred_check
          %p463 = pneg %p161
        $region34: #{tpu_custom_call.1} parent=15 // pred_check_branch
          %465 = sbr.rel (%p463) target = $region36
        $region35: #{tpu_custom_call.1} parent=15 // pred_region
          %p466 = scmp.lt.s32.totalorder %s33, 1
          %s467 = scalar_select %p466, %s33, 1
          %s468 = scalar_lea.vmem %s4, %s467
        $region36: #{tpu_custom_call.1} parent=15 // pred_fallthru
          _
        // Predicated region
        $region37: #{tpu_custom_call.1} parent=15 // pred_check
          %p469 = pneg %p187
        $region38: #{tpu_custom_call.1} parent=15 // pred_check_branch
          %471 = sbr.rel (%p469) target = $region40
        $region39: #{tpu_custom_call.1} parent=15 // pred_region
          %p472 = scmp.lt.s32.totalorder %s33, 1
          %s473 = scalar_select %p472, %s33, 1
          %s474 = scalar_lea.vmem %s5, %s473
        $region40: #{tpu_custom_call.1} parent=15 // pred_fallthru
          _
        // Predicated region
        $region41: #{tpu_custom_call.1} parent=15 // pred_check
          %p475 = pneg %p213
        $region42: #{tpu_custom_call.1} parent=15 // pred_check_branch
          %477 = sbr.rel (%p475) target = $region44
        $region43: #{tpu_custom_call.1} parent=15 // pred_region
          %p478 = scmp.lt.s32.totalorder %s33, 1
          %s479 = scalar_select %p478, %s33, 1
          %s480 = scalar_lea.vmem %s6, %s479
        $region44: #{tpu_custom_call.1} parent=15 // pred_fallthru
          _
        // Predicated region
        $region45: #{tpu_custom_call.1} parent=15 // pred_check
          %p481 = pneg %p239
        $region46: #{tpu_custom_call.1} parent=15 // pred_check_branch
          %483 = sbr.rel (%p481) target = $region48
        $region47: #{tpu_custom_call.1} parent=15 // pred_region
          %p484 = scmp.lt.s32.totalorder %s33, 1
          %s485 = scalar_select %p484, %s33, 1
          %s486 = smul.addr %s485, 4
          %s487 = smul.addr %s486, 4
          %s488 = scalar_lea.vmem %s7, %s487
        $region48: #{tpu_custom_call.1} parent=15 // pred_fallthru
          _
        // Predicated region
        $region49: #{tpu_custom_call.1} parent=15 // pred_check
          %p489 = pneg %p265
        $region50: #{tpu_custom_call.1} parent=15 // pred_check_branch
          %491 = sbr.rel (%p489) target = $region52
        $region51: #{tpu_custom_call.1} parent=15 // pred_region
          %p492 = scmp.lt.s32.totalorder %s33, 1
          %s493 = scalar_select %p492, %s33, 1
          %s494 = scalar_lea.vmem %s8, %s493
        $region52: #{tpu_custom_call.1} parent=15 // pred_fallthru
          _
        // Predicated region
        $region53: #{tpu_custom_call.1} parent=15 // pred_check
          %p495 = pneg %p291
        $region54: #{tpu_custom_call.1} parent=15 // pred_check_branch
          %497 = sbr.rel (%p495) target = $region56
        $region55: #{tpu_custom_call.1} parent=15 // pred_region
          %p498 = scmp.lt.s32.totalorder %s33, 1
          %s499 = scalar_select %p498, %s33, 1
          %s500 = smul.addr %s499, 8
          %s501 = smul.addr %s500, 4
          %s502 = scalar_lea.vmem %s9, %s501
        $region56: #{tpu_custom_call.1} parent=15 // pred_fallthru
          _
        // Predicated region
        $region57: #{tpu_custom_call.1} parent=15 // pred_check
          %p503 = pneg %p317
        $region58: #{tpu_custom_call.1} parent=15 // pred_check_branch
          %505 = sbr.rel (%p503) target = $region60
        $region59: #{tpu_custom_call.1} parent=15 // pred_region
          %p506 = scmp.lt.s32.totalorder %s33, 1
          %s507 = scalar_select %p506, %s33, 1
          %s508 = scalar_lea.vmem %s10, %s507
        $region60: #{tpu_custom_call.1} parent=15 // pred_fallthru
          _
        // Predicated region
        $region61: #{tpu_custom_call.1} parent=15 // pred_check
          %p509 = pneg %p343
        $region62: #{tpu_custom_call.1} parent=15 // pred_check_branch
          %511 = sbr.rel (%p509) target = $region64
        $region63: #{tpu_custom_call.1} parent=15 // pred_region
          %p512 = scmp.lt.s32.totalorder %s33, 1
          %s513 = scalar_select %p512, %s33, 1
          %s514 = scalar_lea.vmem %s11, %s513
        $region64: #{tpu_custom_call.1} parent=15 // pred_fallthru
          _
        // Predicated region
        $region65: #{tpu_custom_call.1} parent=15 // pred_check
          %p515 = pneg %p369
        $region66: #{tpu_custom_call.1} parent=15 // pred_check_branch
          %517 = sbr.rel (%p515) target = $region68
        $region67: #{tpu_custom_call.1} parent=15 // pred_region
          %p518 = scmp.lt.s32.totalorder %s33, 1
          %s519 = scalar_select %p518, %s33, 1
          %s520 = scalar_lea.vmem %s12, %s519
        $region68: #{tpu_custom_call.1} parent=15 // pred_fallthru
          _
      $region16: #{tpu_custom_call.1} parent=5 // pred_fallthru
        _
      %p521 = scmp.le.s32.totalorder 1, %s25
      %p522 = scmp.lt.s32.totalorder %s25, 5
      %p523 = pnand %p521, %p522
      %p524 = pneg %p523
      // Predicated region
      $region69: #{tpu_custom_call.1} parent=5 // pred_check
        _
      $region70: #{tpu_custom_call.1} parent=5 // pred_check_branch
        %526 = sbr.rel (%p523) target = $region72
      $region71: #{tpu_custom_call.1} parent=5 // pred_region
        %s527 = ssub.s32 %s25, 1
        %s528 = sand.u32 %s50, 1
        %s529 = scalar_lea.sflag [#allocation3], %s528
        %s530 = sand.u32 %s50, 1
        %s531 = smul.addr %s530, 8
        %s532 = scalar_lea.vmem [#allocation2], %s531
        // Predicated region
        $region73: #{tpu_custom_call.1} parent=71 // pred_check
          %p533 = pneg %p63
        $region74: #{tpu_custom_call.1} parent=71 // pred_check_branch
          %535 = sbr.rel (%p533) target = $region76
        $region75: #{tpu_custom_call.1} parent=71 // pred_region
          %536 = dma.done %s529, 128
        $region76: #{tpu_custom_call.1} parent=71 // pred_fallthru
          _
        %s537 = sand.u32 %s50, 1
        %s538 = scalar_lea.sflag [#allocation3], %s537
        %s539 = sand.u32 %s50, 1
        %s540 = smul.addr %s539, 8
        %s541 = scalar_lea.vmem [#allocation2], %s540
        %p542 = pneg %p63
        %p543 = pneg %p60
        %p544 = scmp.lt.s32.totalorder %s35, 1
        %s545 = scalar_select %p544, %s35, 1
        %s546 = smul.addr %s545, 4
        %s547 = smul.addr %s546, 4
        %s548 = scalar_lea.vmem %s1, %s547
        %p549 = pneg %p89
        %p550 = pneg %p86
        %p551 = scmp.lt.s32.totalorder %s35, 1
        %s552 = scalar_select %p551, %s35, 1
        %s553 = scalar_lea.vmem %s2, %s552
        %p554 = pneg %p115
        %p555 = pneg %p112
        %p556 = scmp.lt.s32.totalorder %s35, 1
        %s557 = scalar_select %p556, %s35, 1
        %s558 = smul.addr %s557, 4
        %s559 = smul.addr %s558, 4
        %s560 = scalar_lea.vmem %s3, %s559
        %p561 = pneg %p141
        %p562 = pneg %p138
        %p563 = scmp.lt.s32.totalorder %s35, 1
        %s564 = scalar_select %p563, %s35, 1
        %s565 = scalar_lea.vmem %s4, %s564
        %p566 = pneg %p167
        %p567 = pneg %p164
        %p568 = scmp.lt.s32.totalorder %s35, 1
        %s569 = scalar_select %p568, %s35, 1
        %s570 = scalar_lea.vmem %s5, %s569
        %p571 = pneg %p193
        %p572 = pneg %p190
        %p573 = scmp.lt.s32.totalorder %s35, 1
        %s574 = scalar_select %p573, %s35, 1
        %s575 = scalar_lea.vmem %s6, %s574
        %p576 = pneg %p219
        %p577 = pneg %p216
        %p578 = scmp.lt.s32.totalorder %s35, 1
        %s579 = scalar_select %p578, %s35, 1
        %s580 = smul.addr %s579, 4
        %s581 = smul.addr %s580, 4
        %s582 = scalar_lea.vmem %s7, %s581
        %p583 = pneg %p245
        %p584 = pneg %p242
        %p585 = scmp.lt.s32.totalorder %s35, 1
        %s586 = scalar_select %p585, %s35, 1
        %s587 = scalar_lea.vmem %s8, %s586
        %p588 = pneg %p271
        %p589 = pneg %p268
        %p590 = scmp.lt.s32.totalorder %s35, 1
        %s591 = scalar_select %p590, %s35, 1
        %s592 = smul.addr %s591, 8
        %s593 = smul.addr %s592, 4
        %s594 = scalar_lea.vmem %s9, %s593
        %p595 = pneg %p297
        %p596 = pneg %p294
        %p597 = scmp.lt.s32.totalorder %s35, 1
        %s598 = scalar_select %p597, %s35, 1
        %s599 = scalar_lea.vmem %s10, %s598
        %p600 = pneg %p323
        %p601 = pneg %p320
        %p602 = scmp.lt.s32.totalorder %s35, 1
        %s603 = scalar_select %p602, %s35, 1
        %s604 = scalar_lea.vmem %s11, %s603
        %p605 = pneg %p349
        %p606 = pneg %p346
        %p607 = scmp.lt.s32.totalorder %s35, 1
        %s608 = scalar_select %p607, %s35, 1
        %s609 = scalar_lea.vmem %s12, %s608
        %p610 = pneg %p375
        %p611 = pneg %p372
        %p612 = pneg %p401
        %p613 = pneg %p398
        %s614 = sand.u32 %s388, 1
        %s615 = scalar_lea.sflag [#allocation4], %s614
        %s616 = sand.u32 %s388, 1
        %s617 = smul.addr %s616, 8
        %s618 = scalar_lea.vmem [#allocation5], %s617
        %s619 = smul.u32 4, %s34
        %p620 = scmp.lt.s32.totalorder %s35, 1
        %s621 = scalar_select %p620, %s35, 1
        %s622 = smul.addr %s621, 4
        %s623 = smul.addr %s622, 4
        %s624 = scalar_lea.vmem %s1, %s623
        %p625 = scmp.lt.s32.totalorder %s35, 1
        %s626 = scalar_select %p625, %s35, 1
        %s627 = scalar_lea.vmem %s2, %s626
        %p628 = scmp.lt.s32.totalorder %s35, 1
        %s629 = scalar_select %p628, %s35, 1
        %s630 = smul.addr %s629, 4
        %s631 = smul.addr %s630, 4
        %s632 = scalar_lea.vmem %s3, %s631
        %p633 = scmp.lt.s32.totalorder %s35, 1
        %s634 = scalar_select %p633, %s35, 1
        %s635 = scalar_lea.vmem %s4, %s634
        %p636 = scmp.lt.s32.totalorder %s35, 1
        %s637 = scalar_select %p636, %s35, 1
        %s638 = scalar_lea.vmem %s5, %s637
        %p639 = scmp.lt.s32.totalorder %s35, 1
        %s640 = scalar_select %p639, %s35, 1
        %s641 = scalar_lea.vmem %s6, %s640
        %p642 = scmp.lt.s32.totalorder %s35, 1
        %s643 = scalar_select %p642, %s35, 1
        %s644 = smul.addr %s643, 4
        %s645 = smul.addr %s644, 4
        %s646 = scalar_lea.vmem %s7, %s645
        %p647 = scmp.lt.s32.totalorder %s35, 1
        %s648 = scalar_select %p647, %s35, 1
        %s649 = scalar_lea.vmem %s8, %s648
        %p650 = scmp.lt.s32.totalorder %s35, 1
        %s651 = scalar_select %p650, %s35, 1
        %s652 = smul.addr %s651, 8
        %s653 = smul.addr %s652, 4
        %s654 = scalar_lea.vmem %s9, %s653
        %p655 = scmp.lt.s32.totalorder %s35, 1
        %s656 = scalar_select %p655, %s35, 1
        %s657 = scalar_lea.vmem %s10, %s656
        %p658 = scmp.lt.s32.totalorder %s35, 1
        %s659 = scalar_select %p658, %s35, 1
        %s660 = scalar_lea.vmem %s11, %s659
        %p661 = scmp.lt.s32.totalorder %s35, 1
        %s662 = scalar_select %p661, %s35, 1
        %s663 = scalar_lea.vmem %s12, %s662
        %s664 = smul.u32 4, %s34
        %p666 = scmp.eq.s32.totalorder %s35, 0
        // Predicated region
        $region77: #{tpu_custom_call.1} parent=71 // pred_check
          %p667 = pneg %p666
        $region78: #{tpu_custom_call.1} parent=71 // pred_check_branch
          %669 = sbr.rel (%p667) target = $region80
        $region79: #{tpu_custom_call.1} parent=71 // pred_region
          %v670 = vld [vmem:[%s532] sm:$0x3]
          %v671 = vld [vmem:[%s532 + $0x2] sm:$0x3]
          %v672 = vld [vmem:[%s532 + $0x4] sm:$0x3]
          %v673 = vld [vmem:[%s532 + $0x6] sm:$0x3]
          %vm674 = vcmask 254976
          %675 = vst.msk [vmem:[%s618] sm:$0x3] %vm674, %v670
          %676 = vst.msk [vmem:[%s618 + $0x2] sm:$0x3] %vm674, %v671
          %677 = vst.msk [vmem:[%s618 + $0x4] sm:$0x3] %vm674, %v672
          %678 = vst.msk [vmem:[%s618 + $0x6] sm:$0x3] %vm674, %v673
        $region80: #{tpu_custom_call.1} parent=71 // pred_fallthru
          _
        %v679 = vld [vmem:[%s618] sm:$0x3]
        %v680 = vld [vmem:[%s618 + $0x2] sm:$0x3]
        %v681 = vld [vmem:[%s618 + $0x4] sm:$0x3]
        %v682 = vld [vmem:[%s618 + $0x6] sm:$0x3]
        %v687 = vcombine.low %v679, %v680
        %v688 = vcombine.low %v681, %v682
        %v690 = vunpack.c.l.s4 1983009808
        %v691 = vunpack.c.0.s8 %v690
        %v692 = vlaneseq
        %v693 = vshrl.u32 %v692, 7
        %v694 = vsub.s32 %v691, %v693
        %v695 = vrot.slane %v687, %v694
        %v697 = vunpack.c.l.s4 1983009808
        %v698 = vunpack.c.0.s8 %v697
        %v699 = vlaneseq
        %v700 = vshrl.u32 %v699, 7
        %v701 = vsub.s32 %v698, %v700
        %v702 = vrot.slane %v688, %v701
        %v703 = vcombine.low %v695, %v702
        %v705 = vpack.c.bf16 %v703, %v703
        %v706 = vld [vmem:[%s624] sm:$0xf]
        %v707 = vld [vmem:[%s624 + $0x4] sm:$0xf]
        %v708 = vld [vmem:[%s624 + $0x8] sm:$0xf]
        %v709 = vld [vmem:[%s624 + $0xc] sm:$0xf]
        %v710 = vld [vmem:[%s627] sm:$0x1]
        %v712 = vlaneseq
        %v713 = vshrl.u32 %v712, 7
        %v714 = vsub.s32 0, %v713
        %v715 = vrot.slane %v710, %v714
        %v721 = vunpack.c.l.b16 %v706
        %v722 = vunpack.c.l.b16 %v707
        %v723 = vunpack.c.l.b16 %v708
        %v724 = vunpack.c.l.b16 %v709
        %v725 = vpack.c.b16 %v722, %v721
        %v726 = vpack.c.b16 %v724, %v723
        %vm729 = vcmask 261120
        %v731 = vsel %vm729, %v705, 0
        %733 = vmatprep.subr.bf16.mxu0 0
        %734 = vmatpush1.bf16.msra.mxu0 0
        %735 = vmatprep.subr.bf16.mxu0 0
        %736 = vmatpush1.bf16.msra.mxu0 0
        %737 = vmatprep.subr.bf16.mxu0 0
        %738 = vmatpush1.bf16.msra.mxu0 0
        %739 = vmatprep.subr.bf16.mxu0 0
        %740 = vmatpush1.bf16.msra.mxu0 0
        %741 = vmatprep.subr.bf16.mxu0 0
        %742 = vmatpush1.bf16.msra.mxu0 0
        %743 = vmatprep.subr.bf16.mxu0 0
        %744 = vmatpush1.bf16.msra.mxu0 0
        %745 = vmatprep.subr.bf16.mxu0 0
        %746 = vmatpush1.bf16.msra.mxu0 %v726
        %747 = vmatprep.subr.bf16.mxu0 0
        %748 = vmatpush1.bf16.msra.mxu0 %v725
        %749 = vmatprep.subr.bf16.mxu0 0
        %750 = vmatpush2.bf16.msra.mxu0 0
        %751 = vmatprep.subr.bf16.mxu0 0
        %752 = vmatpush2.bf16.msra.mxu0 0
        %753 = vmatprep.subr.bf16.mxu0 0
        %754 = vmatpush2.bf16.msra.mxu0 0
        %755 = vmatprep.subr.bf16.mxu0 0
        %756 = vmatpush2.bf16.msra.mxu0 0
        %757 = vmatprep.subr.bf16.mxu0 0
        %758 = vmatpush2.bf16.msra.mxu0 0
        %759 = vmatprep.subr.bf16.mxu0 0
        %760 = vmatpush2.bf16.msra.mxu0 0
        %761 = vmatprep.subr.bf16.mxu0 0
        %762 = vmatpush2.bf16.msra.mxu0 0
        %763 = vmatprep.subr.bf16.mxu0 0
        %764 = vmatpush2.bf16.msra.mxu0 0
        %765 = vmatprep.mubr.bf16.mxu0 0
        %766 = vmatmul.mubr.bf16.gmra.mxu0 %v731
        %v767 = vpop.f32.mrf.mxu0
        %v768 = vadd.f32 %v715, %v767
        %v769 = vpop.f32.mrf.mxu0
        %v770 = vpop.f32.mrf.mxu0
        %v771 = vpop.f32.mrf.mxu0
        %772 = vdwg.mxu0
        %v773 = vpack.c.bf16 %v768, %v768
        %v776 = vunpack.c.l.s4 1966171168
        %v777 = vunpack.c.0.s8 %v776
        %v778 = vlaneseq
        %v779 = vshrl.u32 %v778, 7
        %v780 = vsub.s32 %v777, %v779
        %v781 = vrot.slane %v773, %v780
        %v782 = vcombine.high %v781, %v781
        %v784 = vunpack.c.l.s4 1966171168
        %v785 = vunpack.c.0.s8 %v784
        %v786 = vlaneseq
        %v787 = vshrl.u32 %v786, 7
        %v788 = vsub.s32 %v785, %v787
        %v789 = vrot.slane %v781, %v788
        %v791 = vunpack.c.l.s4 1966171168
        %v792 = vunpack.c.0.s8 %v791
        %v793 = vlaneseq
        %v794 = vshrl.u32 %v793, 7
        %v795 = vsub.s32 %v792, %v794
        %v796 = vrot.slane %v782, %v795
        %v797 = vcombine.high %v789, %v789
        %v798 = vcombine.high %v796, %v796
        %v800 = vunpack.c.l.s4 1966171168
        %v801 = vunpack.c.0.s8 %v800
        %v802 = vlaneseq
        %v803 = vshrl.u32 %v802, 7
        %v804 = vsub.s32 %v801, %v803
        %v805 = vrot.slane %v789, %v804
        %v807 = vunpack.c.l.s4 1966171168
        %v808 = vunpack.c.0.s8 %v807
        %v809 = vlaneseq
        %v810 = vshrl.u32 %v809, 7
        %v811 = vsub.s32 %v808, %v810
        %v812 = vrot.slane %v805, %v811
        %813 = vrot.lane.b32.xlu0 %v812, 96
        %v814 = vpop.permute.xlu0 %813
        %vm815 = vcmask 64512
        %v817 = vsel %vm815, %v789, 0
        %v820 = vsel %vm815, %v814, 0
        %822 = vmatprep.subr.bf16.mxu0 0
        %823 = vmatpush1.bf16.xpose.msra.mxu0 0
        %824 = vmatprep.subr.bf16.mxu0 0
        %825 = vmatpush1.bf16.xpose.msra.mxu0 0
        %826 = vmatprep.subr.bf16.mxu0 0
        %827 = vmatpush1.bf16.xpose.msra.mxu0 0
        %828 = vmatprep.subr.bf16.mxu0 0
        %829 = vmatpush1.bf16.xpose.msra.mxu0 0
        %830 = vmatprep.subr.bf16.mxu0 0
        %831 = vmatpush1.bf16.xpose.msra.mxu0 0
        %832 = vmatprep.subr.bf16.mxu0 0
        %833 = vmatpush1.bf16.xpose.msra.mxu0 0
        %834 = vmatprep.subr.bf16.mxu0 0
        %835 = vmatpush1.bf16.xpose.msra.mxu0 0
        %836 = vmatprep.subr.bf16.mxu0 0
        %837 = vmatpush1.bf16.xpose.msra.mxu0 %v820
        %838 = vmatprep.subr.bf16.mxu0 0
        %839 = vmatpush2.bf16.xpose.msra.mxu0 0
        %840 = vmatprep.subr.bf16.mxu0 0
        %841 = vmatpush2.bf16.xpose.msra.mxu0 0
        %842 = vmatprep.subr.bf16.mxu0 0
        %843 = vmatpush2.bf16.xpose.msra.mxu0 0
        %844 = vmatprep.subr.bf16.mxu0 0
        %845 = vmatpush2.bf16.xpose.msra.mxu0 0
        %846 = vmatprep.subr.bf16.mxu0 0
        %847 = vmatpush2.bf16.xpose.msra.mxu0 0
        %848 = vmatprep.subr.bf16.mxu0 0
        %849 = vmatpush2.bf16.xpose.msra.mxu0 0
        %850 = vmatprep.subr.bf16.mxu0 0
        %851 = vmatpush2.bf16.xpose.msra.mxu0 0
        %852 = vmatprep.subr.bf16.mxu0 0
        %853 = vmatpush2.bf16.xpose.msra.mxu0 0
        %854 = vmatprep.mubr.bf16.mxu0 0
        %855 = vmatmul.mubr.bf16.gmra.mxu0 %v817
        %v856 = vpop.f32.mrf.mxu0
        %v857 = vadd.f32 0.0, %v856
        %v858 = vpop.f32.mrf.mxu0
        %v859 = vpop.f32.mrf.mxu0
        %v860 = vpop.f32.mrf.mxu0
        %861 = vdwg.mxu0
        %v863 = vunpack.c.l.s4 1966171168
        %v864 = vunpack.c.0.s8 %v863
        %v865 = vlaneseq
        %v866 = vshrl.u32 %v865, 7
        %v867 = vsub.s32 %v864, %v866
        %v868 = vrot.slane %v796, %v867
        %v870 = vunpack.c.l.s4 1966171168
        %v871 = vunpack.c.0.s8 %v870
        %v872 = vlaneseq
        %v873 = vshrl.u32 %v872, 7
        %v874 = vsub.s32 %v871, %v873
        %v875 = vrot.slane %v868, %v874
        %876 = vrot.lane.b32.xlu0 %v875, 96
        %v877 = vpop.permute.xlu0 %876
        %v879 = vsel %vm815, %v796, 0
        %v882 = vsel %vm815, %v877, 0
        %884 = vmatprep.subr.bf16.mxu0 0
        %885 = vmatpush1.bf16.xpose.msra.mxu0 0
        %886 = vmatprep.subr.bf16.mxu0 0
        %887 = vmatpush1.bf16.xpose.msra.mxu0 0
        %888 = vmatprep.subr.bf16.mxu0 0
        %889 = vmatpush1.bf16.xpose.msra.mxu0 0
        %890 = vmatprep.subr.bf16.mxu0 0
        %891 = vmatpush1.bf16.xpose.msra.mxu0 0
        %892 = vmatprep.subr.bf16.mxu0 0
        %893 = vmatpush1.bf16.xpose.msra.mxu0 0
        %894 = vmatprep.subr.bf16.mxu0 0
        %895 = vmatpush1.bf16.xpose.msra.mxu0 0
        %896 = vmatprep.subr.bf16.mxu0 0
        %897 = vmatpush1.bf16.xpose.msra.mxu0 0
        %898 = vmatprep.subr.bf16.mxu0 0
        %899 = vmatpush1.bf16.xpose.msra.mxu0 %v882
        %900 = vmatprep.subr.bf16.mxu0 0
        %901 = vmatpush2.bf16.xpose.msra.mxu0 0
        %902 = vmatprep.subr.bf16.mxu0 0
        %903 = vmatpush2.bf16.xpose.msra.mxu0 0
        %904 = vmatprep.subr.bf16.mxu0 0
        %905 = vmatpush2.bf16.xpose.msra.mxu0 0
        %906 = vmatprep.subr.bf16.mxu0 0
        %907 = vmatpush2.bf16.xpose.msra.mxu0 0
        %908 = vmatprep.subr.bf16.mxu0 0
        %909 = vmatpush2.bf16.xpose.msra.mxu0 0
        %910 = vmatprep.subr.bf16.mxu0 0
        %911 = vmatpush2.bf16.xpose.msra.mxu0 0
        %912 = vmatprep.subr.bf16.mxu0 0
        %913 = vmatpush2.bf16.xpose.msra.mxu0 0
        %914 = vmatprep.subr.bf16.mxu0 0
        %915 = vmatpush2.bf16.xpose.msra.mxu0 0
        %916 = vmatprep.mubr.bf16.mxu0 0
        %917 = vmatmul.mubr.bf16.gmra.mxu0 %v879
        %v918 = vpop.f32.mrf.mxu0
        %v919 = vadd.f32 0.0, %v918
        %v920 = vpop.f32.mrf.mxu0
        %v921 = vpop.f32.mrf.mxu0
        %v922 = vpop.f32.mrf.mxu0
        %923 = vdwg.mxu0
        %v925 = vunpack.c.l.s4 1966171168
        %v926 = vunpack.c.0.s8 %v925
        %v927 = vlaneseq
        %v928 = vshrl.u32 %v927, 7
        %v929 = vsub.s32 %v926, %v928
        %v930 = vrot.slane %v797, %v929
        %v932 = vunpack.c.l.s4 1966171168
        %v933 = vunpack.c.0.s8 %v932
        %v934 = vlaneseq
        %v935 = vshrl.u32 %v934, 7
        %v936 = vsub.s32 %v933, %v935
        %v937 = vrot.slane %v930, %v936
        %938 = vrot.lane.b32.xlu0 %v937, 96
        %v939 = vpop.permute.xlu0 %938
        %v941 = vsel %vm815, %v797, 0
        %v944 = vsel %vm815, %v939, 0
        %946 = vmatprep.subr.bf16.mxu0 0
        %947 = vmatpush1.bf16.xpose.msra.mxu0 0
        %948 = vmatprep.subr.bf16.mxu0 0
        %949 = vmatpush1.bf16.xpose.msra.mxu0 0
        %950 = vmatprep.subr.bf16.mxu0 0
        %951 = vmatpush1.bf16.xpose.msra.mxu0 0
        %952 = vmatprep.subr.bf16.mxu0 0
        %953 = vmatpush1.bf16.xpose.msra.mxu0 0
        %954 = vmatprep.subr.bf16.mxu0 0
        %955 = vmatpush1.bf16.xpose.msra.mxu0 0
        %956 = vmatprep.subr.bf16.mxu0 0
        %957 = vmatpush1.bf16.xpose.msra.mxu0 0
        %958 = vmatprep.subr.bf16.mxu0 0
        %959 = vmatpush1.bf16.xpose.msra.mxu0 0
        %960 = vmatprep.subr.bf16.mxu0 0
        %961 = vmatpush1.bf16.xpose.msra.mxu0 %v944
        %962 = vmatprep.subr.bf16.mxu0 0
        %963 = vmatpush2.bf16.xpose.msra.mxu0 0
        %964 = vmatprep.subr.bf16.mxu0 0
        %965 = vmatpush2.bf16.xpose.msra.mxu0 0
        %966 = vmatprep.subr.bf16.mxu0 0
        %967 = vmatpush2.bf16.xpose.msra.mxu0 0
        %968 = vmatprep.subr.bf16.mxu0 0
        %969 = vmatpush2.bf16.xpose.msra.mxu0 0
        %970 = vmatprep.subr.bf16.mxu0 0
        %971 = vmatpush2.bf16.xpose.msra.mxu0 0
        %972 = vmatprep.subr.bf16.mxu0 0
        %973 = vmatpush2.bf16.xpose.msra.mxu0 0
        %974 = vmatprep.subr.bf16.mxu0 0
        %975 = vmatpush2.bf16.xpose.msra.mxu0 0
        %976 = vmatprep.subr.bf16.mxu0 0
        %977 = vmatpush2.bf16.xpose.msra.mxu0 0
        %978 = vmatprep.mubr.bf16.mxu0 0
        %979 = vmatmul.mubr.bf16.gmra.mxu0 %v941
        %v980 = vpop.f32.mrf.mxu0
        %v981 = vadd.f32 0.0, %v980
        %v982 = vpop.f32.mrf.mxu0
        %v983 = vpop.f32.mrf.mxu0
        %v984 = vpop.f32.mrf.mxu0
        %985 = vdwg.mxu0
        %v987 = vunpack.c.l.s4 1966171168
        %v988 = vunpack.c.0.s8 %v987
        %v989 = vlaneseq
        %v990 = vshrl.u32 %v989, 7
        %v991 = vsub.s32 %v988, %v990
        %v992 = vrot.slane %v798, %v991
        %v994 = vunpack.c.l.s4 1966171168
        %v995 = vunpack.c.0.s8 %v994
        %v996 = vlaneseq
        %v997 = vshrl.u32 %v996, 7
        %v998 = vsub.s32 %v995, %v997
        %v999 = vrot.slane %v992, %v998
        %1000 = vrot.lane.b32.xlu0 %v999, 96
        %v1001 = vpop.permute.xlu0 %1000
        %v1003 = vsel %vm815, %v798, 0
        %v1006 = vsel %vm815, %v1001, 0
        %1008 = vmatprep.subr.bf16.mxu0 0
        %1009 = vmatpush1.bf16.xpose.msra.mxu0 0
        %1010 = vmatprep.subr.bf16.mxu0 0
        %1011 = vmatpush1.bf16.xpose.msra.mxu0 0
        %1012 = vmatprep.subr.bf16.mxu0 0
        %1013 = vmatpush1.bf16.xpose.msra.mxu0 0
        %1014 = vmatprep.subr.bf16.mxu0 0
        %1015 = vmatpush1.bf16.xpose.msra.mxu0 0
        %1016 = vmatprep.subr.bf16.mxu0 0
        %1017 = vmatpush1.bf16.xpose.msra.mxu0 0
        %1018 = vmatprep.subr.bf16.mxu0 0
        %1019 = vmatpush1.bf16.xpose.msra.mxu0 0
        %1020 = vmatprep.subr.bf16.mxu0 0
        %1021 = vmatpush1.bf16.xpose.msra.mxu0 0
        %1022 = vmatprep.subr.bf16.mxu0 0
        %1023 = vmatpush1.bf16.xpose.msra.mxu0 %v1006
        %1024 = vmatprep.subr.bf16.mxu0 0
        %1025 = vmatpush2.bf16.xpose.msra.mxu0 0
        %1026 = vmatprep.subr.bf16.mxu0 0
        %1027 = vmatpush2.bf16.xpose.msra.mxu0 0
        %1028 = vmatprep.subr.bf16.mxu0 0
        %1029 = vmatpush2.bf16.xpose.msra.mxu0 0
        %1030 = vmatprep.subr.bf16.mxu0 0
        %1031 = vmatpush2.bf16.xpose.msra.mxu0 0
        %1032 = vmatprep.subr.bf16.mxu0 0
        %1033 = vmatpush2.bf16.xpose.msra.mxu0 0
        %1034 = vmatprep.subr.bf16.mxu0 0
        %1035 = vmatpush2.bf16.xpose.msra.mxu0 0
        %1036 = vmatprep.subr.bf16.mxu0 0
        %1037 = vmatpush2.bf16.xpose.msra.mxu0 0
        %1038 = vmatprep.subr.bf16.mxu0 0
        %1039 = vmatpush2.bf16.xpose.msra.mxu0 0
        %1040 = vmatprep.mubr.bf16.mxu0 0
        %1041 = vmatmul.mubr.bf16.gmra.mxu0 %v1003
        %v1042 = vpop.f32.mrf.mxu0
        %v1043 = vadd.f32 0.0, %v1042
        %v1044 = vpop.f32.mrf.mxu0
        %v1045 = vpop.f32.mrf.mxu0
        %v1046 = vpop.f32.mrf.mxu0
        %1047 = vdwg.mxu0
        %vm1048 = vcmask 9216
        %v1049 = vsel %vm1048, %v857, -inf
        %1050 = vmax.xlane.f32.xlu0 %v1049
        %v1051 = vpop.xlane.xlu0 %1050
        %v1052 = vsel %vm1048, %v919, -inf
        %1053 = vmax.xlane.f32.xlu0 %v1052
        %v1054 = vpop.xlane.xlu0 %1053
        %v1055 = vsel %vm1048, %v981, -inf
        %1056 = vmax.xlane.f32.xlu0 %v1055
        %v1057 = vpop.xlane.xlu0 %1056
        %v1058 = vsel %vm1048, %v1043, -inf
        %1059 = vmax.xlane.f32.xlu0 %v1058
        %v1060 = vpop.xlane.xlu0 %1059
        %v1061 = vsub.f32 %v857, %v1051
        %v1062 = vsub.f32 %v919, %v1054
        %v1063 = vsub.f32 %v981, %v1057
        %v1064 = vsub.f32 %v1043, %v1060
        %v1065 = vmul.f32 %v1061, 1.442695
        %v1066 = vpow.pop %v1065
        %v1067 = vmul.f32 %v1062, 1.442695
        %v1068 = vpow.pop %v1067
        %v1069 = vmul.f32 %v1063, 1.442695
        %v1070 = vpow.pop %v1069
        %v1071 = vmul.f32 %v1064, 1.442695
        %v1072 = vpow.pop %v1071
        %v1073 = vsel %vm1048, %v1066, 0.0
        %1074 = vadd.xlane.f32.xlu0 %v1073
        %v1075 = vpop.xlane.xlu0 %1074
        %v1076 = vsel %vm1048, %v1068, 0.0
        %1077 = vadd.xlane.f32.xlu0 %v1076
        %v1078 = vpop.xlane.xlu0 %1077
        %v1079 = vsel %vm1048, %v1070, 0.0
        %1080 = vadd.xlane.f32.xlu0 %v1079
        %v1081 = vpop.xlane.xlu0 %1080
        %v1082 = vsel %vm1048, %v1072, 0.0
        %1083 = vadd.xlane.f32.xlu0 %v1082
        %v1084 = vpop.xlane.xlu0 %1083
        %v1085 = vrcp.pop %v1075
        %v1086 = vrcp.pop %v1078
        %v1087 = vrcp.pop %v1081
        %v1088 = vrcp.pop %v1084
        %v1089 = vmul.f32 %v1066, %v1085
        %v1090 = vmul.f32 %v1068, %v1086
        %v1091 = vmul.f32 %v1070, %v1087
        %v1092 = vmul.f32 %v1072, %v1088
        %v1093 = vpack.c.bf16 %v1089, %v1089
        %v1094 = vpack.c.bf16 %v1090, %v1090
        %v1095 = vpack.c.bf16 %v1091, %v1091
        %v1096 = vpack.c.bf16 %v1092, %v1092
        %1097 = vrot.lane.b32.xlu0 %v812, 64
        %v1098 = vpop.permute.xlu0 %1097
        %vm1099 = vcmask 15360
        %v1101 = vsel %vm1099, %v1093, 0
        %vm1103 = vcmask 1040384
        %v1105 = vsel %vm1103, %v1098, 0
        %1107 = vmatprep.subr.bf16.mxu0 0
        %1108 = vmatpush1.bf16.msra.mxu0 0
        %1109 = vmatprep.subr.bf16.mxu0 0
        %1110 = vmatpush1.bf16.msra.mxu0 0
        %1111 = vmatprep.subr.bf16.mxu0 0
        %1112 = vmatpush1.bf16.msra.mxu0 0
        %1113 = vmatprep.subr.bf16.mxu0 0
        %1114 = vmatpush1.bf16.msra.mxu0 0
        %1115 = vmatprep.subr.bf16.mxu0 0
        %1116 = vmatpush1.bf16.msra.mxu0 0
        %1117 = vmatprep.subr.bf16.mxu0 0
        %1118 = vmatpush1.bf16.msra.mxu0 0
        %1119 = vmatprep.subr.bf16.mxu0 0
        %1120 = vmatpush1.bf16.msra.mxu0 0
        %1121 = vmatprep.subr.bf16.mxu0 0
        %1122 = vmatpush1.bf16.msra.mxu0 %v1105
        %1123 = vmatprep.subr.bf16.mxu0 0
        %1124 = vmatpush2.bf16.msra.mxu0 0
        %1125 = vmatprep.subr.bf16.mxu0 0
        %1126 = vmatpush2.bf16.msra.mxu0 0
        %1127 = vmatprep.subr.bf16.mxu0 0
        %1128 = vmatpush2.bf16.msra.mxu0 0
        %1129 = vmatprep.subr.bf16.mxu0 0
        %1130 = vmatpush2.bf16.msra.mxu0 0
        %1131 = vmatprep.subr.bf16.mxu0 0
        %1132 = vmatpush2.bf16.msra.mxu0 0
        %1133 = vmatprep.subr.bf16.mxu0 0
        %1134 = vmatpush2.bf16.msra.mxu0 0
        %1135 = vmatprep.subr.bf16.mxu0 0
        %1136 = vmatpush2.bf16.msra.mxu0 0
        %1137 = vmatprep.subr.bf16.mxu0 0
        %1138 = vmatpush2.bf16.msra.mxu0 0
        %1139 = vmatprep.mubr.bf16.mxu0 0
        %1140 = vmatmul.mubr.bf16.gmra.mxu0 %v1101
        %v1141 = vpop.f32.mrf.mxu0
        %v1142 = vadd.f32 0.0, %v1141
        %v1143 = vpop.f32.mrf.mxu0
        %v1144 = vpop.f32.mrf.mxu0
        %v1145 = vpop.f32.mrf.mxu0
        %1146 = vdwg.mxu0
        %1147 = vrot.lane.b32.xlu0 %v875, 64
        %v1148 = vpop.permute.xlu0 %1147
        %v1150 = vsel %vm1099, %v1094, 0
        %v1153 = vsel %vm1103, %v1148, 0
        %1155 = vmatprep.subr.bf16.mxu0 0
        %1156 = vmatpush1.bf16.msra.mxu0 0
        %1157 = vmatprep.subr.bf16.mxu0 0
        %1158 = vmatpush1.bf16.msra.mxu0 0
        %1159 = vmatprep.subr.bf16.mxu0 0
        %1160 = vmatpush1.bf16.msra.mxu0 0
        %1161 = vmatprep.subr.bf16.mxu0 0
        %1162 = vmatpush1.bf16.msra.mxu0 0
        %1163 = vmatprep.subr.bf16.mxu0 0
        %1164 = vmatpush1.bf16.msra.mxu0 0
        %1165 = vmatprep.subr.bf16.mxu0 0
        %1166 = vmatpush1.bf16.msra.mxu0 0
        %1167 = vmatprep.subr.bf16.mxu0 0
        %1168 = vmatpush1.bf16.msra.mxu0 0
        %1169 = vmatprep.subr.bf16.mxu0 0
        %1170 = vmatpush1.bf16.msra.mxu0 %v1153
        %1171 = vmatprep.subr.bf16.mxu0 0
        %1172 = vmatpush2.bf16.msra.mxu0 0
        %1173 = vmatprep.subr.bf16.mxu0 0
        %1174 = vmatpush2.bf16.msra.mxu0 0
        %1175 = vmatprep.subr.bf16.mxu0 0
        %1176 = vmatpush2.bf16.msra.mxu0 0
        %1177 = vmatprep.subr.bf16.mxu0 0
        %1178 = vmatpush2.bf16.msra.mxu0 0
        %1179 = vmatprep.subr.bf16.mxu0 0
        %1180 = vmatpush2.bf16.msra.mxu0 0
        %1181 = vmatprep.subr.bf16.mxu0 0
        %1182 = vmatpush2.bf16.msra.mxu0 0
        %1183 = vmatprep.subr.bf16.mxu0 0
        %1184 = vmatpush2.bf16.msra.mxu0 0
        %1185 = vmatprep.subr.bf16.mxu0 0
        %1186 = vmatpush2.bf16.msra.mxu0 0
        %1187 = vmatprep.mubr.bf16.mxu0 0
        %1188 = vmatmul.mubr.bf16.gmra.mxu0 %v1150
        %v1189 = vpop.f32.mrf.mxu0
        %v1190 = vadd.f32 0.0, %v1189
        %v1191 = vpop.f32.mrf.mxu0
        %v1192 = vpop.f32.mrf.mxu0
        %v1193 = vpop.f32.mrf.mxu0
        %1194 = vdwg.mxu0
        %1195 = vrot.lane.b32.xlu0 %v937, 64
        %v1196 = vpop.permute.xlu0 %1195
        %v1198 = vsel %vm1099, %v1095, 0
        %v1201 = vsel %vm1103, %v1196, 0
        %1203 = vmatprep.subr.bf16.mxu0 0
        %1204 = vmatpush1.bf16.msra.mxu0 0
        %1205 = vmatprep.subr.bf16.mxu0 0
        %1206 = vmatpush1.bf16.msra.mxu0 0
        %1207 = vmatprep.subr.bf16.mxu0 0
        %1208 = vmatpush1.bf16.msra.mxu0 0
        %1209 = vmatprep.subr.bf16.mxu0 0
        %1210 = vmatpush1.bf16.msra.mxu0 0
        %1211 = vmatprep.subr.bf16.mxu0 0
        %1212 = vmatpush1.bf16.msra.mxu0 0
        %1213 = vmatprep.subr.bf16.mxu0 0
        %1214 = vmatpush1.bf16.msra.mxu0 0
        %1215 = vmatprep.subr.bf16.mxu0 0
        %1216 = vmatpush1.bf16.msra.mxu0 0
        %1217 = vmatprep.subr.bf16.mxu0 0
        %1218 = vmatpush1.bf16.msra.mxu0 %v1201
        %1219 = vmatprep.subr.bf16.mxu0 0
        %1220 = vmatpush2.bf16.msra.mxu0 0
        %1221 = vmatprep.subr.bf16.mxu0 0
        %1222 = vmatpush2.bf16.msra.mxu0 0
        %1223 = vmatprep.subr.bf16.mxu0 0
        %1224 = vmatpush2.bf16.msra.mxu0 0
        %1225 = vmatprep.subr.bf16.mxu0 0
        %1226 = vmatpush2.bf16.msra.mxu0 0
        %1227 = vmatprep.subr.bf16.mxu0 0
        %1228 = vmatpush2.bf16.msra.mxu0 0
        %1229 = vmatprep.subr.bf16.mxu0 0
        %1230 = vmatpush2.bf16.msra.mxu0 0
        %1231 = vmatprep.subr.bf16.mxu0 0
        %1232 = vmatpush2.bf16.msra.mxu0 0
        %1233 = vmatprep.subr.bf16.mxu0 0
        %1234 = vmatpush2.bf16.msra.mxu0 0
        %1235 = vmatprep.mubr.bf16.mxu0 0
        %1236 = vmatmul.mubr.bf16.gmra.mxu0 %v1198
        %v1237 = vpop.f32.mrf.mxu0
        %v1238 = vadd.f32 0.0, %v1237
        %v1239 = vpop.f32.mrf.mxu0
        %v1240 = vpop.f32.mrf.mxu0
        %v1241 = vpop.f32.mrf.mxu0
        %1242 = vdwg.mxu0
        %1243 = vrot.lane.b32.xlu0 %v999, 64
        %v1244 = vpop.permute.xlu0 %1243
        %v1246 = vsel %vm1099, %v1096, 0
        %v1249 = vsel %vm1103, %v1244, 0
        %1251 = vmatprep.subr.bf16.mxu0 0
        %1252 = vmatpush1.bf16.msra.mxu0 0
        %1253 = vmatprep.subr.bf16.mxu0 0
        %1254 = vmatpush1.bf16.msra.mxu0 0
        %1255 = vmatprep.subr.bf16.mxu0 0
        %1256 = vmatpush1.bf16.msra.mxu0 0
        %1257 = vmatprep.subr.bf16.mxu0 0
        %1258 = vmatpush1.bf16.msra.mxu0 0
        %1259 = vmatprep.subr.bf16.mxu0 0
        %1260 = vmatpush1.bf16.msra.mxu0 0
        %1261 = vmatprep.subr.bf16.mxu0 0
        %1262 = vmatpush1.bf16.msra.mxu0 0
        %1263 = vmatprep.subr.bf16.mxu0 0
        %1264 = vmatpush1.bf16.msra.mxu0 0
        %1265 = vmatprep.subr.bf16.mxu0 0
        %1266 = vmatpush1.bf16.msra.mxu0 %v1249
        %1267 = vmatprep.subr.bf16.mxu0 0
        %1268 = vmatpush2.bf16.msra.mxu0 0
        %1269 = vmatprep.subr.bf16.mxu0 0
        %1270 = vmatpush2.bf16.msra.mxu0 0
        %1271 = vmatprep.subr.bf16.mxu0 0
        %1272 = vmatpush2.bf16.msra.mxu0 0
        %1273 = vmatprep.subr.bf16.mxu0 0
        %1274 = vmatpush2.bf16.msra.mxu0 0
        %1275 = vmatprep.subr.bf16.mxu0 0
        %1276 = vmatpush2.bf16.msra.mxu0 0
        %1277 = vmatprep.subr.bf16.mxu0 0
        %1278 = vmatpush2.bf16.msra.mxu0 0
        %1279 = vmatprep.subr.bf16.mxu0 0
        %1280 = vmatpush2.bf16.msra.mxu0 0
        %1281 = vmatprep.subr.bf16.mxu0 0
        %1282 = vmatpush2.bf16.msra.mxu0 0
        %1283 = vmatprep.mubr.bf16.mxu0 0
        %1284 = vmatmul.mubr.bf16.gmra.mxu0 %v1246
        %v1285 = vpop.f32.mrf.mxu0
        %v1286 = vadd.f32 0.0, %v1285
        %v1287 = vpop.f32.mrf.mxu0
        %v1288 = vpop.f32.mrf.mxu0
        %v1289 = vpop.f32.mrf.mxu0
        %1290 = vdwg.mxu0
        %1291 = vrot.lane.b32.xlu0 %v812, 120
        %v1292 = vpop.permute.xlu0 %1291
        %1293 = vrot.lane.b32.xlu0 %v812, 88
        %v1294 = vpop.permute.xlu0 %1293
        %v1296 = vsel %vm815, %v1292, 0
        %v1299 = vsel %vm815, %v1294, 0
        %1301 = vmatprep.subr.bf16.mxu0 0
        %1302 = vmatpush1.bf16.xpose.msra.mxu0 0
        %1303 = vmatprep.subr.bf16.mxu0 0
        %1304 = vmatpush1.bf16.xpose.msra.mxu0 0
        %1305 = vmatprep.subr.bf16.mxu0 0
        %1306 = vmatpush1.bf16.xpose.msra.mxu0 0
        %1307 = vmatprep.subr.bf16.mxu0 0
        %1308 = vmatpush1.bf16.xpose.msra.mxu0 0
        %1309 = vmatprep.subr.bf16.mxu0 0
        %1310 = vmatpush1.bf16.xpose.msra.mxu0 0
        %1311 = vmatprep.subr.bf16.mxu0 0
        %1312 = vmatpush1.bf16.xpose.msra.mxu0 0
        %1313 = vmatprep.subr.bf16.mxu0 0
        %1314 = vmatpush1.bf16.xpose.msra.mxu0 0
        %1315 = vmatprep.subr.bf16.mxu0 0
        %1316 = vmatpush1.bf16.xpose.msra.mxu0 %v1299
        %1317 = vmatprep.subr.bf16.mxu0 0
        %1318 = vmatpush2.bf16.xpose.msra.mxu0 0
        %1319 = vmatprep.subr.bf16.mxu0 0
        %1320 = vmatpush2.bf16.xpose.msra.mxu0 0
        %1321 = vmatprep.subr.bf16.mxu0 0
        %1322 = vmatpush2.bf16.xpose.msra.mxu0 0
        %1323 = vmatprep.subr.bf16.mxu0 0
        %1324 = vmatpush2.bf16.xpose.msra.mxu0 0
        %1325 = vmatprep.subr.bf16.mxu0 0
        %1326 = vmatpush2.bf16.xpose.msra.mxu0 0
        %1327 = vmatprep.subr.bf16.mxu0 0
        %1328 = vmatpush2.bf16.xpose.msra.mxu0 0
        %1329 = vmatprep.subr.bf16.mxu0 0
        %1330 = vmatpush2.bf16.xpose.msra.mxu0 0
        %1331 = vmatprep.subr.bf16.mxu0 0
        %1332 = vmatpush2.bf16.xpose.msra.mxu0 0
        %1333 = vmatprep.mubr.bf16.mxu0 0
        %1334 = vmatmul.mubr.bf16.gmra.mxu0 %v1296
        %v1335 = vpop.f32.mrf.mxu0
        %v1336 = vadd.f32 0.0, %v1335
        %v1337 = vpop.f32.mrf.mxu0
        %v1338 = vpop.f32.mrf.mxu0
        %v1339 = vpop.f32.mrf.mxu0
        %1340 = vdwg.mxu0
        %1341 = vrot.lane.b32.xlu0 %v875, 120
        %v1342 = vpop.permute.xlu0 %1341
        %1343 = vrot.lane.b32.xlu0 %v875, 88
        %v1344 = vpop.permute.xlu0 %1343
        %v1346 = vsel %vm815, %v1342, 0
        %v1349 = vsel %vm815, %v1344, 0
        %1351 = vmatprep.subr.bf16.mxu0 0
        %1352 = vmatpush1.bf16.xpose.msra.mxu0 0
        %1353 = vmatprep.subr.bf16.mxu0 0
        %1354 = vmatpush1.bf16.xpose.msra.mxu0 0
        %1355 = vmatprep.subr.bf16.mxu0 0
        %1356 = vmatpush1.bf16.xpose.msra.mxu0 0
        %1357 = vmatprep.subr.bf16.mxu0 0
        %1358 = vmatpush1.bf16.xpose.msra.mxu0 0
        %1359 = vmatprep.subr.bf16.mxu0 0
        %1360 = vmatpush1.bf16.xpose.msra.mxu0 0
        %1361 = vmatprep.subr.bf16.mxu0 0
        %1362 = vmatpush1.bf16.xpose.msra.mxu0 0
        %1363 = vmatprep.subr.bf16.mxu0 0
        %1364 = vmatpush1.bf16.xpose.msra.mxu0 0
        %1365 = vmatprep.subr.bf16.mxu0 0
        %1366 = vmatpush1.bf16.xpose.msra.mxu0 %v1349
        %1367 = vmatprep.subr.bf16.mxu0 0
        %1368 = vmatpush2.bf16.xpose.msra.mxu0 0
        %1369 = vmatprep.subr.bf16.mxu0 0
        %1370 = vmatpush2.bf16.xpose.msra.mxu0 0
        %1371 = vmatprep.subr.bf16.mxu0 0
        %1372 = vmatpush2.bf16.xpose.msra.mxu0 0
        %1373 = vmatprep.subr.bf16.mxu0 0
        %1374 = vmatpush2.bf16.xpose.msra.mxu0 0
        %1375 = vmatprep.subr.bf16.mxu0 0
        %1376 = vmatpush2.bf16.xpose.msra.mxu0 0
        %1377 = vmatprep.subr.bf16.mxu0 0
        %1378 = vmatpush2.bf16.xpose.msra.mxu0 0
        %1379 = vmatprep.subr.bf16.mxu0 0
        %1380 = vmatpush2.bf16.xpose.msra.mxu0 0
        %1381 = vmatprep.subr.bf16.mxu0 0
        %1382 = vmatpush2.bf16.xpose.msra.mxu0 0
        %1383 = vmatprep.mubr.bf16.mxu0 0
        %1384 = vmatmul.mubr.bf16.gmra.mxu0 %v1346
        %v1385 = vpop.f32.mrf.mxu0
        %v1386 = vadd.f32 0.0, %v1385
        %v1387 = vpop.f32.mrf.mxu0
        %v1388 = vpop.f32.mrf.mxu0
        %v1389 = vpop.f32.mrf.mxu0
        %1390 = vdwg.mxu0
        %1391 = vrot.lane.b32.xlu0 %v937, 120
        %v1392 = vpop.permute.xlu0 %1391
        %1393 = vrot.lane.b32.xlu0 %v937, 88
        %v1394 = vpop.permute.xlu0 %1393
        %v1396 = vsel %vm815, %v1392, 0
        %v1399 = vsel %vm815, %v1394, 0
        %1401 = vmatprep.subr.bf16.mxu0 0
        %1402 = vmatpush1.bf16.xpose.msra.mxu0 0
        %1403 = vmatprep.subr.bf16.mxu0 0
        %1404 = vmatpush1.bf16.xpose.msra.mxu0 0
        %1405 = vmatprep.subr.bf16.mxu0 0
        %1406 = vmatpush1.bf16.xpose.msra.mxu0 0
        %1407 = vmatprep.subr.bf16.mxu0 0
        %1408 = vmatpush1.bf16.xpose.msra.mxu0 0
        %1409 = vmatprep.subr.bf16.mxu0 0
        %1410 = vmatpush1.bf16.xpose.msra.mxu0 0
        %1411 = vmatprep.subr.bf16.mxu0 0
        %1412 = vmatpush1.bf16.xpose.msra.mxu0 0
        %1413 = vmatprep.subr.bf16.mxu0 0
        %1414 = vmatpush1.bf16.xpose.msra.mxu0 0
        %1415 = vmatprep.subr.bf16.mxu0 0
        %1416 = vmatpush1.bf16.xpose.msra.mxu0 %v1399
        %1417 = vmatprep.subr.bf16.mxu0 0
        %1418 = vmatpush2.bf16.xpose.msra.mxu0 0
        %1419 = vmatprep.subr.bf16.mxu0 0
        %1420 = vmatpush2.bf16.xpose.msra.mxu0 0
        %1421 = vmatprep.subr.bf16.mxu0 0
        %1422 = vmatpush2.bf16.xpose.msra.mxu0 0
        %1423 = vmatprep.subr.bf16.mxu0 0
        %1424 = vmatpush2.bf16.xpose.msra.mxu0 0
        %1425 = vmatprep.subr.bf16.mxu0 0
        %1426 = vmatpush2.bf16.xpose.msra.mxu0 0
        %1427 = vmatprep.subr.bf16.mxu0 0
        %1428 = vmatpush2.bf16.xpose.msra.mxu0 0
        %1429 = vmatprep.subr.bf16.mxu0 0
        %1430 = vmatpush2.bf16.xpose.msra.mxu0 0
        %1431 = vmatprep.subr.bf16.mxu0 0
        %1432 = vmatpush2.bf16.xpose.msra.mxu0 0
        %1433 = vmatprep.mubr.bf16.mxu0 0
        %1434 = vmatmul.mubr.bf16.gmra.mxu0 %v1396
        %v1435 = vpop.f32.mrf.mxu0
        %v1436 = vadd.f32 0.0, %v1435
        %v1437 = vpop.f32.mrf.mxu0
        %v1438 = vpop.f32.mrf.mxu0
        %v1439 = vpop.f32.mrf.mxu0
        %1440 = vdwg.mxu0
        %1441 = vrot.lane.b32.xlu0 %v999, 120
        %v1442 = vpop.permute.xlu0 %1441
        %1443 = vrot.lane.b32.xlu0 %v999, 88
        %v1444 = vpop.permute.xlu0 %1443
        %v1446 = vsel %vm815, %v1442, 0
        %v1449 = vsel %vm815, %v1444, 0
        %1451 = vmatprep.subr.bf16.mxu0 0
        %1452 = vmatpush1.bf16.xpose.msra.mxu0 0
        %1453 = vmatprep.subr.bf16.mxu0 0
        %1454 = vmatpush1.bf16.xpose.msra.mxu0 0
        %1455 = vmatprep.subr.bf16.mxu0 0
        %1456 = vmatpush1.bf16.xpose.msra.mxu0 0
        %1457 = vmatprep.subr.bf16.mxu0 0
        %1458 = vmatpush1.bf16.xpose.msra.mxu0 0
        %1459 = vmatprep.subr.bf16.mxu0 0
        %1460 = vmatpush1.bf16.xpose.msra.mxu0 0
        %1461 = vmatprep.subr.bf16.mxu0 0
        %1462 = vmatpush1.bf16.xpose.msra.mxu0 0
        %1463 = vmatprep.subr.bf16.mxu0 0
        %1464 = vmatpush1.bf16.xpose.msra.mxu0 0
        %1465 = vmatprep.subr.bf16.mxu0 0
        %1466 = vmatpush1.bf16.xpose.msra.mxu0 %v1449
        %1467 = vmatprep.subr.bf16.mxu0 0
        %1468 = vmatpush2.bf16.xpose.msra.mxu0 0
        %1469 = vmatprep.subr.bf16.mxu0 0
        %1470 = vmatpush2.bf16.xpose.msra.mxu0 0
        %1471 = vmatprep.subr.bf16.mxu0 0
        %1472 = vmatpush2.bf16.xpose.msra.mxu0 0
        %1473 = vmatprep.subr.bf16.mxu0 0
        %1474 = vmatpush2.bf16.xpose.msra.mxu0 0
        %1475 = vmatprep.subr.bf16.mxu0 0
        %1476 = vmatpush2.bf16.xpose.msra.mxu0 0
        %1477 = vmatprep.subr.bf16.mxu0 0
        %1478 = vmatpush2.bf16.xpose.msra.mxu0 0
        %1479 = vmatprep.subr.bf16.mxu0 0
        %1480 = vmatpush2.bf16.xpose.msra.mxu0 0
        %1481 = vmatprep.subr.bf16.mxu0 0
        %1482 = vmatpush2.bf16.xpose.msra.mxu0 0
        %1483 = vmatprep.mubr.bf16.mxu0 0
        %1484 = vmatmul.mubr.bf16.gmra.mxu0 %v1446
        %v1485 = vpop.f32.mrf.mxu0
        %v1486 = vadd.f32 0.0, %v1485
        %v1487 = vpop.f32.mrf.mxu0
        %v1488 = vpop.f32.mrf.mxu0
        %v1489 = vpop.f32.mrf.mxu0
        %1490 = vdwg.mxu0
        %v1491 = vsel %vm1048, %v1336, -inf
        %1492 = vmax.xlane.f32.xlu0 %v1491
        %v1493 = vpop.xlane.xlu0 %1492
        %v1494 = vsel %vm1048, %v1386, -inf
        %1495 = vmax.xlane.f32.xlu0 %v1494
        %v1496 = vpop.xlane.xlu0 %1495
        %v1497 = vsel %vm1048, %v1436, -inf
        %1498 = vmax.xlane.f32.xlu0 %v1497
        %v1499 = vpop.xlane.xlu0 %1498
        %v1500 = vsel %vm1048, %v1486, -inf
        %1501 = vmax.xlane.f32.xlu0 %v1500
        %v1502 = vpop.xlane.xlu0 %1501
        %v1503 = vsub.f32 %v1336, %v1493
        %v1504 = vsub.f32 %v1386, %v1496
        %v1505 = vsub.f32 %v1436, %v1499
        %v1506 = vsub.f32 %v1486, %v1502
        %v1507 = vmul.f32 %v1503, 1.442695
        %v1508 = vpow.pop %v1507
        %v1509 = vmul.f32 %v1504, 1.442695
        %v1510 = vpow.pop %v1509
        %v1511 = vmul.f32 %v1505, 1.442695
        %v1512 = vpow.pop %v1511
        %v1513 = vmul.f32 %v1506, 1.442695
        %v1514 = vpow.pop %v1513
        %v1515 = vsel %vm1048, %v1508, 0.0
        %1516 = vadd.xlane.f32.xlu0 %v1515
        %v1517 = vpop.xlane.xlu0 %1516
        %v1518 = vsel %vm1048, %v1510, 0.0
        %1519 = vadd.xlane.f32.xlu0 %v1518
        %v1520 = vpop.xlane.xlu0 %1519
        %v1521 = vsel %vm1048, %v1512, 0.0
        %1522 = vadd.xlane.f32.xlu0 %v1521
        %v1523 = vpop.xlane.xlu0 %1522
        %v1524 = vsel %vm1048, %v1514, 0.0
        %1525 = vadd.xlane.f32.xlu0 %v1524
        %v1526 = vpop.xlane.xlu0 %1525
        %v1527 = vrcp.pop %v1517
        %v1528 = vrcp.pop %v1520
        %v1529 = vrcp.pop %v1523
        %v1530 = vrcp.pop %v1526
        %v1531 = vmul.f32 %v1508, %v1527
        %v1532 = vmul.f32 %v1510, %v1528
        %v1533 = vmul.f32 %v1512, %v1529
        %v1534 = vmul.f32 %v1514, %v1530
        %v1535 = vpack.c.bf16 %v1531, %v1531
        %v1536 = vpack.c.bf16 %v1532, %v1532
        %v1537 = vpack.c.bf16 %v1533, %v1533
        %v1538 = vpack.c.bf16 %v1534, %v1534
        %1539 = vrot.lane.b32.xlu0 %v812, 56
        %v1540 = vpop.permute.xlu0 %1539
        %v1542 = vsel %vm1099, %v1535, 0
        %v1545 = vsel %vm1103, %v1540, 0
        %1547 = vmatprep.subr.bf16.mxu0 0
        %1548 = vmatpush1.bf16.msra.mxu0 0
        %1549 = vmatprep.subr.bf16.mxu0 0
        %1550 = vmatpush1.bf16.msra.mxu0 0
        %1551 = vmatprep.subr.bf16.mxu0 0
        %1552 = vmatpush1.bf16.msra.mxu0 0
        %1553 = vmatprep.subr.bf16.mxu0 0
        %1554 = vmatpush1.bf16.msra.mxu0 0
        %1555 = vmatprep.subr.bf16.mxu0 0
        %1556 = vmatpush1.bf16.msra.mxu0 0
        %1557 = vmatprep.subr.bf16.mxu0 0
        %1558 = vmatpush1.bf16.msra.mxu0 0
        %1559 = vmatprep.subr.bf16.mxu0 0
        %1560 = vmatpush1.bf16.msra.mxu0 0
        %1561 = vmatprep.subr.bf16.mxu0 0
        %1562 = vmatpush1.bf16.msra.mxu0 %v1545
        %1563 = vmatprep.subr.bf16.mxu0 0
        %1564 = vmatpush2.bf16.msra.mxu0 0
        %1565 = vmatprep.subr.bf16.mxu0 0
        %1566 = vmatpush2.bf16.msra.mxu0 0
        %1567 = vmatprep.subr.bf16.mxu0 0
        %1568 = vmatpush2.bf16.msra.mxu0 0
        %1569 = vmatprep.subr.bf16.mxu0 0
        %1570 = vmatpush2.bf16.msra.mxu0 0
        %1571 = vmatprep.subr.bf16.mxu0 0
        %1572 = vmatpush2.bf16.msra.mxu0 0
        %1573 = vmatprep.subr.bf16.mxu0 0
        %1574 = vmatpush2.bf16.msra.mxu0 0
        %1575 = vmatprep.subr.bf16.mxu0 0
        %1576 = vmatpush2.bf16.msra.mxu0 0
        %1577 = vmatprep.subr.bf16.mxu0 0
        %1578 = vmatpush2.bf16.msra.mxu0 0
        %1579 = vmatprep.mubr.bf16.mxu0 0
        %1580 = vmatmul.mubr.bf16.gmra.mxu0 %v1542
        %v1581 = vpop.f32.mrf.mxu0
        %v1582 = vadd.f32 0.0, %v1581
        %v1583 = vpop.f32.mrf.mxu0
        %v1584 = vpop.f32.mrf.mxu0
        %v1585 = vpop.f32.mrf.mxu0
        %1586 = vdwg.mxu0
        %1587 = vrot.lane.b32.xlu0 %v875, 56
        %v1588 = vpop.permute.xlu0 %1587
        %v1590 = vsel %vm1099, %v1536, 0
        %v1593 = vsel %vm1103, %v1588, 0
        %1595 = vmatprep.subr.bf16.mxu0 0
        %1596 = vmatpush1.bf16.msra.mxu0 0
        %1597 = vmatprep.subr.bf16.mxu0 0
        %1598 = vmatpush1.bf16.msra.mxu0 0
        %1599 = vmatprep.subr.bf16.mxu0 0
        %1600 = vmatpush1.bf16.msra.mxu0 0
        %1601 = vmatprep.subr.bf16.mxu0 0
        %1602 = vmatpush1.bf16.msra.mxu0 0
        %1603 = vmatprep.subr.bf16.mxu0 0
        %1604 = vmatpush1.bf16.msra.mxu0 0
        %1605 = vmatprep.subr.bf16.mxu0 0
        %1606 = vmatpush1.bf16.msra.mxu0 0
        %1607 = vmatprep.subr.bf16.mxu0 0
        %1608 = vmatpush1.bf16.msra.mxu0 0
        %1609 = vmatprep.subr.bf16.mxu0 0
        %1610 = vmatpush1.bf16.msra.mxu0 %v1593
        %1611 = vmatprep.subr.bf16.mxu0 0
        %1612 = vmatpush2.bf16.msra.mxu0 0
        %1613 = vmatprep.subr.bf16.mxu0 0
        %1614 = vmatpush2.bf16.msra.mxu0 0
        %1615 = vmatprep.subr.bf16.mxu0 0
        %1616 = vmatpush2.bf16.msra.mxu0 0
        %1617 = vmatprep.subr.bf16.mxu0 0
        %1618 = vmatpush2.bf16.msra.mxu0 0
        %1619 = vmatprep.subr.bf16.mxu0 0
        %1620 = vmatpush2.bf16.msra.mxu0 0
        %1621 = vmatprep.subr.bf16.mxu0 0
        %1622 = vmatpush2.bf16.msra.mxu0 0
        %1623 = vmatprep.subr.bf16.mxu0 0
        %1624 = vmatpush2.bf16.msra.mxu0 0
        %1625 = vmatprep.subr.bf16.mxu0 0
        %1626 = vmatpush2.bf16.msra.mxu0 0
        %1627 = vmatprep.mubr.bf16.mxu0 0
        %1628 = vmatmul.mubr.bf16.gmra.mxu0 %v1590
        %v1629 = vpop.f32.mrf.mxu0
        %v1630 = vadd.f32 0.0, %v1629
        %v1631 = vpop.f32.mrf.mxu0
        %v1632 = vpop.f32.mrf.mxu0
        %v1633 = vpop.f32.mrf.mxu0
        %1634 = vdwg.mxu0
        %1635 = vrot.lane.b32.xlu0 %v937, 56
        %v1636 = vpop.permute.xlu0 %1635
        %v1638 = vsel %vm1099, %v1537, 0
        %v1641 = vsel %vm1103, %v1636, 0
        %1643 = vmatprep.subr.bf16.mxu0 0
        %1644 = vmatpush1.bf16.msra.mxu0 0
        %1645 = vmatprep.subr.bf16.mxu0 0
        %1646 = vmatpush1.bf16.msra.mxu0 0
        %1647 = vmatprep.subr.bf16.mxu0 0
        %1648 = vmatpush1.bf16.msra.mxu0 0
        %1649 = vmatprep.subr.bf16.mxu0 0
        %1650 = vmatpush1.bf16.msra.mxu0 0
        %1651 = vmatprep.subr.bf16.mxu0 0
        %1652 = vmatpush1.bf16.msra.mxu0 0
        %1653 = vmatprep.subr.bf16.mxu0 0
        %1654 = vmatpush1.bf16.msra.mxu0 0
        %1655 = vmatprep.subr.bf16.mxu0 0
        %1656 = vmatpush1.bf16.msra.mxu0 0
        %1657 = vmatprep.subr.bf16.mxu0 0
        %1658 = vmatpush1.bf16.msra.mxu0 %v1641
        %1659 = vmatprep.subr.bf16.mxu0 0
        %1660 = vmatpush2.bf16.msra.mxu0 0
        %1661 = vmatprep.subr.bf16.mxu0 0
        %1662 = vmatpush2.bf16.msra.mxu0 0
        %1663 = vmatprep.subr.bf16.mxu0 0
        %1664 = vmatpush2.bf16.msra.mxu0 0
        %1665 = vmatprep.subr.bf16.mxu0 0
        %1666 = vmatpush2.bf16.msra.mxu0 0
        %1667 = vmatprep.subr.bf16.mxu0 0
        %1668 = vmatpush2.bf16.msra.mxu0 0
        %1669 = vmatprep.subr.bf16.mxu0 0
        %1670 = vmatpush2.bf16.msra.mxu0 0
        %1671 = vmatprep.subr.bf16.mxu0 0
        %1672 = vmatpush2.bf16.msra.mxu0 0
        %1673 = vmatprep.subr.bf16.mxu0 0
        %1674 = vmatpush2.bf16.msra.mxu0 0
        %1675 = vmatprep.mubr.bf16.mxu0 0
        %1676 = vmatmul.mubr.bf16.gmra.mxu0 %v1638
        %v1677 = vpop.f32.mrf.mxu0
        %v1678 = vadd.f32 0.0, %v1677
        %v1679 = vpop.f32.mrf.mxu0
        %v1680 = vpop.f32.mrf.mxu0
        %v1681 = vpop.f32.mrf.mxu0
        %1682 = vdwg.mxu0
        %1683 = vrot.lane.b32.xlu0 %v999, 56
        %v1684 = vpop.permute.xlu0 %1683
        %v1686 = vsel %vm1099, %v1538, 0
        %v1689 = vsel %vm1103, %v1684, 0
        %1691 = vmatprep.subr.bf16.mxu0 0
        %1692 = vmatpush1.bf16.msra.mxu0 0
        %1693 = vmatprep.subr.bf16.mxu0 0
        %1694 = vmatpush1.bf16.msra.mxu0 0
        %1695 = vmatprep.subr.bf16.mxu0 0
        %1696 = vmatpush1.bf16.msra.mxu0 0
        %1697 = vmatprep.subr.bf16.mxu0 0
        %1698 = vmatpush1.bf16.msra.mxu0 0
        %1699 = vmatprep.subr.bf16.mxu0 0
        %1700 = vmatpush1.bf16.msra.mxu0 0
        %1701 = vmatprep.subr.bf16.mxu0 0
        %1702 = vmatpush1.bf16.msra.mxu0 0
        %1703 = vmatprep.subr.bf16.mxu0 0
        %1704 = vmatpush1.bf16.msra.mxu0 0
        %1705 = vmatprep.subr.bf16.mxu0 0
        %1706 = vmatpush1.bf16.msra.mxu0 %v1689
        %1707 = vmatprep.subr.bf16.mxu0 0
        %1708 = vmatpush2.bf16.msra.mxu0 0
        %1709 = vmatprep.subr.bf16.mxu0 0
        %1710 = vmatpush2.bf16.msra.mxu0 0
        %1711 = vmatprep.subr.bf16.mxu0 0
        %1712 = vmatpush2.bf16.msra.mxu0 0
        %1713 = vmatprep.subr.bf16.mxu0 0
        %1714 = vmatpush2.bf16.msra.mxu0 0
        %1715 = vmatprep.subr.bf16.mxu0 0
        %1716 = vmatpush2.bf16.msra.mxu0 0
        %1717 = vmatprep.subr.bf16.mxu0 0
        %1718 = vmatpush2.bf16.msra.mxu0 0
        %1719 = vmatprep.subr.bf16.mxu0 0
        %1720 = vmatpush2.bf16.msra.mxu0 0
        %1721 = vmatprep.subr.bf16.mxu0 0
        %1722 = vmatpush2.bf16.msra.mxu0 0
        %1723 = vmatprep.mubr.bf16.mxu0 0
        %1724 = vmatmul.mubr.bf16.gmra.mxu0 %v1686
        %v1725 = vpop.f32.mrf.mxu0
        %v1726 = vadd.f32 0.0, %v1725
        %v1727 = vpop.f32.mrf.mxu0
        %v1728 = vpop.f32.mrf.mxu0
        %v1729 = vpop.f32.mrf.mxu0
        %1730 = vdwg.mxu0
        %1731 = vrot.lane.b32.xlu0 %v812, 112
        %v1732 = vpop.permute.xlu0 %1731
        %1733 = vrot.lane.b32.xlu0 %v812, 80
        %v1734 = vpop.permute.xlu0 %1733
        %v1736 = vsel %vm815, %v1732, 0
        %v1739 = vsel %vm815, %v1734, 0
        %1741 = vmatprep.subr.bf16.mxu0 0
        %1742 = vmatpush1.bf16.xpose.msra.mxu0 0
        %1743 = vmatprep.subr.bf16.mxu0 0
        %1744 = vmatpush1.bf16.xpose.msra.mxu0 0
        %1745 = vmatprep.subr.bf16.mxu0 0
        %1746 = vmatpush1.bf16.xpose.msra.mxu0 0
        %1747 = vmatprep.subr.bf16.mxu0 0
        %1748 = vmatpush1.bf16.xpose.msra.mxu0 0
        %1749 = vmatprep.subr.bf16.mxu0 0
        %1750 = vmatpush1.bf16.xpose.msra.mxu0 0
        %1751 = vmatprep.subr.bf16.mxu0 0
        %1752 = vmatpush1.bf16.xpose.msra.mxu0 0
        %1753 = vmatprep.subr.bf16.mxu0 0
        %1754 = vmatpush1.bf16.xpose.msra.mxu0 0
        %1755 = vmatprep.subr.bf16.mxu0 0
        %1756 = vmatpush1.bf16.xpose.msra.mxu0 %v1739
        %1757 = vmatprep.subr.bf16.mxu0 0
        %1758 = vmatpush2.bf16.xpose.msra.mxu0 0
        %1759 = vmatprep.subr.bf16.mxu0 0
        %1760 = vmatpush2.bf16.xpose.msra.mxu0 0
        %1761 = vmatprep.subr.bf16.mxu0 0
        %1762 = vmatpush2.bf16.xpose.msra.mxu0 0
        %1763 = vmatprep.subr.bf16.mxu0 0
        %1764 = vmatpush2.bf16.xpose.msra.mxu0 0
        %1765 = vmatprep.subr.bf16.mxu0 0
        %1766 = vmatpush2.bf16.xpose.msra.mxu0 0
        %1767 = vmatprep.subr.bf16.mxu0 0
        %1768 = vmatpush2.bf16.xpose.msra.mxu0 0
        %1769 = vmatprep.subr.bf16.mxu0 0
        %1770 = vmatpush2.bf16.xpose.msra.mxu0 0
        %1771 = vmatprep.subr.bf16.mxu0 0
        %1772 = vmatpush2.bf16.xpose.msra.mxu0 0
        %1773 = vmatprep.mubr.bf16.mxu0 0
        %1774 = vmatmul.mubr.bf16.gmra.mxu0 %v1736
        %v1775 = vpop.f32.mrf.mxu0
        %v1776 = vadd.f32 0.0, %v1775
        %v1777 = vpop.f32.mrf.mxu0
        %v1778 = vpop.f32.mrf.mxu0
        %v1779 = vpop.f32.mrf.mxu0
        %1780 = vdwg.mxu0
        %1781 = vrot.lane.b32.xlu0 %v875, 112
        %v1782 = vpop.permute.xlu0 %1781
        %1783 = vrot.lane.b32.xlu0 %v875, 80
        %v1784 = vpop.permute.xlu0 %1783
        %v1786 = vsel %vm815, %v1782, 0
        %v1789 = vsel %vm815, %v1784, 0
        %1791 = vmatprep.subr.bf16.mxu0 0
        %1792 = vmatpush1.bf16.xpose.msra.mxu0 0
        %1793 = vmatprep.subr.bf16.mxu0 0
        %1794 = vmatpush1.bf16.xpose.msra.mxu0 0
        %1795 = vmatprep.subr.bf16.mxu0 0
        %1796 = vmatpush1.bf16.xpose.msra.mxu0 0
        %1797 = vmatprep.subr.bf16.mxu0 0
        %1798 = vmatpush1.bf16.xpose.msra.mxu0 0
        %1799 = vmatprep.subr.bf16.mxu0 0
        %1800 = vmatpush1.bf16.xpose.msra.mxu0 0
        %1801 = vmatprep.subr.bf16.mxu0 0
        %1802 = vmatpush1.bf16.xpose.msra.mxu0 0
        %1803 = vmatprep.subr.bf16.mxu0 0
        %1804 = vmatpush1.bf16.xpose.msra.mxu0 0
        %1805 = vmatprep.subr.bf16.mxu0 0
        %1806 = vmatpush1.bf16.xpose.msra.mxu0 %v1789
        %1807 = vmatprep.subr.bf16.mxu0 0
        %1808 = vmatpush2.bf16.xpose.msra.mxu0 0
        %1809 = vmatprep.subr.bf16.mxu0 0
        %1810 = vmatpush2.bf16.xpose.msra.mxu0 0
        %1811 = vmatprep.subr.bf16.mxu0 0
        %1812 = vmatpush2.bf16.xpose.msra.mxu0 0
        %1813 = vmatprep.subr.bf16.mxu0 0
        %1814 = vmatpush2.bf16.xpose.msra.mxu0 0
        %1815 = vmatprep.subr.bf16.mxu0 0
        %1816 = vmatpush2.bf16.xpose.msra.mxu0 0
        %1817 = vmatprep.subr.bf16.mxu0 0
        %1818 = vmatpush2.bf16.xpose.msra.mxu0 0
        %1819 = vmatprep.subr.bf16.mxu0 0
        %1820 = vmatpush2.bf16.xpose.msra.mxu0 0
        %1821 = vmatprep.subr.bf16.mxu0 0
        %1822 = vmatpush2.bf16.xpose.msra.mxu0 0
        %1823 = vmatprep.mubr.bf16.mxu0 0
        %1824 = vmatmul.mubr.bf16.gmra.mxu0 %v1786
        %v1825 = vpop.f32.mrf.mxu0
        %v1826 = vadd.f32 0.0, %v1825
        %v1827 = vpop.f32.mrf.mxu0
        %v1828 = vpop.f32.mrf.mxu0
        %v1829 = vpop.f32.mrf.mxu0
        %1830 = vdwg.mxu0
        %1831 = vrot.lane.b32.xlu0 %v937, 112
        %v1832 = vpop.permute.xlu0 %1831
        %1833 = vrot.lane.b32.xlu0 %v937, 80
        %v1834 = vpop.permute.xlu0 %1833
        %v1836 = vsel %vm815, %v1832, 0
        %v1839 = vsel %vm815, %v1834, 0
        %1841 = vmatprep.subr.bf16.mxu0 0
        %1842 = vmatpush1.bf16.xpose.msra.mxu0 0
        %1843 = vmatprep.subr.bf16.mxu0 0
        %1844 = vmatpush1.bf16.xpose.msra.mxu0 0
        %1845 = vmatprep.subr.bf16.mxu0 0
        %1846 = vmatpush1.bf16.xpose.msra.mxu0 0
        %1847 = vmatprep.subr.bf16.mxu0 0
        %1848 = vmatpush1.bf16.xpose.msra.mxu0 0
        %1849 = vmatprep.subr.bf16.mxu0 0
        %1850 = vmatpush1.bf16.xpose.msra.mxu0 0
        %1851 = vmatprep.subr.bf16.mxu0 0
        %1852 = vmatpush1.bf16.xpose.msra.mxu0 0
        %1853 = vmatprep.subr.bf16.mxu0 0
        %1854 = vmatpush1.bf16.xpose.msra.mxu0 0
        %1855 = vmatprep.subr.bf16.mxu0 0
        %1856 = vmatpush1.bf16.xpose.msra.mxu0 %v1839
        %1857 = vmatprep.subr.bf16.mxu0 0
        %1858 = vmatpush2.bf16.xpose.msra.mxu0 0
        %1859 = vmatprep.subr.bf16.mxu0 0
        %1860 = vmatpush2.bf16.xpose.msra.mxu0 0
        %1861 = vmatprep.subr.bf16.mxu0 0
        %1862 = vmatpush2.bf16.xpose.msra.mxu0 0
        %1863 = vmatprep.subr.bf16.mxu0 0
        %1864 = vmatpush2.bf16.xpose.msra.mxu0 0
        %1865 = vmatprep.subr.bf16.mxu0 0
        %1866 = vmatpush2.bf16.xpose.msra.mxu0 0
        %1867 = vmatprep.subr.bf16.mxu0 0
        %1868 = vmatpush2.bf16.xpose.msra.mxu0 0
        %1869 = vmatprep.subr.bf16.mxu0 0
        %1870 = vmatpush2.bf16.xpose.msra.mxu0 0
        %1871 = vmatprep.subr.bf16.mxu0 0
        %1872 = vmatpush2.bf16.xpose.msra.mxu0 0
        %1873 = vmatprep.mubr.bf16.mxu0 0
        %1874 = vmatmul.mubr.bf16.gmra.mxu0 %v1836
        %v1875 = vpop.f32.mrf.mxu0
        %v1876 = vadd.f32 0.0, %v1875
        %v1877 = vpop.f32.mrf.mxu0
        %v1878 = vpop.f32.mrf.mxu0
        %v1879 = vpop.f32.mrf.mxu0
        %1880 = vdwg.mxu0
        %1881 = vrot.lane.b32.xlu0 %v999, 112
        %v1882 = vpop.permute.xlu0 %1881
        %1883 = vrot.lane.b32.xlu0 %v999, 80
        %v1884 = vpop.permute.xlu0 %1883
        %v1886 = vsel %vm815, %v1882, 0
        %v1889 = vsel %vm815, %v1884, 0
        %1891 = vmatprep.subr.bf16.mxu0 0
        %1892 = vmatpush1.bf16.xpose.msra.mxu0 0
        %1893 = vmatprep.subr.bf16.mxu0 0
        %1894 = vmatpush1.bf16.xpose.msra.mxu0 0
        %1895 = vmatprep.subr.bf16.mxu0 0
        %1896 = vmatpush1.bf16.xpose.msra.mxu0 0
        %1897 = vmatprep.subr.bf16.mxu0 0
        %1898 = vmatpush1.bf16.xpose.msra.mxu0 0
        %1899 = vmatprep.subr.bf16.mxu0 0
        %1900 = vmatpush1.bf16.xpose.msra.mxu0 0
        %1901 = vmatprep.subr.bf16.mxu0 0
        %1902 = vmatpush1.bf16.xpose.msra.mxu0 0
        %1903 = vmatprep.subr.bf16.mxu0 0
        %1904 = vmatpush1.bf16.xpose.msra.mxu0 0
        %1905 = vmatprep.subr.bf16.mxu0 0
        %1906 = vmatpush1.bf16.xpose.msra.mxu0 %v1889
        %1907 = vmatprep.subr.bf16.mxu0 0
        %1908 = vmatpush2.bf16.xpose.msra.mxu0 0
        %1909 = vmatprep.subr.bf16.mxu0 0
        %1910 = vmatpush2.bf16.xpose.msra.mxu0 0
        %1911 = vmatprep.subr.bf16.mxu0 0
        %1912 = vmatpush2.bf16.xpose.msra.mxu0 0
        %1913 = vmatprep.subr.bf16.mxu0 0
        %1914 = vmatpush2.bf16.xpose.msra.mxu0 0
        %1915 = vmatprep.subr.bf16.mxu0 0
        %1916 = vmatpush2.bf16.xpose.msra.mxu0 0
        %1917 = vmatprep.subr.bf16.mxu0 0
        %1918 = vmatpush2.bf16.xpose.msra.mxu0 0
        %1919 = vmatprep.subr.bf16.mxu0 0
        %1920 = vmatpush2.bf16.xpose.msra.mxu0 0
        %1921 = vmatprep.subr.bf16.mxu0 0
        %1922 = vmatpush2.bf16.xpose.msra.mxu0 0
        %1923 = vmatprep.mubr.bf16.mxu0 0
        %1924 = vmatmul.mubr.bf16.gmra.mxu0 %v1886
        %v1925 = vpop.f32.mrf.mxu0
        %v1926 = vadd.f32 0.0, %v1925
        %v1927 = vpop.f32.mrf.mxu0
        %v1928 = vpop.f32.mrf.mxu0
        %v1929 = vpop.f32.mrf.mxu0
        %1930 = vdwg.mxu0
        %v1931 = vsel %vm1048, %v1776, -inf
        %1932 = vmax.xlane.f32.xlu0 %v1931
        %v1933 = vpop.xlane.xlu0 %1932
        %v1934 = vsel %vm1048, %v1826, -inf
        %1935 = vmax.xlane.f32.xlu0 %v1934
        %v1936 = vpop.xlane.xlu0 %1935
        %v1937 = vsel %vm1048, %v1876, -inf
        %1938 = vmax.xlane.f32.xlu0 %v1937
        %v1939 = vpop.xlane.xlu0 %1938
        %v1940 = vsel %vm1048, %v1926, -inf
        %1941 = vmax.xlane.f32.xlu0 %v1940
        %v1942 = vpop.xlane.xlu0 %1941
        %v1943 = vsub.f32 %v1776, %v1933
        %v1944 = vsub.f32 %v1826, %v1936
        %v1945 = vsub.f32 %v1876, %v1939
        %v1946 = vsub.f32 %v1926, %v1942
        %v1947 = vmul.f32 %v1943, 1.442695
        %v1948 = vpow.pop %v1947
        %v1949 = vmul.f32 %v1944, 1.442695
        %v1950 = vpow.pop %v1949
        %v1951 = vmul.f32 %v1945, 1.442695
        %v1952 = vpow.pop %v1951
        %v1953 = vmul.f32 %v1946, 1.442695
        %v1954 = vpow.pop %v1953
        %v1955 = vsel %vm1048, %v1948, 0.0
        %1956 = vadd.xlane.f32.xlu0 %v1955
        %v1957 = vpop.xlane.xlu0 %1956
        %v1958 = vsel %vm1048, %v1950, 0.0
        %1959 = vadd.xlane.f32.xlu0 %v1958
        %v1960 = vpop.xlane.xlu0 %1959
        %v1961 = vsel %vm1048, %v1952, 0.0
        %1962 = vadd.xlane.f32.xlu0 %v1961
        %v1963 = vpop.xlane.xlu0 %1962
        %v1964 = vsel %vm1048, %v1954, 0.0
        %1965 = vadd.xlane.f32.xlu0 %v1964
        %v1966 = vpop.xlane.xlu0 %1965
        %v1967 = vrcp.pop %v1957
        %v1968 = vrcp.pop %v1960
        %v1969 = vrcp.pop %v1963
        %v1970 = vrcp.pop %v1966
        %v1971 = vmul.f32 %v1948, %v1967
        %v1972 = vmul.f32 %v1950, %v1968
        %v1973 = vmul.f32 %v1952, %v1969
        %v1974 = vmul.f32 %v1954, %v1970
        %v1975 = vpack.c.bf16 %v1971, %v1971
        %v1976 = vpack.c.bf16 %v1972, %v1972
        %v1977 = vpack.c.bf16 %v1973, %v1973
        %v1978 = vpack.c.bf16 %v1974, %v1974
        %1979 = vrot.lane.b32.xlu0 %v812, 48
        %v1980 = vpop.permute.xlu0 %1979
        %v1982 = vsel %vm1099, %v1975, 0
        %v1985 = vsel %vm1103, %v1980, 0
        %1987 = vmatprep.subr.bf16.mxu0 0
        %1988 = vmatpush1.bf16.msra.mxu0 0
        %1989 = vmatprep.subr.bf16.mxu0 0
        %1990 = vmatpush1.bf16.msra.mxu0 0
        %1991 = vmatprep.subr.bf16.mxu0 0
        %1992 = vmatpush1.bf16.msra.mxu0 0
        %1993 = vmatprep.subr.bf16.mxu0 0
        %1994 = vmatpush1.bf16.msra.mxu0 0
        %1995 = vmatprep.subr.bf16.mxu0 0
        %1996 = vmatpush1.bf16.msra.mxu0 0
        %1997 = vmatprep.subr.bf16.mxu0 0
        %1998 = vmatpush1.bf16.msra.mxu0 0
        %1999 = vmatprep.subr.bf16.mxu0 0
        %2000 = vmatpush1.bf16.msra.mxu0 0
        %2001 = vmatprep.subr.bf16.mxu0 0
        %2002 = vmatpush1.bf16.msra.mxu0 %v1985
        %2003 = vmatprep.subr.bf16.mxu0 0
        %2004 = vmatpush2.bf16.msra.mxu0 0
        %2005 = vmatprep.subr.bf16.mxu0 0
        %2006 = vmatpush2.bf16.msra.mxu0 0
        %2007 = vmatprep.subr.bf16.mxu0 0
        %2008 = vmatpush2.bf16.msra.mxu0 0
        %2009 = vmatprep.subr.bf16.mxu0 0
        %2010 = vmatpush2.bf16.msra.mxu0 0
        %2011 = vmatprep.subr.bf16.mxu0 0
        %2012 = vmatpush2.bf16.msra.mxu0 0
        %2013 = vmatprep.subr.bf16.mxu0 0
        %2014 = vmatpush2.bf16.msra.mxu0 0
        %2015 = vmatprep.subr.bf16.mxu0 0
        %2016 = vmatpush2.bf16.msra.mxu0 0
        %2017 = vmatprep.subr.bf16.mxu0 0
        %2018 = vmatpush2.bf16.msra.mxu0 0
        %2019 = vmatprep.mubr.bf16.mxu0 0
        %2020 = vmatmul.mubr.bf16.gmra.mxu0 %v1982
        %v2021 = vpop.f32.mrf.mxu0
        %v2022 = vadd.f32 0.0, %v2021
        %v2023 = vpop.f32.mrf.mxu0
        %v2024 = vpop.f32.mrf.mxu0
        %v2025 = vpop.f32.mrf.mxu0
        %2026 = vdwg.mxu0
        %2027 = vrot.lane.b32.xlu0 %v875, 48
        %v2028 = vpop.permute.xlu0 %2027
        %v2030 = vsel %vm1099, %v1976, 0
        %v2033 = vsel %vm1103, %v2028, 0
        %2035 = vmatprep.subr.bf16.mxu0 0
        %2036 = vmatpush1.bf16.msra.mxu0 0
        %2037 = vmatprep.subr.bf16.mxu0 0
        %2038 = vmatpush1.bf16.msra.mxu0 0
        %2039 = vmatprep.subr.bf16.mxu0 0
        %2040 = vmatpush1.bf16.msra.mxu0 0
        %2041 = vmatprep.subr.bf16.mxu0 0
        %2042 = vmatpush1.bf16.msra.mxu0 0
        %2043 = vmatprep.subr.bf16.mxu0 0
        %2044 = vmatpush1.bf16.msra.mxu0 0
        %2045 = vmatprep.subr.bf16.mxu0 0
        %2046 = vmatpush1.bf16.msra.mxu0 0
        %2047 = vmatprep.subr.bf16.mxu0 0
        %2048 = vmatpush1.bf16.msra.mxu0 0
        %2049 = vmatprep.subr.bf16.mxu0 0
        %2050 = vmatpush1.bf16.msra.mxu0 %v2033
        %2051 = vmatprep.subr.bf16.mxu0 0
        %2052 = vmatpush2.bf16.msra.mxu0 0
        %2053 = vmatprep.subr.bf16.mxu0 0
        %2054 = vmatpush2.bf16.msra.mxu0 0
        %2055 = vmatprep.subr.bf16.mxu0 0
        %2056 = vmatpush2.bf16.msra.mxu0 0
        %2057 = vmatprep.subr.bf16.mxu0 0
        %2058 = vmatpush2.bf16.msra.mxu0 0
        %2059 = vmatprep.subr.bf16.mxu0 0
        %2060 = vmatpush2.bf16.msra.mxu0 0
        %2061 = vmatprep.subr.bf16.mxu0 0
        %2062 = vmatpush2.bf16.msra.mxu0 0
        %2063 = vmatprep.subr.bf16.mxu0 0
        %2064 = vmatpush2.bf16.msra.mxu0 0
        %2065 = vmatprep.subr.bf16.mxu0 0
        %2066 = vmatpush2.bf16.msra.mxu0 0
        %2067 = vmatprep.mubr.bf16.mxu0 0
        %2068 = vmatmul.mubr.bf16.gmra.mxu0 %v2030
        %v2069 = vpop.f32.mrf.mxu0
        %v2070 = vadd.f32 0.0, %v2069
        %v2071 = vpop.f32.mrf.mxu0
        %v2072 = vpop.f32.mrf.mxu0
        %v2073 = vpop.f32.mrf.mxu0
        %2074 = vdwg.mxu0
        %2075 = vrot.lane.b32.xlu0 %v937, 48
        %v2076 = vpop.permute.xlu0 %2075
        %v2078 = vsel %vm1099, %v1977, 0
        %v2081 = vsel %vm1103, %v2076, 0
        %2083 = vmatprep.subr.bf16.mxu0 0
        %2084 = vmatpush1.bf16.msra.mxu0 0
        %2085 = vmatprep.subr.bf16.mxu0 0
        %2086 = vmatpush1.bf16.msra.mxu0 0
        %2087 = vmatprep.subr.bf16.mxu0 0
        %2088 = vmatpush1.bf16.msra.mxu0 0
        %2089 = vmatprep.subr.bf16.mxu0 0
        %2090 = vmatpush1.bf16.msra.mxu0 0
        %2091 = vmatprep.subr.bf16.mxu0 0
        %2092 = vmatpush1.bf16.msra.mxu0 0
        %2093 = vmatprep.subr.bf16.mxu0 0
        %2094 = vmatpush1.bf16.msra.mxu0 0
        %2095 = vmatprep.subr.bf16.mxu0 0
        %2096 = vmatpush1.bf16.msra.mxu0 0
        %2097 = vmatprep.subr.bf16.mxu0 0
        %2098 = vmatpush1.bf16.msra.mxu0 %v2081
        %2099 = vmatprep.subr.bf16.mxu0 0
        %2100 = vmatpush2.bf16.msra.mxu0 0
        %2101 = vmatprep.subr.bf16.mxu0 0
        %2102 = vmatpush2.bf16.msra.mxu0 0
        %2103 = vmatprep.subr.bf16.mxu0 0
        %2104 = vmatpush2.bf16.msra.mxu0 0
        %2105 = vmatprep.subr.bf16.mxu0 0
        %2106 = vmatpush2.bf16.msra.mxu0 0
        %2107 = vmatprep.subr.bf16.mxu0 0
        %2108 = vmatpush2.bf16.msra.mxu0 0
        %2109 = vmatprep.subr.bf16.mxu0 0
        %2110 = vmatpush2.bf16.msra.mxu0 0
        %2111 = vmatprep.subr.bf16.mxu0 0
        %2112 = vmatpush2.bf16.msra.mxu0 0
        %2113 = vmatprep.subr.bf16.mxu0 0
        %2114 = vmatpush2.bf16.msra.mxu0 0
        %2115 = vmatprep.mubr.bf16.mxu0 0
        %2116 = vmatmul.mubr.bf16.gmra.mxu0 %v2078
        %v2117 = vpop.f32.mrf.mxu0
        %v2118 = vadd.f32 0.0, %v2117
        %v2119 = vpop.f32.mrf.mxu0
        %v2120 = vpop.f32.mrf.mxu0
        %v2121 = vpop.f32.mrf.mxu0
        %2122 = vdwg.mxu0
        %2123 = vrot.lane.b32.xlu0 %v999, 48
        %v2124 = vpop.permute.xlu0 %2123
        %v2126 = vsel %vm1099, %v1978, 0
        %v2129 = vsel %vm1103, %v2124, 0
        %2131 = vmatprep.subr.bf16.mxu0 0
        %2132 = vmatpush1.bf16.msra.mxu0 0
        %2133 = vmatprep.subr.bf16.mxu0 0
        %2134 = vmatpush1.bf16.msra.mxu0 0
        %2135 = vmatprep.subr.bf16.mxu0 0
        %2136 = vmatpush1.bf16.msra.mxu0 0
        %2137 = vmatprep.subr.bf16.mxu0 0
        %2138 = vmatpush1.bf16.msra.mxu0 0
        %2139 = vmatprep.subr.bf16.mxu0 0
        %2140 = vmatpush1.bf16.msra.mxu0 0
        %2141 = vmatprep.subr.bf16.mxu0 0
        %2142 = vmatpush1.bf16.msra.mxu0 0
        %2143 = vmatprep.subr.bf16.mxu0 0
        %2144 = vmatpush1.bf16.msra.mxu0 0
        %2145 = vmatprep.subr.bf16.mxu0 0
        %2146 = vmatpush1.bf16.msra.mxu0 %v2129
        %2147 = vmatprep.subr.bf16.mxu0 0
        %2148 = vmatpush2.bf16.msra.mxu0 0
        %2149 = vmatprep.subr.bf16.mxu0 0
        %2150 = vmatpush2.bf16.msra.mxu0 0
        %2151 = vmatprep.subr.bf16.mxu0 0
        %2152 = vmatpush2.bf16.msra.mxu0 0
        %2153 = vmatprep.subr.bf16.mxu0 0
        %2154 = vmatpush2.bf16.msra.mxu0 0
        %2155 = vmatprep.subr.bf16.mxu0 0
        %2156 = vmatpush2.bf16.msra.mxu0 0
        %2157 = vmatprep.subr.bf16.mxu0 0
        %2158 = vmatpush2.bf16.msra.mxu0 0
        %2159 = vmatprep.subr.bf16.mxu0 0
        %2160 = vmatpush2.bf16.msra.mxu0 0
        %2161 = vmatprep.subr.bf16.mxu0 0
        %2162 = vmatpush2.bf16.msra.mxu0 0
        %2163 = vmatprep.mubr.bf16.mxu0 0
        %2164 = vmatmul.mubr.bf16.gmra.mxu0 %v2126
        %v2165 = vpop.f32.mrf.mxu0
        %v2166 = vadd.f32 0.0, %v2165
        %v2167 = vpop.f32.mrf.mxu0
        %v2168 = vpop.f32.mrf.mxu0
        %v2169 = vpop.f32.mrf.mxu0
        %2170 = vdwg.mxu0
        %2171 = vrot.lane.b32.xlu0 %v812, 104
        %v2172 = vpop.permute.xlu0 %2171
        %2173 = vrot.lane.b32.xlu0 %v812, 72
        %v2174 = vpop.permute.xlu0 %2173
        %v2176 = vsel %vm815, %v2172, 0
        %v2179 = vsel %vm815, %v2174, 0
        %2181 = vmatprep.subr.bf16.mxu0 0
        %2182 = vmatpush1.bf16.xpose.msra.mxu0 0
        %2183 = vmatprep.subr.bf16.mxu0 0
        %2184 = vmatpush1.bf16.xpose.msra.mxu0 0
        %2185 = vmatprep.subr.bf16.mxu0 0
        %2186 = vmatpush1.bf16.xpose.msra.mxu0 0
        %2187 = vmatprep.subr.bf16.mxu0 0
        %2188 = vmatpush1.bf16.xpose.msra.mxu0 0
        %2189 = vmatprep.subr.bf16.mxu0 0
        %2190 = vmatpush1.bf16.xpose.msra.mxu0 0
        %2191 = vmatprep.subr.bf16.mxu0 0
        %2192 = vmatpush1.bf16.xpose.msra.mxu0 0
        %2193 = vmatprep.subr.bf16.mxu0 0
        %2194 = vmatpush1.bf16.xpose.msra.mxu0 0
        %2195 = vmatprep.subr.bf16.mxu0 0
        %2196 = vmatpush1.bf16.xpose.msra.mxu0 %v2179
        %2197 = vmatprep.subr.bf16.mxu0 0
        %2198 = vmatpush2.bf16.xpose.msra.mxu0 0
        %2199 = vmatprep.subr.bf16.mxu0 0
        %2200 = vmatpush2.bf16.xpose.msra.mxu0 0
        %2201 = vmatprep.subr.bf16.mxu0 0
        %2202 = vmatpush2.bf16.xpose.msra.mxu0 0
        %2203 = vmatprep.subr.bf16.mxu0 0
        %2204 = vmatpush2.bf16.xpose.msra.mxu0 0
        %2205 = vmatprep.subr.bf16.mxu0 0
        %2206 = vmatpush2.bf16.xpose.msra.mxu0 0
        %2207 = vmatprep.subr.bf16.mxu0 0
        %2208 = vmatpush2.bf16.xpose.msra.mxu0 0
        %2209 = vmatprep.subr.bf16.mxu0 0
        %2210 = vmatpush2.bf16.xpose.msra.mxu0 0
        %2211 = vmatprep.subr.bf16.mxu0 0
        %2212 = vmatpush2.bf16.xpose.msra.mxu0 0
        %2213 = vmatprep.mubr.bf16.mxu0 0
        %2214 = vmatmul.mubr.bf16.gmra.mxu0 %v2176
        %v2215 = vpop.f32.mrf.mxu0
        %v2216 = vadd.f32 0.0, %v2215
        %v2217 = vpop.f32.mrf.mxu0
        %v2218 = vpop.f32.mrf.mxu0
        %v2219 = vpop.f32.mrf.mxu0
        %2220 = vdwg.mxu0
        %2221 = vrot.lane.b32.xlu0 %v875, 104
        %v2222 = vpop.permute.xlu0 %2221
        %2223 = vrot.lane.b32.xlu0 %v875, 72
        %v2224 = vpop.permute.xlu0 %2223
        %v2226 = vsel %vm815, %v2222, 0
        %v2229 = vsel %vm815, %v2224, 0
        %2231 = vmatprep.subr.bf16.mxu0 0
        %2232 = vmatpush1.bf16.xpose.msra.mxu0 0
        %2233 = vmatprep.subr.bf16.mxu0 0
        %2234 = vmatpush1.bf16.xpose.msra.mxu0 0
        %2235 = vmatprep.subr.bf16.mxu0 0
        %2236 = vmatpush1.bf16.xpose.msra.mxu0 0
        %2237 = vmatprep.subr.bf16.mxu0 0
        %2238 = vmatpush1.bf16.xpose.msra.mxu0 0
        %2239 = vmatprep.subr.bf16.mxu0 0
        %2240 = vmatpush1.bf16.xpose.msra.mxu0 0
        %2241 = vmatprep.subr.bf16.mxu0 0
        %2242 = vmatpush1.bf16.xpose.msra.mxu0 0
        %2243 = vmatprep.subr.bf16.mxu0 0
        %2244 = vmatpush1.bf16.xpose.msra.mxu0 0
        %2245 = vmatprep.subr.bf16.mxu0 0
        %2246 = vmatpush1.bf16.xpose.msra.mxu0 %v2229
        %2247 = vmatprep.subr.bf16.mxu0 0
        %2248 = vmatpush2.bf16.xpose.msra.mxu0 0
        %2249 = vmatprep.subr.bf16.mxu0 0
        %2250 = vmatpush2.bf16.xpose.msra.mxu0 0
        %2251 = vmatprep.subr.bf16.mxu0 0
        %2252 = vmatpush2.bf16.xpose.msra.mxu0 0
        %2253 = vmatprep.subr.bf16.mxu0 0
        %2254 = vmatpush2.bf16.xpose.msra.mxu0 0
        %2255 = vmatprep.subr.bf16.mxu0 0
        %2256 = vmatpush2.bf16.xpose.msra.mxu0 0
        %2257 = vmatprep.subr.bf16.mxu0 0
        %2258 = vmatpush2.bf16.xpose.msra.mxu0 0
        %2259 = vmatprep.subr.bf16.mxu0 0
        %2260 = vmatpush2.bf16.xpose.msra.mxu0 0
        %2261 = vmatprep.subr.bf16.mxu0 0
        %2262 = vmatpush2.bf16.xpose.msra.mxu0 0
        %2263 = vmatprep.mubr.bf16.mxu0 0
        %2264 = vmatmul.mubr.bf16.gmra.mxu0 %v2226
        %v2265 = vpop.f32.mrf.mxu0
        %v2266 = vadd.f32 0.0, %v2265
        %v2267 = vpop.f32.mrf.mxu0
        %v2268 = vpop.f32.mrf.mxu0
        %v2269 = vpop.f32.mrf.mxu0
        %2270 = vdwg.mxu0
        %2271 = vrot.lane.b32.xlu0 %v937, 104
        %v2272 = vpop.permute.xlu0 %2271
        %2273 = vrot.lane.b32.xlu0 %v937, 72
        %v2274 = vpop.permute.xlu0 %2273
        %v2276 = vsel %vm815, %v2272, 0
        %v2279 = vsel %vm815, %v2274, 0
        %2281 = vmatprep.subr.bf16.mxu0 0
        %2282 = vmatpush1.bf16.xpose.msra.mxu0 0
        %2283 = vmatprep.subr.bf16.mxu0 0
        %2284 = vmatpush1.bf16.xpose.msra.mxu0 0
        %2285 = vmatprep.subr.bf16.mxu0 0
        %2286 = vmatpush1.bf16.xpose.msra.mxu0 0
        %2287 = vmatprep.subr.bf16.mxu0 0
        %2288 = vmatpush1.bf16.xpose.msra.mxu0 0
        %2289 = vmatprep.subr.bf16.mxu0 0
        %2290 = vmatpush1.bf16.xpose.msra.mxu0 0
        %2291 = vmatprep.subr.bf16.mxu0 0
        %2292 = vmatpush1.bf16.xpose.msra.mxu0 0
        %2293 = vmatprep.subr.bf16.mxu0 0
        %2294 = vmatpush1.bf16.xpose.msra.mxu0 0
        %2295 = vmatprep.subr.bf16.mxu0 0
        %2296 = vmatpush1.bf16.xpose.msra.mxu0 %v2279
        %2297 = vmatprep.subr.bf16.mxu0 0
        %2298 = vmatpush2.bf16.xpose.msra.mxu0 0
        %2299 = vmatprep.subr.bf16.mxu0 0
        %2300 = vmatpush2.bf16.xpose.msra.mxu0 0
        %2301 = vmatprep.subr.bf16.mxu0 0
        %2302 = vmatpush2.bf16.xpose.msra.mxu0 0
        %2303 = vmatprep.subr.bf16.mxu0 0
        %2304 = vmatpush2.bf16.xpose.msra.mxu0 0
        %2305 = vmatprep.subr.bf16.mxu0 0
        %2306 = vmatpush2.bf16.xpose.msra.mxu0 0
        %2307 = vmatprep.subr.bf16.mxu0 0
        %2308 = vmatpush2.bf16.xpose.msra.mxu0 0
        %2309 = vmatprep.subr.bf16.mxu0 0
        %2310 = vmatpush2.bf16.xpose.msra.mxu0 0
        %2311 = vmatprep.subr.bf16.mxu0 0
        %2312 = vmatpush2.bf16.xpose.msra.mxu0 0
        %2313 = vmatprep.mubr.bf16.mxu0 0
        %2314 = vmatmul.mubr.bf16.gmra.mxu0 %v2276
        %v2315 = vpop.f32.mrf.mxu0
        %v2316 = vadd.f32 0.0, %v2315
        %v2317 = vpop.f32.mrf.mxu0
        %v2318 = vpop.f32.mrf.mxu0
        %v2319 = vpop.f32.mrf.mxu0
        %2320 = vdwg.mxu0
        %2321 = vrot.lane.b32.xlu0 %v999, 104
        %v2322 = vpop.permute.xlu0 %2321
        %2323 = vrot.lane.b32.xlu0 %v999, 72
        %v2324 = vpop.permute.xlu0 %2323
        %v2326 = vsel %vm815, %v2322, 0
        %v2329 = vsel %vm815, %v2324, 0
        %2331 = vmatprep.subr.bf16.mxu0 0
        %2332 = vmatpush1.bf16.xpose.msra.mxu0 0
        %2333 = vmatprep.subr.bf16.mxu0 0
        %2334 = vmatpush1.bf16.xpose.msra.mxu0 0
        %2335 = vmatprep.subr.bf16.mxu0 0
        %2336 = vmatpush1.bf16.xpose.msra.mxu0 0
        %2337 = vmatprep.subr.bf16.mxu0 0
        %2338 = vmatpush1.bf16.xpose.msra.mxu0 0
        %2339 = vmatprep.subr.bf16.mxu0 0
        %2340 = vmatpush1.bf16.xpose.msra.mxu0 0
        %2341 = vmatprep.subr.bf16.mxu0 0
        %2342 = vmatpush1.bf16.xpose.msra.mxu0 0
        %2343 = vmatprep.subr.bf16.mxu0 0
        %2344 = vmatpush1.bf16.xpose.msra.mxu0 0
        %2345 = vmatprep.subr.bf16.mxu0 0
        %2346 = vmatpush1.bf16.xpose.msra.mxu0 %v2329
        %2347 = vmatprep.subr.bf16.mxu0 0
        %2348 = vmatpush2.bf16.xpose.msra.mxu0 0
        %2349 = vmatprep.subr.bf16.mxu0 0
        %2350 = vmatpush2.bf16.xpose.msra.mxu0 0
        %2351 = vmatprep.subr.bf16.mxu0 0
        %2352 = vmatpush2.bf16.xpose.msra.mxu0 0
        %2353 = vmatprep.subr.bf16.mxu0 0
        %2354 = vmatpush2.bf16.xpose.msra.mxu0 0
        %2355 = vmatprep.subr.bf16.mxu0 0
        %2356 = vmatpush2.bf16.xpose.msra.mxu0 0
        %2357 = vmatprep.subr.bf16.mxu0 0
        %2358 = vmatpush2.bf16.xpose.msra.mxu0 0
        %2359 = vmatprep.subr.bf16.mxu0 0
        %2360 = vmatpush2.bf16.xpose.msra.mxu0 0
        %2361 = vmatprep.subr.bf16.mxu0 0
        %2362 = vmatpush2.bf16.xpose.msra.mxu0 0
        %2363 = vmatprep.mubr.bf16.mxu0 0
        %2364 = vmatmul.mubr.bf16.gmra.mxu0 %v2326
        %v2365 = vpop.f32.mrf.mxu0
        %v2366 = vadd.f32 0.0, %v2365
        %v2367 = vpop.f32.mrf.mxu0
        %v2368 = vpop.f32.mrf.mxu0
        %v2369 = vpop.f32.mrf.mxu0
        %2370 = vdwg.mxu0
        %v2371 = vsel %vm1048, %v2216, -inf
        %2372 = vmax.xlane.f32.xlu0 %v2371
        %v2373 = vpop.xlane.xlu0 %2372
        %v2374 = vsel %vm1048, %v2266, -inf
        %2375 = vmax.xlane.f32.xlu0 %v2374
        %v2376 = vpop.xlane.xlu0 %2375
        %v2377 = vsel %vm1048, %v2316, -inf
        %2378 = vmax.xlane.f32.xlu0 %v2377
        %v2379 = vpop.xlane.xlu0 %2378
        %v2380 = vsel %vm1048, %v2366, -inf
        %2381 = vmax.xlane.f32.xlu0 %v2380
        %v2382 = vpop.xlane.xlu0 %2381
        %v2383 = vsub.f32 %v2216, %v2373
        %v2384 = vsub.f32 %v2266, %v2376
        %v2385 = vsub.f32 %v2316, %v2379
        %v2386 = vsub.f32 %v2366, %v2382
        %v2387 = vmul.f32 %v2383, 1.442695
        %v2388 = vpow.pop %v2387
        %v2389 = vmul.f32 %v2384, 1.442695
        %v2390 = vpow.pop %v2389
        %v2391 = vmul.f32 %v2385, 1.442695
        %v2392 = vpow.pop %v2391
        %v2393 = vmul.f32 %v2386, 1.442695
        %v2394 = vpow.pop %v2393
        %v2395 = vsel %vm1048, %v2388, 0.0
        %2396 = vadd.xlane.f32.xlu0 %v2395
        %v2397 = vpop.xlane.xlu0 %2396
        %v2398 = vsel %vm1048, %v2390, 0.0
        %2399 = vadd.xlane.f32.xlu0 %v2398
        %v2400 = vpop.xlane.xlu0 %2399
        %v2401 = vsel %vm1048, %v2392, 0.0
        %2402 = vadd.xlane.f32.xlu0 %v2401
        %v2403 = vpop.xlane.xlu0 %2402
        %v2404 = vsel %vm1048, %v2394, 0.0
        %2405 = vadd.xlane.f32.xlu0 %v2404
        %v2406 = vpop.xlane.xlu0 %2405
        %v2407 = vrcp.pop %v2397
        %v2408 = vrcp.pop %v2400
        %v2409 = vrcp.pop %v2403
        %v2410 = vrcp.pop %v2406
        %v2411 = vmul.f32 %v2388, %v2407
        %v2412 = vmul.f32 %v2390, %v2408
        %v2413 = vmul.f32 %v2392, %v2409
        %v2414 = vmul.f32 %v2394, %v2410
        %v2415 = vpack.c.bf16 %v2411, %v2411
        %v2416 = vpack.c.bf16 %v2412, %v2412
        %v2417 = vpack.c.bf16 %v2413, %v2413
        %v2418 = vpack.c.bf16 %v2414, %v2414
        %2419 = vrot.lane.b32.xlu0 %v812, 40
        %v2420 = vpop.permute.xlu0 %2419
        %v2422 = vsel %vm1099, %v2415, 0
        %v2425 = vsel %vm1103, %v2420, 0
        %2427 = vmatprep.subr.bf16.mxu0 0
        %2428 = vmatpush1.bf16.msra.mxu0 0
        %2429 = vmatprep.subr.bf16.mxu0 0
        %2430 = vmatpush1.bf16.msra.mxu0 0
        %2431 = vmatprep.subr.bf16.mxu0 0
        %2432 = vmatpush1.bf16.msra.mxu0 0
        %2433 = vmatprep.subr.bf16.mxu0 0
        %2434 = vmatpush1.bf16.msra.mxu0 0
        %2435 = vmatprep.subr.bf16.mxu0 0
        %2436 = vmatpush1.bf16.msra.mxu0 0
        %2437 = vmatprep.subr.bf16.mxu0 0
        %2438 = vmatpush1.bf16.msra.mxu0 0
        %2439 = vmatprep.subr.bf16.mxu0 0
        %2440 = vmatpush1.bf16.msra.mxu0 0
        %2441 = vmatprep.subr.bf16.mxu0 0
        %2442 = vmatpush1.bf16.msra.mxu0 %v2425
        %2443 = vmatprep.subr.bf16.mxu0 0
        %2444 = vmatpush2.bf16.msra.mxu0 0
        %2445 = vmatprep.subr.bf16.mxu0 0
        %2446 = vmatpush2.bf16.msra.mxu0 0
        %2447 = vmatprep.subr.bf16.mxu0 0
        %2448 = vmatpush2.bf16.msra.mxu0 0
        %2449 = vmatprep.subr.bf16.mxu0 0
        %2450 = vmatpush2.bf16.msra.mxu0 0
        %2451 = vmatprep.subr.bf16.mxu0 0
        %2452 = vmatpush2.bf16.msra.mxu0 0
        %2453 = vmatprep.subr.bf16.mxu0 0
        %2454 = vmatpush2.bf16.msra.mxu0 0
        %2455 = vmatprep.subr.bf16.mxu0 0
        %2456 = vmatpush2.bf16.msra.mxu0 0
        %2457 = vmatprep.subr.bf16.mxu0 0
        %2458 = vmatpush2.bf16.msra.mxu0 0
        %2459 = vmatprep.mubr.bf16.mxu0 0
        %2460 = vmatmul.mubr.bf16.gmra.mxu0 %v2422
        %v2461 = vpop.f32.mrf.mxu0
        %v2462 = vadd.f32 0.0, %v2461
        %v2463 = vpop.f32.mrf.mxu0
        %v2464 = vpop.f32.mrf.mxu0
        %v2465 = vpop.f32.mrf.mxu0
        %2466 = vdwg.mxu0
        %2467 = vrot.lane.b32.xlu0 %v875, 40
        %v2468 = vpop.permute.xlu0 %2467
        %v2470 = vsel %vm1099, %v2416, 0
        %v2473 = vsel %vm1103, %v2468, 0
        %2475 = vmatprep.subr.bf16.mxu0 0
        %2476 = vmatpush1.bf16.msra.mxu0 0
        %2477 = vmatprep.subr.bf16.mxu0 0
        %2478 = vmatpush1.bf16.msra.mxu0 0
        %2479 = vmatprep.subr.bf16.mxu0 0
        %2480 = vmatpush1.bf16.msra.mxu0 0
        %2481 = vmatprep.subr.bf16.mxu0 0
        %2482 = vmatpush1.bf16.msra.mxu0 0
        %2483 = vmatprep.subr.bf16.mxu0 0
        %2484 = vmatpush1.bf16.msra.mxu0 0
        %2485 = vmatprep.subr.bf16.mxu0 0
        %2486 = vmatpush1.bf16.msra.mxu0 0
        %2487 = vmatprep.subr.bf16.mxu0 0
        %2488 = vmatpush1.bf16.msra.mxu0 0
        %2489 = vmatprep.subr.bf16.mxu0 0
        %2490 = vmatpush1.bf16.msra.mxu0 %v2473
        %2491 = vmatprep.subr.bf16.mxu0 0
        %2492 = vmatpush2.bf16.msra.mxu0 0
        %2493 = vmatprep.subr.bf16.mxu0 0
        %2494 = vmatpush2.bf16.msra.mxu0 0
        %2495 = vmatprep.subr.bf16.mxu0 0
        %2496 = vmatpush2.bf16.msra.mxu0 0
        %2497 = vmatprep.subr.bf16.mxu0 0
        %2498 = vmatpush2.bf16.msra.mxu0 0
        %2499 = vmatprep.subr.bf16.mxu0 0
        %2500 = vmatpush2.bf16.msra.mxu0 0
        %2501 = vmatprep.subr.bf16.mxu0 0
        %2502 = vmatpush2.bf16.msra.mxu0 0
        %2503 = vmatprep.subr.bf16.mxu0 0
        %2504 = vmatpush2.bf16.msra.mxu0 0
        %2505 = vmatprep.subr.bf16.mxu0 0
        %2506 = vmatpush2.bf16.msra.mxu0 0
        %2507 = vmatprep.mubr.bf16.mxu0 0
        %2508 = vmatmul.mubr.bf16.gmra.mxu0 %v2470
        %v2509 = vpop.f32.mrf.mxu0
        %v2510 = vadd.f32 0.0, %v2509
        %v2511 = vpop.f32.mrf.mxu0
        %v2512 = vpop.f32.mrf.mxu0
        %v2513 = vpop.f32.mrf.mxu0
        %2514 = vdwg.mxu0
        %2515 = vrot.lane.b32.xlu0 %v937, 40
        %v2516 = vpop.permute.xlu0 %2515
        %v2518 = vsel %vm1099, %v2417, 0
        %v2521 = vsel %vm1103, %v2516, 0
        %2523 = vmatprep.subr.bf16.mxu0 0
        %2524 = vmatpush1.bf16.msra.mxu0 0
        %2525 = vmatprep.subr.bf16.mxu0 0
        %2526 = vmatpush1.bf16.msra.mxu0 0
        %2527 = vmatprep.subr.bf16.mxu0 0
        %2528 = vmatpush1.bf16.msra.mxu0 0
        %2529 = vmatprep.subr.bf16.mxu0 0
        %2530 = vmatpush1.bf16.msra.mxu0 0
        %2531 = vmatprep.subr.bf16.mxu0 0
        %2532 = vmatpush1.bf16.msra.mxu0 0
        %2533 = vmatprep.subr.bf16.mxu0 0
        %2534 = vmatpush1.bf16.msra.mxu0 0
        %2535 = vmatprep.subr.bf16.mxu0 0
        %2536 = vmatpush1.bf16.msra.mxu0 0
        %2537 = vmatprep.subr.bf16.mxu0 0
        %2538 = vmatpush1.bf16.msra.mxu0 %v2521
        %2539 = vmatprep.subr.bf16.mxu0 0
        %2540 = vmatpush2.bf16.msra.mxu0 0
        %2541 = vmatprep.subr.bf16.mxu0 0
        %2542 = vmatpush2.bf16.msra.mxu0 0
        %2543 = vmatprep.subr.bf16.mxu0 0
        %2544 = vmatpush2.bf16.msra.mxu0 0
        %2545 = vmatprep.subr.bf16.mxu0 0
        %2546 = vmatpush2.bf16.msra.mxu0 0
        %2547 = vmatprep.subr.bf16.mxu0 0
        %2548 = vmatpush2.bf16.msra.mxu0 0
        %2549 = vmatprep.subr.bf16.mxu0 0
        %2550 = vmatpush2.bf16.msra.mxu0 0
        %2551 = vmatprep.subr.bf16.mxu0 0
        %2552 = vmatpush2.bf16.msra.mxu0 0
        %2553 = vmatprep.subr.bf16.mxu0 0
        %2554 = vmatpush2.bf16.msra.mxu0 0
        %2555 = vmatprep.mubr.bf16.mxu0 0
        %2556 = vmatmul.mubr.bf16.gmra.mxu0 %v2518
        %v2557 = vpop.f32.mrf.mxu0
        %v2558 = vadd.f32 0.0, %v2557
        %v2559 = vpop.f32.mrf.mxu0
        %v2560 = vpop.f32.mrf.mxu0
        %v2561 = vpop.f32.mrf.mxu0
        %2562 = vdwg.mxu0
        %2563 = vrot.lane.b32.xlu0 %v999, 40
        %v2564 = vpop.permute.xlu0 %2563
        %v2566 = vsel %vm1099, %v2418, 0
        %v2569 = vsel %vm1103, %v2564, 0
        %2571 = vmatprep.subr.bf16.mxu0 0
        %2572 = vmatpush1.bf16.msra.mxu0 0
        %2573 = vmatprep.subr.bf16.mxu0 0
        %2574 = vmatpush1.bf16.msra.mxu0 0
        %2575 = vmatprep.subr.bf16.mxu0 0
        %2576 = vmatpush1.bf16.msra.mxu0 0
        %2577 = vmatprep.subr.bf16.mxu0 0
        %2578 = vmatpush1.bf16.msra.mxu0 0
        %2579 = vmatprep.subr.bf16.mxu0 0
        %2580 = vmatpush1.bf16.msra.mxu0 0
        %2581 = vmatprep.subr.bf16.mxu0 0
        %2582 = vmatpush1.bf16.msra.mxu0 0
        %2583 = vmatprep.subr.bf16.mxu0 0
        %2584 = vmatpush1.bf16.msra.mxu0 0
        %2585 = vmatprep.subr.bf16.mxu0 0
        %2586 = vmatpush1.bf16.msra.mxu0 %v2569
        %2587 = vmatprep.subr.bf16.mxu0 0
        %2588 = vmatpush2.bf16.msra.mxu0 0
        %2589 = vmatprep.subr.bf16.mxu0 0
        %2590 = vmatpush2.bf16.msra.mxu0 0
        %2591 = vmatprep.subr.bf16.mxu0 0
        %2592 = vmatpush2.bf16.msra.mxu0 0
        %2593 = vmatprep.subr.bf16.mxu0 0
        %2594 = vmatpush2.bf16.msra.mxu0 0
        %2595 = vmatprep.subr.bf16.mxu0 0
        %2596 = vmatpush2.bf16.msra.mxu0 0
        %2597 = vmatprep.subr.bf16.mxu0 0
        %2598 = vmatpush2.bf16.msra.mxu0 0
        %2599 = vmatprep.subr.bf16.mxu0 0
        %2600 = vmatpush2.bf16.msra.mxu0 0
        %2601 = vmatprep.subr.bf16.mxu0 0
        %2602 = vmatpush2.bf16.msra.mxu0 0
        %2603 = vmatprep.mubr.bf16.mxu0 0
        %2604 = vmatmul.mubr.bf16.gmra.mxu0 %v2566
        %v2605 = vpop.f32.mrf.mxu0
        %v2606 = vadd.f32 0.0, %v2605
        %v2607 = vpop.f32.mrf.mxu0
        %v2608 = vpop.f32.mrf.mxu0
        %v2609 = vpop.f32.mrf.mxu0
        %2610 = vdwg.mxu0
        %2615 = vrot.lane.b32.xlu0 %v1582, 8
        %v2616 = vpop.permute.xlu0 %2615
        %2617 = vrot.lane.b32.xlu0 %v1630, 8
        %v2618 = vpop.permute.xlu0 %2617
        %2619 = vrot.lane.b32.xlu0 %v1678, 8
        %v2620 = vpop.permute.xlu0 %2619
        %2621 = vrot.lane.b32.xlu0 %v1726, 8
        %v2622 = vpop.permute.xlu0 %2621
        %2631 = vrot.lane.b32.xlu0 %v2022, 16
        %v2632 = vpop.permute.xlu0 %2631
        %2633 = vrot.lane.b32.xlu0 %v2070, 16
        %v2634 = vpop.permute.xlu0 %2633
        %2635 = vrot.lane.b32.xlu0 %v2118, 16
        %v2636 = vpop.permute.xlu0 %2635
        %2637 = vrot.lane.b32.xlu0 %v2166, 16
        %v2638 = vpop.permute.xlu0 %2637
        %2647 = vrot.lane.b32.xlu0 %v2462, 24
        %v2648 = vpop.permute.xlu0 %2647
        %2649 = vrot.lane.b32.xlu0 %v2510, 24
        %v2650 = vpop.permute.xlu0 %2649
        %2651 = vrot.lane.b32.xlu0 %v2558, 24
        %v2652 = vpop.permute.xlu0 %2651
        %2653 = vrot.lane.b32.xlu0 %v2606, 24
        %v2654 = vpop.permute.xlu0 %2653
        %v2659 = vsel %vm815, %v1142, %v2616
        %v2660 = vsel %vm815, %v1190, %v2618
        %v2661 = vsel %vm815, %v1238, %v2620
        %v2662 = vsel %vm815, %v1286, %v2622
        %vm2663 = vcmask 130048
        %v2664 = vsel %vm2663, %v2659, %v2632
        %v2665 = vsel %vm2663, %v2660, %v2634
        %v2666 = vsel %vm2663, %v2661, %v2636
        %v2667 = vsel %vm2663, %v2662, %v2638
        %vm2668 = vcmask 195584
        %v2669 = vsel %vm2668, %v2664, %v2648
        %v2670 = vsel %vm2668, %v2665, %v2650
        %v2671 = vsel %vm2668, %v2666, %v2652
        %v2672 = vsel %vm2668, %v2667, %v2654
        %v2677 = vcombine.low %v2669, %v2670
        %v2678 = vcombine.low %v2671, %v2672
        %v2680 = vunpack.c.l.s4 1983009808
        %v2681 = vunpack.c.0.s8 %v2680
        %v2682 = vlaneseq
        %v2683 = vshrl.u32 %v2682, 7
        %v2684 = vsub.s32 %v2681, %v2683
        %v2685 = vrot.slane %v2677, %v2684
        %v2687 = vunpack.c.l.s4 1983009808
        %v2688 = vunpack.c.0.s8 %v2687
        %v2689 = vlaneseq
        %v2690 = vshrl.u32 %v2689, 7
        %v2691 = vsub.s32 %v2688, %v2690
        %v2692 = vrot.slane %v2678, %v2691
        %v2693 = vcombine.low %v2685, %v2692
        %v2695 = vpack.c.bf16 %v2693, %v2693
        %v2696 = vld [vmem:[%s632] sm:$0xf]
        %v2697 = vld [vmem:[%s632 + $0x4] sm:$0xf]
        %v2698 = vld [vmem:[%s632 + $0x8] sm:$0xf]
        %v2699 = vld [vmem:[%s632 + $0xc] sm:$0xf]
        %v2700 = vld [vmem:[%s635] sm:$0x1]
        %v2702 = vlaneseq
        %v2703 = vshrl.u32 %v2702, 7
        %v2704 = vsub.s32 0, %v2703
        %v2705 = vrot.slane %v2700, %v2704
        %v2711 = vunpack.c.l.b16 %v2696
        %v2712 = vunpack.c.l.b16 %v2697
        %v2713 = vunpack.c.l.b16 %v2698
        %v2714 = vunpack.c.l.b16 %v2699
        %v2715 = vpack.c.b16 %v2712, %v2711
        %v2716 = vpack.c.b16 %v2714, %v2713
        %v2720 = vsel %vm729, %v2695, 0
        %2722 = vmatprep.subr.bf16.mxu0 0
        %2723 = vmatpush1.bf16.msra.mxu0 0
        %2724 = vmatprep.subr.bf16.mxu0 0
        %2725 = vmatpush1.bf16.msra.mxu0 0
        %2726 = vmatprep.subr.bf16.mxu0 0
        %2727 = vmatpush1.bf16.msra.mxu0 0
        %2728 = vmatprep.subr.bf16.mxu0 0
        %2729 = vmatpush1.bf16.msra.mxu0 0
        %2730 = vmatprep.subr.bf16.mxu0 0
        %2731 = vmatpush1.bf16.msra.mxu0 0
        %2732 = vmatprep.subr.bf16.mxu0 0
        %2733 = vmatpush1.bf16.msra.mxu0 0
        %2734 = vmatprep.subr.bf16.mxu0 0
        %2735 = vmatpush1.bf16.msra.mxu0 %v2716
        %2736 = vmatprep.subr.bf16.mxu0 0
        %2737 = vmatpush1.bf16.msra.mxu0 %v2715
        %2738 = vmatprep.subr.bf16.mxu0 0
        %2739 = vmatpush2.bf16.msra.mxu0 0
        %2740 = vmatprep.subr.bf16.mxu0 0
        %2741 = vmatpush2.bf16.msra.mxu0 0
        %2742 = vmatprep.subr.bf16.mxu0 0
        %2743 = vmatpush2.bf16.msra.mxu0 0
        %2744 = vmatprep.subr.bf16.mxu0 0
        %2745 = vmatpush2.bf16.msra.mxu0 0
        %2746 = vmatprep.subr.bf16.mxu0 0
        %2747 = vmatpush2.bf16.msra.mxu0 0
        %2748 = vmatprep.subr.bf16.mxu0 0
        %2749 = vmatpush2.bf16.msra.mxu0 0
        %2750 = vmatprep.subr.bf16.mxu0 0
        %2751 = vmatpush2.bf16.msra.mxu0 0
        %2752 = vmatprep.subr.bf16.mxu0 0
        %2753 = vmatpush2.bf16.msra.mxu0 0
        %2754 = vmatprep.mubr.bf16.mxu0 0
        %2755 = vmatmul.mubr.bf16.gmra.mxu0 %v2720
        %v2756 = vpop.f32.mrf.mxu0
        %v2757 = vadd.f32 %v2705, %v2756
        %v2758 = vpop.f32.mrf.mxu0
        %v2759 = vpop.f32.mrf.mxu0
        %v2760 = vpop.f32.mrf.mxu0
        %2761 = vdwg.mxu0
        %v2763 = vcombine.high %v2757, %v2757
        %v2765 = vunpack.c.l.s4 1983009808
        %v2766 = vunpack.c.0.s8 %v2765
        %v2767 = vlaneseq
        %v2768 = vshrl.u32 %v2767, 7
        %v2769 = vsub.s32 %v2766, %v2768
        %v2770 = vrot.slane %v2757, %v2769
        %v2772 = vunpack.c.l.s4 1983009808
        %v2773 = vunpack.c.0.s8 %v2772
        %v2774 = vlaneseq
        %v2775 = vshrl.u32 %v2774, 7
        %v2776 = vsub.s32 %v2773, %v2775
        %v2777 = vrot.slane %v2763, %v2776
        %v2778 = vcombine.high %v2770, %v2770
        %v2779 = vcombine.high %v2777, %v2777
        %v2784 = vadd.f32 %v679, %v2770
        %v2785 = vadd.f32 %v680, %v2778
        %v2786 = vadd.f32 %v681, %v2777
        %v2787 = vadd.f32 %v682, %v2779
        %v2788 = vld [vmem:[%s638] sm:$0x1]
        %v2789 = vld [vmem:[%s641] sm:$0x1]
        %v2794 = vcombine.low %v2784, %v2785
        %v2795 = vcombine.low %v2786, %v2787
        %v2797 = vunpack.c.l.s4 1983009808
        %v2798 = vunpack.c.0.s8 %v2797
        %v2799 = vlaneseq
        %v2800 = vshrl.u32 %v2799, 7
        %v2801 = vsub.s32 %v2798, %v2800
        %v2802 = vrot.slane %v2794, %v2801
        %v2804 = vunpack.c.l.s4 1983009808
        %v2805 = vunpack.c.0.s8 %v2804
        %v2806 = vlaneseq
        %v2807 = vshrl.u32 %v2806, 7
        %v2808 = vsub.s32 %v2805, %v2807
        %v2809 = vrot.slane %v2795, %v2808
        %v2810 = vcombine.low %v2802, %v2809
        %v2812 = vsel %vm729, %v2810, 0.0
        %2813 = vadd.xlane.f32.xlu0 %v2812
        %v2814 = vpop.xlane.xlu0 %2813
        %v2815 = vrcp.pop 32.0
        %v2816 = vmul.f32 %v2814, %v2815
        %v2819 = vunpack.c.l.s4 269488144
        %v2820 = vunpack.c.0.s8 %v2819
        %v2821 = vlaneseq
        %v2822 = vshrl.u32 %v2821, 7
        %v2823 = vsub.s32 %v2820, %v2822
        %v2824 = vrot.slane %v2816, %v2823
        %v2826 = vunpack.c.l.s4 842150450
        %v2827 = vunpack.c.0.s8 %v2826
        %v2828 = vlaneseq
        %v2829 = vshrl.u32 %v2828, 7
        %v2830 = vsub.s32 %v2827, %v2829
        %v2831 = vrot.slane %v2816, %v2830
        %v2833 = vunpack.c.l.s4 1414812756
        %v2834 = vunpack.c.0.s8 %v2833
        %v2835 = vlaneseq
        %v2836 = vshrl.u32 %v2835, 7
        %v2837 = vsub.s32 %v2834, %v2836
        %v2838 = vrot.slane %v2816, %v2837
        %v2840 = vunpack.c.l.s4 1987475062
        %v2841 = vunpack.c.0.s8 %v2840
        %v2842 = vlaneseq
        %v2843 = vshrl.u32 %v2842, 7
        %v2844 = vsub.s32 %v2841, %v2843
        %v2845 = vrot.slane %v2816, %v2844
        %v2850 = vsub.f32 %v2784, %v2824
        %v2851 = vsub.f32 %v2785, %v2831
        %v2852 = vsub.f32 %v2786, %v2838
        %v2853 = vsub.f32 %v2787, %v2845
        %v2854 = vmul.f32 %v2850, %v2850
        %v2855 = vmul.f32 %v2851, %v2851
        %v2856 = vmul.f32 %v2852, %v2852
        %v2857 = vmul.f32 %v2853, %v2853
        %v2862 = vcombine.low %v2854, %v2855
        %v2863 = vcombine.low %v2856, %v2857
        %v2865 = vunpack.c.l.s4 1983009808
        %v2866 = vunpack.c.0.s8 %v2865
        %v2867 = vlaneseq
        %v2868 = vshrl.u32 %v2867, 7
        %v2869 = vsub.s32 %v2866, %v2868
        %v2870 = vrot.slane %v2862, %v2869
        %v2872 = vunpack.c.l.s4 1983009808
        %v2873 = vunpack.c.0.s8 %v2872
        %v2874 = vlaneseq
        %v2875 = vshrl.u32 %v2874, 7
        %v2876 = vsub.s32 %v2873, %v2875
        %v2877 = vrot.slane %v2863, %v2876
        %v2878 = vcombine.low %v2870, %v2877
        %v2880 = vsel %vm729, %v2878, 0.0
        %2881 = vadd.xlane.f32.xlu0 %v2880
        %v2882 = vpop.xlane.xlu0 %2881
        %v2883 = vmul.f32 %v2882, %v2815
        %v2884 = vadd.f32 %v2883, 1e-05
        %v2885 = vrsqrt.pop %v2884
        %v2888 = vunpack.c.l.s4 269488144
        %v2889 = vunpack.c.0.s8 %v2888
        %v2890 = vlaneseq
        %v2891 = vshrl.u32 %v2890, 7
        %v2892 = vsub.s32 %v2889, %v2891
        %v2893 = vrot.slane %v2885, %v2892
        %v2895 = vunpack.c.l.s4 842150450
        %v2896 = vunpack.c.0.s8 %v2895
        %v2897 = vlaneseq
        %v2898 = vshrl.u32 %v2897, 7
        %v2899 = vsub.s32 %v2896, %v2898
        %v2900 = vrot.slane %v2885, %v2899
        %v2902 = vunpack.c.l.s4 1414812756
        %v2903 = vunpack.c.0.s8 %v2902
        %v2904 = vlaneseq
        %v2905 = vshrl.u32 %v2904, 7
        %v2906 = vsub.s32 %v2903, %v2905
        %v2907 = vrot.slane %v2885, %v2906
        %v2909 = vunpack.c.l.s4 1987475062
        %v2910 = vunpack.c.0.s8 %v2909
        %v2911 = vlaneseq
        %v2912 = vshrl.u32 %v2911, 7
        %v2913 = vsub.s32 %v2910, %v2912
        %v2914 = vrot.slane %v2885, %v2913
        %v2919 = vmul.f32 %v2850, %v2893
        %v2920 = vmul.f32 %v2851, %v2900
        %v2921 = vmul.f32 %v2852, %v2907
        %v2922 = vmul.f32 %v2853, %v2914
        %v2924 = vlaneseq
        %v2925 = vshrl.u32 %v2924, 7
        %v2926 = vsub.s32 0, %v2925
        %v2927 = vrot.slane %v2788, %v2926
        %v2928 = vcombine.high %v2927, %v2927
        %v2930 = vunpack.c.l.s4 1983009808
        %v2931 = vunpack.c.0.s8 %v2930
        %v2932 = vlaneseq
        %v2933 = vshrl.u32 %v2932, 7
        %v2934 = vsub.s32 %v2931, %v2933
        %v2935 = vrot.slane %v2927, %v2934
        %v2937 = vunpack.c.l.s4 1983009808
        %v2938 = vunpack.c.0.s8 %v2937
        %v2939 = vlaneseq
        %v2940 = vshrl.u32 %v2939, 7
        %v2941 = vsub.s32 %v2938, %v2940
        %v2942 = vrot.slane %v2928, %v2941
        %v2943 = vcombine.high %v2935, %v2935
        %v2944 = vcombine.high %v2942, %v2942
        %v2949 = vmul.f32 %v2919, %v2935
        %v2950 = vmul.f32 %v2920, %v2943
        %v2951 = vmul.f32 %v2921, %v2942
        %v2952 = vmul.f32 %v2922, %v2944
        %v2954 = vlaneseq
        %v2955 = vshrl.u32 %v2954, 7
        %v2956 = vsub.s32 0, %v2955
        %v2957 = vrot.slane %v2789, %v2956
        %v2958 = vcombine.high %v2957, %v2957
        %v2960 = vunpack.c.l.s4 1983009808
        %v2961 = vunpack.c.0.s8 %v2960
        %v2962 = vlaneseq
        %v2963 = vshrl.u32 %v2962, 7
        %v2964 = vsub.s32 %v2961, %v2963
        %v2965 = vrot.slane %v2957, %v2964
        %v2967 = vunpack.c.l.s4 1983009808
        %v2968 = vunpack.c.0.s8 %v2967
        %v2969 = vlaneseq
        %v2970 = vshrl.u32 %v2969, 7
        %v2971 = vsub.s32 %v2968, %v2970
        %v2972 = vrot.slane %v2958, %v2971
        %v2973 = vcombine.high %v2965, %v2965
        %v2974 = vcombine.high %v2972, %v2972
        %v2979 = vadd.f32 %v2949, %v2965
        %v2980 = vadd.f32 %v2950, %v2973
        %v2981 = vadd.f32 %v2951, %v2972
        %v2982 = vadd.f32 %v2952, %v2974
        %v2987 = vcombine.low %v2979, %v2980
        %v2988 = vcombine.low %v2981, %v2982
        %v2990 = vunpack.c.l.s4 1983009808
        %v2991 = vunpack.c.0.s8 %v2990
        %v2992 = vlaneseq
        %v2993 = vshrl.u32 %v2992, 7
        %v2994 = vsub.s32 %v2991, %v2993
        %v2995 = vrot.slane %v2987, %v2994
        %v2997 = vunpack.c.l.s4 1983009808
        %v2998 = vunpack.c.0.s8 %v2997
        %v2999 = vlaneseq
        %v3000 = vshrl.u32 %v2999, 7
        %v3001 = vsub.s32 %v2998, %v3000
        %v3002 = vrot.slane %v2988, %v3001
        %v3003 = vcombine.low %v2995, %v3002
        %v3005 = vpack.c.bf16 %v3003, %v3003
        %v3006 = vld [vmem:[%s646] sm:$0xf]
        %v3007 = vld [vmem:[%s646 + $0x4] sm:$0xf]
        %v3008 = vld [vmem:[%s646 + $0x8] sm:$0xf]
        %v3009 = vld [vmem:[%s646 + $0xc] sm:$0xf]
        %v3010 = vld [vmem:[%s649] sm:$0x1]
        %v3012 = vlaneseq
        %v3013 = vshrl.u32 %v3012, 7
        %v3014 = vsub.s32 0, %v3013
        %v3015 = vrot.slane %v3010, %v3014
        %v3021 = vunpack.c.l.b16 %v3006
        %v3022 = vunpack.c.l.b16 %v3007
        %v3023 = vunpack.c.l.b16 %v3008
        %v3024 = vunpack.c.l.b16 %v3009
        %v3025 = vpack.c.b16 %v3022, %v3021
        %v3026 = vpack.c.b16 %v3024, %v3023
        %v3030 = vsel %vm729, %v3005, 0
        %3032 = vmatprep.subr.bf16.mxu0 0
        %3033 = vmatpush1.bf16.msra.mxu0 0
        %3034 = vmatprep.subr.bf16.mxu0 0
        %3035 = vmatpush1.bf16.msra.mxu0 0
        %3036 = vmatprep.subr.bf16.mxu0 0
        %3037 = vmatpush1.bf16.msra.mxu0 0
        %3038 = vmatprep.subr.bf16.mxu0 0
        %3039 = vmatpush1.bf16.msra.mxu0 0
        %3040 = vmatprep.subr.bf16.mxu0 0
        %3041 = vmatpush1.bf16.msra.mxu0 0
        %3042 = vmatprep.subr.bf16.mxu0 0
        %3043 = vmatpush1.bf16.msra.mxu0 0
        %3044 = vmatprep.subr.bf16.mxu0 0
        %3045 = vmatpush1.bf16.msra.mxu0 %v3026
        %3046 = vmatprep.subr.bf16.mxu0 0
        %3047 = vmatpush1.bf16.msra.mxu0 %v3025
        %3048 = vmatprep.subr.bf16.mxu0 0
        %3049 = vmatpush2.bf16.msra.mxu0 0
        %3050 = vmatprep.subr.bf16.mxu0 0
        %3051 = vmatpush2.bf16.msra.mxu0 0
        %3052 = vmatprep.subr.bf16.mxu0 0
        %3053 = vmatpush2.bf16.msra.mxu0 0
        %3054 = vmatprep.subr.bf16.mxu0 0
        %3055 = vmatpush2.bf16.msra.mxu0 0
        %3056 = vmatprep.subr.bf16.mxu0 0
        %3057 = vmatpush2.bf16.msra.mxu0 0
        %3058 = vmatprep.subr.bf16.mxu0 0
        %3059 = vmatpush2.bf16.msra.mxu0 0
        %3060 = vmatprep.subr.bf16.mxu0 0
        %3061 = vmatpush2.bf16.msra.mxu0 0
        %3062 = vmatprep.subr.bf16.mxu0 0
        %3063 = vmatpush2.bf16.msra.mxu0 0
        %3064 = vmatprep.mubr.bf16.mxu0 0
        %3065 = vmatmul.mubr.bf16.gmra.mxu0 %v3030
        %v3066 = vpop.f32.mrf.mxu0
        %v3067 = vadd.f32 %v3015, %v3066
        %v3068 = vpop.f32.mrf.mxu0
        %v3069 = vpop.f32.mrf.mxu0
        %v3070 = vpop.f32.mrf.mxu0
        %3071 = vdwg.mxu0
        %v3072 = vmax.f32 %v3067, 0.0
        %v3073 = vpack.c.bf16 %v3072, %v3072
        %v3074 = vld [vmem:[%s654] sm:$0xf]
        %v3075 = vld [vmem:[%s654 + $0x4] sm:$0xf]
        %v3076 = vld [vmem:[%s654 + $0x8] sm:$0xf]
        %v3077 = vld [vmem:[%s654 + $0xc] sm:$0xf]
        %v3078 = vld [vmem:[%s654 + $0x10] sm:$0xf]
        %v3079 = vld [vmem:[%s654 + $0x14] sm:$0xf]
        %v3080 = vld [vmem:[%s654 + $0x18] sm:$0xf]
        %v3081 = vld [vmem:[%s654 + $0x1c] sm:$0xf]
        %v3082 = vld [vmem:[%s657] sm:$0x1]
        %v3084 = vlaneseq
        %v3085 = vshrl.u32 %v3084, 7
        %v3086 = vsub.s32 0, %v3085
        %v3087 = vrot.slane %v3082, %v3086
        %v3097 = vunpack.c.l.b16 %v3074
        %v3098 = vunpack.c.l.b16 %v3075
        %v3099 = vunpack.c.l.b16 %v3076
        %v3100 = vunpack.c.l.b16 %v3077
        %v3101 = vunpack.c.l.b16 %v3078
        %v3102 = vunpack.c.l.b16 %v3079
        %v3103 = vunpack.c.l.b16 %v3080
        %v3104 = vunpack.c.l.b16 %v3081
        %v3105 = vpack.c.b16 %v3098, %v3097
        %v3106 = vpack.c.b16 %v3100, %v3099
        %v3107 = vpack.c.b16 %v3102, %v3101
        %v3108 = vpack.c.b16 %v3104, %v3103
        %vm3113 = vcmask 523264
        %v3115 = vsel %vm3113, %v3073, 0
        %3117 = vmatprep.subr.bf16.mxu0 0
        %3118 = vmatpush1.bf16.msra.mxu0 0
        %3119 = vmatprep.subr.bf16.mxu0 0
        %3120 = vmatpush1.bf16.msra.mxu0 0
        %3121 = vmatprep.subr.bf16.mxu0 0
        %3122 = vmatpush1.bf16.msra.mxu0 0
        %3123 = vmatprep.subr.bf16.mxu0 0
        %3124 = vmatpush1.bf16.msra.mxu0 0
        %3125 = vmatprep.subr.bf16.mxu0 0
        %3126 = vmatpush1.bf16.msra.mxu0 %v3108
        %3127 = vmatprep.subr.bf16.mxu0 0
        %3128 = vmatpush1.bf16.msra.mxu0 %v3107
        %3129 = vmatprep.subr.bf16.mxu0 0
        %3130 = vmatpush1.bf16.msra.mxu0 %v3106
        %3131 = vmatprep.subr.bf16.mxu0 0
        %3132 = vmatpush1.bf16.msra.mxu0 %v3105
        %3133 = vmatprep.subr.bf16.mxu0 0
        %3134 = vmatpush2.bf16.msra.mxu0 0
        %3135 = vmatprep.subr.bf16.mxu0 0
        %3136 = vmatpush2.bf16.msra.mxu0 0
        %3137 = vmatprep.subr.bf16.mxu0 0
        %3138 = vmatpush2.bf16.msra.mxu0 0
        %3139 = vmatprep.subr.bf16.mxu0 0
        %3140 = vmatpush2.bf16.msra.mxu0 0
        %3141 = vmatprep.subr.bf16.mxu0 0
        %3142 = vmatpush2.bf16.msra.mxu0 0
        %3143 = vmatprep.subr.bf16.mxu0 0
        %3144 = vmatpush2.bf16.msra.mxu0 0
        %3145 = vmatprep.subr.bf16.mxu0 0
        %3146 = vmatpush2.bf16.msra.mxu0 0
        %3147 = vmatprep.subr.bf16.mxu0 0
        %3148 = vmatpush2.bf16.msra.mxu0 0
        %3149 = vmatprep.mubr.bf16.mxu0 0
        %3150 = vmatmul.mubr.bf16.gmra.mxu0 %v3115
        %v3151 = vpop.f32.mrf.mxu0
        %v3152 = vadd.f32 %v3087, %v3151
        %v3153 = vpop.f32.mrf.mxu0
        %v3154 = vpop.f32.mrf.mxu0
        %v3155 = vpop.f32.mrf.mxu0
        %3156 = vdwg.mxu0
        %v3158 = vcombine.high %v3152, %v3152
        %v3160 = vunpack.c.l.s4 1983009808
        %v3161 = vunpack.c.0.s8 %v3160
        %v3162 = vlaneseq
        %v3163 = vshrl.u32 %v3162, 7
        %v3164 = vsub.s32 %v3161, %v3163
        %v3165 = vrot.slane %v3152, %v3164
        %v3167 = vunpack.c.l.s4 1983009808
        %v3168 = vunpack.c.0.s8 %v3167
        %v3169 = vlaneseq
        %v3170 = vshrl.u32 %v3169, 7
        %v3171 = vsub.s32 %v3168, %v3170
        %v3172 = vrot.slane %v3158, %v3171
        %v3173 = vcombine.high %v3165, %v3165
        %v3174 = vcombine.high %v3172, %v3172
        %v3179 = vadd.f32 %v2979, %v3165
        %v3180 = vadd.f32 %v2980, %v3173
        %v3181 = vadd.f32 %v2981, %v3172
        %v3182 = vadd.f32 %v2982, %v3174
        %v3183 = vld [vmem:[%s660] sm:$0x1]
        %v3184 = vld [vmem:[%s663] sm:$0x1]
        %v3189 = vcombine.low %v3179, %v3180
        %v3190 = vcombine.low %v3181, %v3182
        %v3192 = vunpack.c.l.s4 1983009808
        %v3193 = vunpack.c.0.s8 %v3192
        %v3194 = vlaneseq
        %v3195 = vshrl.u32 %v3194, 7
        %v3196 = vsub.s32 %v3193, %v3195
        %v3197 = vrot.slane %v3189, %v3196
        %v3199 = vunpack.c.l.s4 1983009808
        %v3200 = vunpack.c.0.s8 %v3199
        %v3201 = vlaneseq
        %v3202 = vshrl.u32 %v3201, 7
        %v3203 = vsub.s32 %v3200, %v3202
        %v3204 = vrot.slane %v3190, %v3203
        %v3205 = vcombine.low %v3197, %v3204
        %v3207 = vsel %vm729, %v3205, 0.0
        %3208 = vadd.xlane.f32.xlu0 %v3207
        %v3209 = vpop.xlane.xlu0 %3208
        %v3210 = vmul.f32 %v3209, %v2815
        %v3213 = vunpack.c.l.s4 269488144
        %v3214 = vunpack.c.0.s8 %v3213
        %v3215 = vlaneseq
        %v3216 = vshrl.u32 %v3215, 7
        %v3217 = vsub.s32 %v3214, %v3216
        %v3218 = vrot.slane %v3210, %v3217
        %v3220 = vunpack.c.l.s4 842150450
        %v3221 = vunpack.c.0.s8 %v3220
        %v3222 = vlaneseq
        %v3223 = vshrl.u32 %v3222, 7
        %v3224 = vsub.s32 %v3221, %v3223
        %v3225 = vrot.slane %v3210, %v3224
        %v3227 = vunpack.c.l.s4 1414812756
        %v3228 = vunpack.c.0.s8 %v3227
        %v3229 = vlaneseq
        %v3230 = vshrl.u32 %v3229, 7
        %v3231 = vsub.s32 %v3228, %v3230
        %v3232 = vrot.slane %v3210, %v3231
        %v3234 = vunpack.c.l.s4 1987475062
        %v3235 = vunpack.c.0.s8 %v3234
        %v3236 = vlaneseq
        %v3237 = vshrl.u32 %v3236, 7
        %v3238 = vsub.s32 %v3235, %v3237
        %v3239 = vrot.slane %v3210, %v3238
        %v3244 = vsub.f32 %v3179, %v3218
        %v3245 = vsub.f32 %v3180, %v3225
        %v3246 = vsub.f32 %v3181, %v3232
        %v3247 = vsub.f32 %v3182, %v3239
        %v3248 = vmul.f32 %v3244, %v3244
        %v3249 = vmul.f32 %v3245, %v3245
        %v3250 = vmul.f32 %v3246, %v3246
        %v3251 = vmul.f32 %v3247, %v3247
        %v3256 = vcombine.low %v3248, %v3249
        %v3257 = vcombine.low %v3250, %v3251
        %v3259 = vunpack.c.l.s4 1983009808
        %v3260 = vunpack.c.0.s8 %v3259
        %v3261 = vlaneseq
        %v3262 = vshrl.u32 %v3261, 7
        %v3263 = vsub.s32 %v3260, %v3262
        %v3264 = vrot.slane %v3256, %v3263
        %v3266 = vunpack.c.l.s4 1983009808
        %v3267 = vunpack.c.0.s8 %v3266
        %v3268 = vlaneseq
        %v3269 = vshrl.u32 %v3268, 7
        %v3270 = vsub.s32 %v3267, %v3269
        %v3271 = vrot.slane %v3257, %v3270
        %v3272 = vcombine.low %v3264, %v3271
        %v3274 = vsel %vm729, %v3272, 0.0
        %3275 = vadd.xlane.f32.xlu0 %v3274
        %v3276 = vpop.xlane.xlu0 %3275
        %v3277 = vmul.f32 %v3276, %v2815
        %v3278 = vadd.f32 %v3277, 1e-05
        %v3279 = vrsqrt.pop %v3278
        %v3282 = vunpack.c.l.s4 269488144
        %v3283 = vunpack.c.0.s8 %v3282
        %v3284 = vlaneseq
        %v3285 = vshrl.u32 %v3284, 7
        %v3286 = vsub.s32 %v3283, %v3285
        %v3287 = vrot.slane %v3279, %v3286
        %v3289 = vunpack.c.l.s4 842150450
        %v3290 = vunpack.c.0.s8 %v3289
        %v3291 = vlaneseq
        %v3292 = vshrl.u32 %v3291, 7
        %v3293 = vsub.s32 %v3290, %v3292
        %v3294 = vrot.slane %v3279, %v3293
        %v3296 = vunpack.c.l.s4 1414812756
        %v3297 = vunpack.c.0.s8 %v3296
        %v3298 = vlaneseq
        %v3299 = vshrl.u32 %v3298, 7
        %v3300 = vsub.s32 %v3297, %v3299
        %v3301 = vrot.slane %v3279, %v3300
        %v3303 = vunpack.c.l.s4 1987475062
        %v3304 = vunpack.c.0.s8 %v3303
        %v3305 = vlaneseq
        %v3306 = vshrl.u32 %v3305, 7
        %v3307 = vsub.s32 %v3304, %v3306
        %v3308 = vrot.slane %v3279, %v3307
        %v3313 = vmul.f32 %v3244, %v3287
        %v3314 = vmul.f32 %v3245, %v3294
        %v3315 = vmul.f32 %v3246, %v3301
        %v3316 = vmul.f32 %v3247, %v3308
        %v3318 = vlaneseq
        %v3319 = vshrl.u32 %v3318, 7
        %v3320 = vsub.s32 0, %v3319
        %v3321 = vrot.slane %v3183, %v3320
        %v3322 = vcombine.high %v3321, %v3321
        %v3324 = vunpack.c.l.s4 1983009808
        %v3325 = vunpack.c.0.s8 %v3324
        %v3326 = vlaneseq
        %v3327 = vshrl.u32 %v3326, 7
        %v3328 = vsub.s32 %v3325, %v3327
        %v3329 = vrot.slane %v3321, %v3328
        %v3331 = vunpack.c.l.s4 1983009808
        %v3332 = vunpack.c.0.s8 %v3331
        %v3333 = vlaneseq
        %v3334 = vshrl.u32 %v3333, 7
        %v3335 = vsub.s32 %v3332, %v3334
        %v3336 = vrot.slane %v3322, %v3335
        %v3337 = vcombine.high %v3329, %v3329
        %v3338 = vcombine.high %v3336, %v3336
        %v3343 = vmul.f32 %v3313, %v3329
        %v3344 = vmul.f32 %v3314, %v3337
        %v3345 = vmul.f32 %v3315, %v3336
        %v3346 = vmul.f32 %v3316, %v3338
        %v3348 = vlaneseq
        %v3349 = vshrl.u32 %v3348, 7
        %v3350 = vsub.s32 0, %v3349
        %v3351 = vrot.slane %v3184, %v3350
        %v3352 = vcombine.high %v3351, %v3351
        %v3354 = vunpack.c.l.s4 1983009808
        %v3355 = vunpack.c.0.s8 %v3354
        %v3356 = vlaneseq
        %v3357 = vshrl.u32 %v3356, 7
        %v3358 = vsub.s32 %v3355, %v3357
        %v3359 = vrot.slane %v3351, %v3358
        %v3361 = vunpack.c.l.s4 1983009808
        %v3362 = vunpack.c.0.s8 %v3361
        %v3363 = vlaneseq
        %v3364 = vshrl.u32 %v3363, 7
        %v3365 = vsub.s32 %v3362, %v3364
        %v3366 = vrot.slane %v3352, %v3365
        %v3367 = vcombine.high %v3359, %v3359
        %v3368 = vcombine.high %v3366, %v3366
        %v3373 = vadd.f32 %v3343, %v3359
        %v3374 = vadd.f32 %v3344, %v3367
        %v3375 = vadd.f32 %v3345, %v3366
        %v3376 = vadd.f32 %v3346, %v3368
        %vm3377 = vcmask 254976
        %3378 = vst.msk [vmem:[%s618] sm:$0x3] %vm3377, %v3373
        %3379 = vst.msk [vmem:[%s618 + $0x2] sm:$0x3] %vm3377, %v3374
        %3380 = vst.msk [vmem:[%s618 + $0x4] sm:$0x3] %vm3377, %v3375
        %3381 = vst.msk [vmem:[%s618 + $0x6] sm:$0x3] %vm3377, %v3376
        %s3382 = sand.u32 %s388, 1
        %s3383 = scalar_lea.sflag [#allocation4], %s3382
        %s3384 = sand.u32 %s388, 1
        %s3385 = smul.addr %s3384, 8
        %s3386 = scalar_lea.vmem [#allocation5], %s3385
        // Predicated region
        $region81: #{tpu_custom_call.1} parent=71 // pred_check
          %p3387 = pneg %p398
        $region82: #{tpu_custom_call.1} parent=71 // pred_check_branch
          %3389 = sbr.rel (%p3387) target = $region84
        $region83: #{tpu_custom_call.1} parent=71 // pred_region
          %s3390 = smul.u32 4, %s34
          %s3392 = ssub.s32 128, 128
          %3393 = vsyncadd %s3383, %s3392
          %s3394 = smul.addr %s3390, 32
          %s3395 = scalar_lea.hbm %s13, %s3394
          %s3396 = sshll.u32 %s3386, 4
          %s3397 = int_to_ptr.vmem [resolvable:$true] %s3396
          %3402 = dma.vmem_to_hbm [thread:$0]  %s3397, 128, %s3395, %s3383, 32, 32, 2
        $region84: #{tpu_custom_call.1} parent=71 // pred_fallthru
          _
      $region72: #{tpu_custom_call.1} parent=5 // pred_fallthru
        _
      %p3403 = scmp.le.s32.totalorder 2, %s25
      // Predicated region
      $region85: #{tpu_custom_call.1} parent=5 // pred_check
        %p3404 = pneg %p3403
      $region86: #{tpu_custom_call.1} parent=5 // pred_check_branch
        %3406 = sbr.rel (%p3404) target = $region88
      $region87: #{tpu_custom_call.1} parent=5 // pred_region
        %s3407 = ssub.s32 %s25, 2
        // Predicated region
        $region89: #{tpu_custom_call.1} parent=87 // pred_check
          %p3408 = pneg %p404
        $region90: #{tpu_custom_call.1} parent=87 // pred_check_branch
          %3410 = sbr.rel (%p3408) target = $region92
        $region91: #{tpu_custom_call.1} parent=87 // pred_region
          %s3411 = sand.u32 %s389, 1
          %s3412 = scalar_lea.sflag [#allocation4], %s3411
          %s3413 = sand.u32 %s389, 1
          %s3414 = smul.addr %s3413, 8
          %s3415 = scalar_lea.vmem [#allocation5], %s3414
          %3416 = dma.done %s3412, 128
        $region92: #{tpu_custom_call.1} parent=87 // pred_fallthru
          _
      $region88: #{tpu_custom_call.1} parent=5 // pred_fallthru
        _
    $region6: #{tpu_custom_call.1} parent=1 // loop_footer
      %s29 = sadd.s32 1, %s25
    $region7: #{tpu_custom_call.1} parent=1 // loop_footer_branch
      %24 = sbr.rel target = $region3
    $region8: #{tpu_custom_call.1} parent=1 // loop_exit
      _
    %3417 = vsyncpa [#allocation3], 1
    %s3418 = scalar_lea.sflag [#allocation3], 1
    %3419 = vsyncpa %s3418, 1
    %3420 = vsyncpa [#allocation4], 1
    %s3421 = scalar_lea.sflag [#allocation4], 1
    %3422 = vsyncpa %s3421, 1

</llo_original>
